<compile_context>
chip_gen: v6e
topology: v6e:2x2x1
jax: 0.10.0
libtpu: 0.0.40
codegen_flags: <defaults>
</compile_context>

<pallas_src>
import functools

import jax
import jax.numpy as jnp
from jax.experimental import pallas as pl
from jax.experimental.pallas import tpu as pltpu


def _bisenet_output_kernel(x_ref, w1_ref, scale_ref, bias_ref, w2t_ref,
                           o_ref, patch_ref, *, K):
    # x_ref:     VMEM (Bblk, H+2P, W+2P, Cin)  bf16, wrapper-padded NHWC planes
    # w1_ref:    VMEM (K*K*Cin, Cmid)          bf16, im2col-ordered 3x3 weights
    # scale_ref: VMEM (1, Cmid)                f32, folded BN scale
    # bias_ref:  VMEM (1, Cmid)                f32, folded BN bias
    # w2t_ref:   VMEM (Cmid, n_classes)        bf16, 1x1 weights (transposed)
    # o_ref:     VMEM (Bblk, n_classes, H*W)   lane-dense output tile
    # patch_ref: VMEM (Bblk*H*W, K*K*Cin)      bf16 im2col scratch
    Bblk, Hp, Wp, Cin = x_ref.shape
    P = K // 2
    H = Hp - 2 * P
    W = Wp - 2 * P
    HW = H * W
    M = Bblk * HW

    x = x_ref[...]                                       # (Bblk, Hp, Wp, Cin) bf16

    # im2col: lay the K*K tap windows side by side (channel-major per tap).
    # Every column of patch_ref is overwritten each step, so no init is needed
    # even under "parallel" (per-core) grid sharding.
    for kh in range(K):
        for kw in range(K):
            t = kh * K + kw
            win = x[:, kh:kh + H, kw:kw + W, :]          # (Bblk, H, W, Cin)
            patch_ref[:, t * Cin:(t + 1) * Cin] = win.reshape(M, Cin)

    # One MXU matmul: bf16 operands, f32 accumulation, contraction depth K*K*Cin.
    acc = jnp.dot(patch_ref[...], w1_ref[...],
                  preferred_element_type=jnp.float32)    # (M, Cmid) f32

    # Fused inference-mode BatchNorm + ReLU, kept in f32.
    h = jnp.maximum(acc * scale_ref[...] + bias_ref[...], 0.0)

    # 1x1 conv as (M, Cmid) @ (Cmid, ncls); only the small (HW, ncls) result is
    # transposed for the lane-dense (ncls, HW) store — the (HW, Cmid) activation
    # is never transposed.
    ncls = w2t_ref.shape[1]
    out = jnp.dot(h.astype(w2t_ref.dtype), w2t_ref[...],
                  preferred_element_type=jnp.float32)    # (M, ncls) f32
    out = out.reshape(Bblk, HW, ncls)
    o_ref[...] = jnp.transpose(out, (0, 2, 1)).astype(o_ref.dtype)


def bisenet_output(x, conv_w, bn_gamma, bn_beta, bn_mean, bn_var, conv_out_w,
                   *, eps=1e-5, compute_dtype=jnp.bfloat16, batch_block=None):
    """x: (B, Cin, H, W); conv_w: (Cmid, Cin, K, K); conv_out_w: (ncls, Cmid, 1, 1).

    Returns (B, n_classes, H, W), matching BiSeNetOutput.forward (eval mode).
    """
    B, Cin, H, W = x.shape
    Cmid, _, K, _ = conv_w.shape
    n_classes = conv_out_w.shape[0]
    P = K // 2
    HW = H * W
    Hp, Wp = H + 2 * P, W + 2 * P

    # NHWC + zero-pad + bf16 cast done wrapper-side (fused by XLA); the kernel
    # reads its tap windows straight out of the padded block (no pad scratch).
    x_pad = jnp.pad(jnp.transpose(x, (0, 2, 3, 1)).astype(compute_dtype),
                    ((0, 0), (P, P), (P, P), (0, 0)))

    # (Cmid, Cin, K, K) -> (K*K*Cin, Cmid), matching the kernel's im2col order.
    w1 = jnp.transpose(conv_w, (2, 3, 1, 0)).reshape(K * K * Cin, Cmid)
    w1 = w1.astype(compute_dtype)

    # Fold eval-mode BatchNorm into per-channel scale/bias (kept in f32).
    # TODO(synk): training-mode BatchNorm (batch statistics + running-stat
    # update) is not implemented; only eval-mode folding is supported.
    inv_std = 1.0 / jnp.sqrt(bn_var.astype(jnp.float32) + eps)
    scale = (bn_gamma.astype(jnp.float32) * inv_std).reshape(1, Cmid)
    bias = (bn_beta.astype(jnp.float32)
            - bn_mean.astype(jnp.float32) * bn_gamma.astype(jnp.float32) * inv_std
            ).reshape(1, Cmid)

    # (ncls, Cmid, 1, 1) -> (Cmid, ncls) so the 1x1 needs no activation transpose.
    w2t = jnp.transpose(conv_out_w[:, :, 0, 0], (1, 0)).astype(compute_dtype)

    out_dtype = x.dtype
    out_isize = jnp.dtype(out_dtype).itemsize

    # Per-batch-element VMEM footprint (x block, patch scratch, f32 temps, out).
    per_item = (Hp * Wp * Cin * 2
                + HW * K * K * Cin * 2
                + HW * Cmid * 4 * 2
                + HW * n_classes * (4 + out_isize))
    if batch_block is None:
        # Pack several planes per grid step on small feature maps to amortize
        # the ~0.35us/step pipeline overhead (keep a divisor of B; even counts
        # keep the v7x 2-TC split balanced).
        batch_block = max(1, min(B, int((6 << 20) // max(per_item, 1))))
        while B % batch_block:
            batch_block -= 1
    Bblk = batch_block
    assert B % Bblk == 0

    weight_bytes = (K * K * Cin * Cmid + Cmid * n_classes) * 2 + 2 * Cmid * 4
    vmem_est = (2 * (Bblk * (Hp * Wp * Cin * 2 + n_classes * HW * out_isize)
                     + weight_bytes)
                + Bblk * per_item)
    vmem_limit = int(min(100 << 20, max(32 << 20, 2 * vmem_est + (4 << 20))))

    kernel = functools.partial(_bisenet_output_kernel, K=K)

    out_flat = pl.pallas_call(
        kernel,
        out_shape=jax.ShapeDtypeStruct((B, n_classes, HW), out_dtype),
        grid_spec=pltpu.PrefetchScalarGridSpec(
            num_scalar_prefetch=0,
            grid=(B // Bblk,),
            in_specs=[
                pl.BlockSpec((Bblk, Hp, Wp, Cin), lambda b: (b, 0, 0, 0)),   # x (padded)
                pl.BlockSpec((K * K * Cin, Cmid), lambda b: (0, 0)),         # w1 (im2col)
                pl.BlockSpec((1, Cmid), lambda b: (0, 0)),                   # BN scale
                pl.BlockSpec((1, Cmid), lambda b: (0, 0)),                   # BN bias
                pl.BlockSpec((Cmid, n_classes), lambda b: (0, 0)),           # w2^T
            ],
            out_specs=pl.BlockSpec((Bblk, n_classes, HW), lambda b: (b, 0, 0)),
            scratch_shapes=[
                pltpu.VMEM((Bblk * HW, K * K * Cin), compute_dtype),         # im2col patches
            ],
        ),
        compiler_params=pltpu.CompilerParams(
            dimension_semantics=("parallel",),
            vmem_limit_bytes=vmem_limit),
    )(x_pad, w1, scale, bias, w2t)

    # Free reshape back to NCHW: (B, ncls, H*W) -> (B, ncls, H, W).
    return out_flat.reshape(B, n_classes, H, W)


def _reference(x, conv_w, bn_gamma, bn_beta, bn_mean, bn_var, conv_out_w,
               *, eps=1e-5, compute_dtype=jnp.bfloat16):
    """Pure-JAX reference of BiSeNetOutput.forward (eval-mode BN), mirroring the
    kernel's numerics: bf16 matmul operands, f32 accumulation/epilogue."""
    f32 = jnp.float32
    P = conv_w.shape[-1] // 2
    xc = x.astype(compute_dtype).astype(f32)
    w1c = conv_w.astype(compute_dtype).astype(f32)
    y = jax.lax.conv_general_dilated(
        xc, w1c, window_strides=(1, 1), padding=[(P, P), (P, P)],
        dimension_numbers=("NCHW", "OIHW", "NCHW"),
        precision=jax.lax.Precision.HIGHEST, preferred_element_type=f32)
    y = (y - bn_mean[None, :, None, None]) / jnp.sqrt(
        bn_var[None, :, None, None] + eps)
    y = y * bn_gamma[None, :, None, None] + bn_beta[None, :, None, None]
    y = jnp.maximum(y, 0.0)
    yc = y.astype(compute_dtype).astype(f32)
    w2c = conv_out_w.astype(compute_dtype).astype(f32)
    out = jax.lax.conv_general_dilated(
        yc, w2c, window_strides=(1, 1), padding=[(0, 0), (0, 0)],
        dimension_numbers=("NCHW", "OIHW", "NCHW"),
        precision=jax.lax.Precision.HIGHEST, preferred_element_type=f32)
    return out


if __name__ == "__main__":
    key = jax.random.PRNGKey(0)
    kx, kw1, kw2, kg, kb, km, kv = jax.random.split(key, 7)

    B, Cin, H, W = 2, 4, 16, 16
    Cmid, n_classes = 32, 8

    x = jax.random.normal(kx, (B, Cin, H, W), dtype=jnp.float32)
    # Deterministic stand-ins for kaiming-init conv weights and BN state.
    conv_w = jax.random.normal(kw1, (Cmid, Cin, 3, 3), jnp.float32) * (
        2.0 / (Cin * 9)) ** 0.5
    conv_out_w = jax.random.normal(kw2, (n_classes, Cmid, 1, 1), jnp.float32) * (
        2.0 / Cmid) ** 0.5
    bn_gamma = 1.0 + 0.1 * jax.random.normal(kg, (Cmid,), jnp.float32)
    bn_beta = 0.05 * jax.random.normal(kb, (Cmid,), jnp.float32)
    bn_mean = 0.1 * jax.random.normal(km, (Cmid,), jnp.float32)
    bn_var = jax.random.uniform(kv, (Cmid,), jnp.float32, 0.5, 1.5)

    out = bisenet_output(x, conv_w, bn_gamma, bn_beta, bn_mean, bn_var,
                         conv_out_w)
    out = jax.block_until_ready(out)

    ref = jax.block_until_ready(
        _reference(x, conv_w, bn_gamma, bn_beta, bn_mean, bn_var, conv_out_w))

    assert out.shape == (B, n_classes, H, W)
    assert jnp.allclose(out, ref, rtol=1e-2, atol=1e-2), "mismatch vs reference"

    print("KERNEL_OK")
</pallas_src>

<mosaic_0001>
module attributes {stable_mosaic.version = 11 : i64} {
  func.func @_bisenet_output_kernel(%arg0: i32, %arg1: memref<2x18x18x4xbf16, #tpu.memory_space<vmem>>, %arg2: memref<36x32xbf16, #tpu.memory_space<vmem>>, %arg3: memref<1x32xf32, #tpu.memory_space<vmem>>, %arg4: memref<1x32xf32, #tpu.memory_space<vmem>>, %arg5: memref<32x8xbf16, #tpu.memory_space<vmem>>, %arg6: memref<2x8x256xf32, #tpu.memory_space<vmem>>, %arg7: memref<512x36xbf16, #tpu.memory_space<vmem>>) attributes {dimension_semantics = [#tpu.dimension_semantics<parallel>], iteration_bounds = array<i64: 1>, scalar_prefetch = 0 : i64, scratch_operands = 1 : i64, tpu.core_type = #tpu.core_type<tc>, window_params = [{transform_indices = @transform_0, window_bounds = array<i64: 2, 18, 18, 4>}, {pipeline_mode = #tpu.pipeline_mode<synchronous>, transform_indices = @transform_1, window_bounds = array<i64: 36, 32>}, {pipeline_mode = #tpu.pipeline_mode<synchronous>, transform_indices = @transform_2, window_bounds = array<i64: 1, 32>}, {pipeline_mode = #tpu.pipeline_mode<synchronous>, transform_indices = @transform_3, window_bounds = array<i64: 1, 32>}, {pipeline_mode = #tpu.pipeline_mode<synchronous>, transform_indices = @transform_4, window_bounds = array<i64: 32, 8>}, {transform_indices = @transform_5, window_bounds = array<i64: 2, 8, 256>}]} {
    %c0 = arith.constant 0 : index
    %c0_0 = arith.constant 0 : index
    %c0_1 = arith.constant 0 : index
    %c0_2 = arith.constant 0 : index
    %0 = vector.load %arg1[%c0, %c0_0, %c0_1, %c0_2] : memref<2x18x18x4xbf16, #tpu.memory_space<vmem>>, vector<2x18x18x4xbf16>
    %1 = vector.extract_strided_slice %0 {offsets = [0, 0, 0, 0], sizes = [2, 16, 16, 4], strides = [1, 1, 1, 1]} : vector<2x18x18x4xbf16> to vector<2x16x16x4xbf16>
    %2 = vector.shape_cast %1 : vector<2x16x16x4xbf16> to vector<512x4xbf16>
    %c0_3 = arith.constant 0 : index
    %c0_4 = arith.constant 0 : index
    %3 = vector.load %arg7[%c0_3, %c0_4] : memref<512x36xbf16, #tpu.memory_space<vmem>>, vector<512x4xbf16>
    tpu.vector_store %arg7[%c0_3, %c0_4], %2 {strides = array<i32>} : memref<512x36xbf16, #tpu.memory_space<vmem>>, vector<512x4xbf16>,
    %4 = vector.extract_strided_slice %0 {offsets = [0, 0, 1, 0], sizes = [2, 16, 16, 4], strides = [1, 1, 1, 1]} : vector<2x18x18x4xbf16> to vector<2x16x16x4xbf16>
    %5 = vector.shape_cast %4 : vector<2x16x16x4xbf16> to vector<512x4xbf16>
    %c0_5 = arith.constant 0 : index
    %c4 = arith.constant 4 : index
    %6 = vector.load %arg7[%c0_5, %c4] : memref<512x36xbf16, #tpu.memory_space<vmem>>, vector<512x4xbf16>
    tpu.vector_store %arg7[%c0_5, %c4], %5 {strides = array<i32>} : memref<512x36xbf16, #tpu.memory_space<vmem>>, vector<512x4xbf16>,
    %7 = vector.extract_strided_slice %0 {offsets = [0, 0, 2, 0], sizes = [2, 16, 16, 4], strides = [1, 1, 1, 1]} : vector<2x18x18x4xbf16> to vector<2x16x16x4xbf16>
    %8 = vector.shape_cast %7 : vector<2x16x16x4xbf16> to vector<512x4xbf16>
    %c0_6 = arith.constant 0 : index
    %c8 = arith.constant 8 : index
    %9 = vector.load %arg7[%c0_6, %c8] : memref<512x36xbf16, #tpu.memory_space<vmem>>, vector<512x4xbf16>
    tpu.vector_store %arg7[%c0_6, %c8], %8 {strides = array<i32>} : memref<512x36xbf16, #tpu.memory_space<vmem>>, vector<512x4xbf16>,
    %10 = vector.extract_strided_slice %0 {offsets = [0, 1, 0, 0], sizes = [2, 16, 16, 4], strides = [1, 1, 1, 1]} : vector<2x18x18x4xbf16> to vector<2x16x16x4xbf16>
    %11 = vector.shape_cast %10 : vector<2x16x16x4xbf16> to vector<512x4xbf16>
    %c0_7 = arith.constant 0 : index
    %c12 = arith.constant 12 : index
    %12 = vector.load %arg7[%c0_7, %c12] : memref<512x36xbf16, #tpu.memory_space<vmem>>, vector<512x4xbf16>
    tpu.vector_store %arg7[%c0_7, %c12], %11 {strides = array<i32>} : memref<512x36xbf16, #tpu.memory_space<vmem>>, vector<512x4xbf16>,
    %13 = vector.extract_strided_slice %0 {offsets = [0, 1, 1, 0], sizes = [2, 16, 16, 4], strides = [1, 1, 1, 1]} : vector<2x18x18x4xbf16> to vector<2x16x16x4xbf16>
    %14 = vector.shape_cast %13 : vector<2x16x16x4xbf16> to vector<512x4xbf16>
    %c0_8 = arith.constant 0 : index
    %c16 = arith.constant 16 : index
    %15 = vector.load %arg7[%c0_8, %c16] : memref<512x36xbf16, #tpu.memory_space<vmem>>, vector<512x4xbf16>
    tpu.vector_store %arg7[%c0_8, %c16], %14 {strides = array<i32>} : memref<512x36xbf16, #tpu.memory_space<vmem>>, vector<512x4xbf16>,
    %16 = vector.extract_strided_slice %0 {offsets = [0, 1, 2, 0], sizes = [2, 16, 16, 4], strides = [1, 1, 1, 1]} : vector<2x18x18x4xbf16> to vector<2x16x16x4xbf16>
    %17 = vector.shape_cast %16 : vector<2x16x16x4xbf16> to vector<512x4xbf16>
    %c0_9 = arith.constant 0 : index
    %c20 = arith.constant 20 : index
    %18 = vector.load %arg7[%c0_9, %c20] : memref<512x36xbf16, #tpu.memory_space<vmem>>, vector<512x4xbf16>
    tpu.vector_store %arg7[%c0_9, %c20], %17 {strides = array<i32>} : memref<512x36xbf16, #tpu.memory_space<vmem>>, vector<512x4xbf16>,
    %19 = vector.extract_strided_slice %0 {offsets = [0, 2, 0, 0], sizes = [2, 16, 16, 4], strides = [1, 1, 1, 1]} : vector<2x18x18x4xbf16> to vector<2x16x16x4xbf16>
    %20 = vector.shape_cast %19 : vector<2x16x16x4xbf16> to vector<512x4xbf16>
    %c0_10 = arith.constant 0 : index
    %c24 = arith.constant 24 : index
    %21 = vector.load %arg7[%c0_10, %c24] : memref<512x36xbf16, #tpu.memory_space<vmem>>, vector<512x4xbf16>
    tpu.vector_store %arg7[%c0_10, %c24], %20 {strides = array<i32>} : memref<512x36xbf16, #tpu.memory_space<vmem>>, vector<512x4xbf16>,
    %22 = vector.extract_strided_slice %0 {offsets = [0, 2, 1, 0], sizes = [2, 16, 16, 4], strides = [1, 1, 1, 1]} : vector<2x18x18x4xbf16> to vector<2x16x16x4xbf16>
    %23 = vector.shape_cast %22 : vector<2x16x16x4xbf16> to vector<512x4xbf16>
    %c0_11 = arith.constant 0 : index
    %c28 = arith.constant 28 : index
    %24 = vector.load %arg7[%c0_11, %c28] : memref<512x36xbf16, #tpu.memory_space<vmem>>, vector<512x4xbf16>
    tpu.vector_store %arg7[%c0_11, %c28], %23 {strides = array<i32>} : memref<512x36xbf16, #tpu.memory_space<vmem>>, vector<512x4xbf16>,
    %25 = vector.extract_strided_slice %0 {offsets = [0, 2, 2, 0], sizes = [2, 16, 16, 4], strides = [1, 1, 1, 1]} : vector<2x18x18x4xbf16> to vector<2x16x16x4xbf16>
    %26 = vector.shape_cast %25 : vector<2x16x16x4xbf16> to vector<512x4xbf16>
    %c0_12 = arith.constant 0 : index
    %c32 = arith.constant 32 : index
    %27 = vector.load %arg7[%c0_12, %c32] : memref<512x36xbf16, #tpu.memory_space<vmem>>, vector<512x4xbf16>
    tpu.vector_store %arg7[%c0_12, %c32], %26 {strides = array<i32>} : memref<512x36xbf16, #tpu.memory_space<vmem>>, vector<512x4xbf16>,
    %c0_13 = arith.constant 0 : index
    %c0_14 = arith.constant 0 : index
    %28 = vector.load %arg7[%c0_13, %c0_14] : memref<512x36xbf16, #tpu.memory_space<vmem>>, vector<512x36xbf16>
    %c0_15 = arith.constant 0 : index
    %c0_16 = arith.constant 0 : index
    %29 = vector.load %arg2[%c0_15, %c0_16] : memref<36x32xbf16, #tpu.memory_space<vmem>>, vector<36x32xbf16>
    %cst = arith.constant dense<0.000000e+00> : vector<512x32xf32>
    %30 = tpu.matmul %28, %29, %cst {dimension_numbers = #tpu.dot_dimension_numbers<[1], [0], [0], [1], [0, 0, 1, 1], [], []>} : vector<512x36xbf16>, vector<36x32xbf16>, vector<512x32xf32> -> vector<512x32xf32>
    %c0_17 = arith.constant 0 : index
    %c0_18 = arith.constant 0 : index
    %31 = vector.load %arg3[%c0_17, %c0_18] : memref<1x32xf32, #tpu.memory_space<vmem>>, vector<1x32xf32>
    %32 = vector.broadcast %31 : vector<1x32xf32> to vector<512x32xf32>
    %33 = arith.mulf %30, %32 : vector<512x32xf32>
    %c0_19 = arith.constant 0 : index
    %c0_20 = arith.constant 0 : index
    %34 = vector.load %arg4[%c0_19, %c0_20] : memref<1x32xf32, #tpu.memory_space<vmem>>, vector<1x32xf32>
    %35 = vector.broadcast %34 : vector<1x32xf32> to vector<512x32xf32>
    %36 = arith.addf %33, %35 : vector<512x32xf32>
    %cst_21 = arith.constant 0.000000e+00 : f32
    %37 = vector.broadcast %cst_21 : f32 to vector<512x32xf32>
    %38 = arith.maximumf %36, %37 : vector<512x32xf32>
    %39 = arith.truncf %38 : vector<512x32xf32> to vector<512x32xbf16>
    %c0_22 = arith.constant 0 : index
    %c0_23 = arith.constant 0 : index
    %40 = vector.load %arg5[%c0_22, %c0_23] : memref<32x8xbf16, #tpu.memory_space<vmem>>, vector<32x8xbf16>
    %cst_24 = arith.constant dense<0.000000e+00> : vector<512x8xf32>
    %41 = tpu.matmul %39, %40, %cst_24 {dimension_numbers = #tpu.dot_dimension_numbers<[1], [0], [0], [1], [0, 0, 1, 1], [], []>} : vector<512x32xbf16>, vector<32x8xbf16>, vector<512x8xf32> -> vector<512x8xf32>
    %42 = vector.shape_cast %41 : vector<512x8xf32> to vector<2x256x8xf32>
    %43 = tpu.transpose %42, [0, 2, 1] : vector<2x256x8xf32> -> vector<2x8x256xf32>
    %c0_25 = arith.constant 0 : index
    %c0_26 = arith.constant 0 : index
    %c0_27 = arith.constant 0 : index
    %44 = vector.load %arg6[%c0_25, %c0_26, %c0_27] : memref<2x8x256xf32, #tpu.memory_space<vmem>>, vector<2x8x256xf32>
    tpu.vector_store %arg6[%c0_25, %c0_26, %c0_27], %43 {strides = array<i32>} : memref<2x8x256xf32, #tpu.memory_space<vmem>>, vector<2x8x256xf32>,
    return
  }
  func.func @transform_0(%arg0: i32) -> (i32, i32, i32, i32) {
    %c0_i32 = arith.constant 0 : i32
    %c0_i32_0 = arith.constant 0 : i32
    %c0_i32_1 = arith.constant 0 : i32
    %c0_i32_2 = arith.constant 0 : i32
    return %arg0, %c0_i32, %c0_i32_0, %c0_i32_1 : i32, i32, i32, i32
  }
  func.func @transform_1(%arg0: i32) -> (i32, i32) {
    %c0_i32 = arith.constant 0 : i32
    %c0_i32_0 = arith.constant 0 : i32
    %c0_i32_1 = arith.constant 0 : i32
    return %c0_i32, %c0_i32_0 : i32, i32
  }
  func.func @transform_2(%arg0: i32) -> (i32, i32) {
    %c0_i32 = arith.constant 0 : i32
    %c0_i32_0 = arith.constant 0 : i32
    %c0_i32_1 = arith.constant 0 : i32
    return %c0_i32, %c0_i32_0 : i32, i32
  }
  func.func @transform_3(%arg0: i32) -> (i32, i32) {
    %c0_i32 = arith.constant 0 : i32
    %c0_i32_0 = arith.constant 0 : i32
    %c0_i32_1 = arith.constant 0 : i32
    return %c0_i32, %c0_i32_0 : i32, i32
  }
  func.func @transform_4(%arg0: i32) -> (i32, i32) {
    %c0_i32 = arith.constant 0 : i32
    %c0_i32_0 = arith.constant 0 : i32
    %c0_i32_1 = arith.constant 0 : i32
    return %c0_i32, %c0_i32_0 : i32, i32
  }
  func.func @transform_5(%arg0: i32) -> (i32, i32, i32) {
    %c0_i32 = arith.constant 0 : i32
    %c0_i32_0 = arith.constant 0 : i32
    %c0_i32_1 = arith.constant 0 : i32
    return %arg0, %c0_i32, %c0_i32_0 : i32, i32, i32
  }
}

</mosaic_0001>

<llo_original>
// kernel: tpu_custom_call.1
$region0: #{tpu_custom_call.1}
  #allocation0 [shape = 'u32[]', space=smem, size = 0x4, offset = 0x4, fixed_abs, tag = 'smem constant byte address 0x4 - core index']
  #allocation1 [shape = 'u32[144,128]{1,0:T(1,128)}', space=vmem, size = 0x12000, scoped, tag = 'internal scratch']
  #allocation2 [shape = 'bf16[512,36]{1,0:T(8,128)(2,1)}', space=vmem, size = 0x20000, scoped, tag = 'scratch operand']
  %s0 = inlined_call_operand.vmem [shape: bf16[2,18,18,4], index: 0, kind: input, shape index: {}]
  %s1 = inlined_call_operand.vmem [shape: bf16[36,32], index: 1, kind: input, shape index: {}]
  %s2 = inlined_call_operand.vmem [shape: f32[1,32], index: 2, kind: input, shape index: {}]
  %s3 = inlined_call_operand.vmem [shape: f32[1,32], index: 3, kind: input, shape index: {}]
  %s4 = inlined_call_operand.vmem [shape: bf16[32,8], index: 4, kind: input, shape index: {}]
  %s5 = inlined_call_operand.hbm [shape: f32[2,8,256], index: 5, kind: output, shape index: {}]
  %s6 = sld [smem:[#allocation0]]
  $region30: #{tpu_custom_call.1} parent=0
    _
  %s8 = ssub.s32 1, %s6
  %s9 = scalar_select 0, %s8, %s6
  $region1: #{tpu_custom_call.1} parent=0
    #allocation3 [shape = 'u8[16384]{0}', space=vmem, size = 0x4000, scoped, tag = 'output window, operand 0, single buffered']
    #allocation4 [shape = 's32[1]{0}', space=sflag, size = 0x4, scoped, tag = 'scoped memory for tpu_custom_call.1']
    %10 = vsyncpa [#allocation4], 0
    // Predicated region
    $region2: #{tpu_custom_call.1} parent=1 // pred_check
      _
    $region3: #{tpu_custom_call.1} parent=1 // pred_check_branch
      %12 = sbr.rel (0) target = $region5
    $region4: #{tpu_custom_call.1} parent=1 // pred_region
      _
    $region5: #{tpu_custom_call.1} parent=1 // pred_fallthru
      _
    // Predicated region
    $region6: #{tpu_custom_call.1} parent=1 // pred_check
      _
    $region7: #{tpu_custom_call.1} parent=1 // pred_check_branch
      %14 = sbr.rel (0) target = $region9
    $region8: #{tpu_custom_call.1} parent=1 // pred_region
      _
    $region9: #{tpu_custom_call.1} parent=1 // pred_fallthru
      _
    // Predicated region
    $region10: #{tpu_custom_call.1} parent=1 // pred_check
      _
    $region11: #{tpu_custom_call.1} parent=1 // pred_check_branch
      %16 = sbr.rel (0) target = $region13
    $region12: #{tpu_custom_call.1} parent=1 // pred_region
      _
    $region13: #{tpu_custom_call.1} parent=1 // pred_fallthru
      _
    // Predicated region
    $region14: #{tpu_custom_call.1} parent=1 // pred_check
      _
    $region15: #{tpu_custom_call.1} parent=1 // pred_check_branch
      %18 = sbr.rel (0) target = $region17
    $region16: #{tpu_custom_call.1} parent=1 // pred_region
      _
    $region17: #{tpu_custom_call.1} parent=1 // pred_fallthru
      _
    // Predicated region
    $region18: #{tpu_custom_call.1} parent=1 // pred_check
      _
    $region19: #{tpu_custom_call.1} parent=1 // pred_check_branch
      %20 = sbr.rel (0) target = $region21
    $region20: #{tpu_custom_call.1} parent=1 // pred_region
      _
    $region21: #{tpu_custom_call.1} parent=1 // pred_fallthru
      _
    %v22 = vld [vmem:[%s0] sm:$0xf]
    %v23 = vld [vmem:[%s0 + $0x4] sm:$0xf]
    %v24 = vld [vmem:[%s0 + $0x8] sm:$0x1]
    %v25 = vld [vmem:[%s0 + $0xc] sm:$0xf]
    %v26 = vld [vmem:[%s0 + $0x10] sm:$0xf]
    %v27 = vld [vmem:[%s0 + $0x14] sm:$0x1]
    %v28 = vld [vmem:[%s0 + $0x18] sm:$0xf]
    %v29 = vld [vmem:[%s0 + $0x1c] sm:$0xf]
    %v30 = vld [vmem:[%s0 + $0x20] sm:$0x1]
    %v31 = vld [vmem:[%s0 + $0x24] sm:$0xf]
    %v32 = vld [vmem:[%s0 + $0x28] sm:$0xf]
    %v33 = vld [vmem:[%s0 + $0x2c] sm:$0x1]
    %v34 = vld [vmem:[%s0 + $0x30] sm:$0xf]
    %v35 = vld [vmem:[%s0 + $0x34] sm:$0xf]
    %v36 = vld [vmem:[%s0 + $0x38] sm:$0x1]
    %v37 = vld [vmem:[%s0 + $0x3c] sm:$0xf]
    %v38 = vld [vmem:[%s0 + $0x40] sm:$0xf]
    %v39 = vld [vmem:[%s0 + $0x44] sm:$0x1]
    %v40 = vld [vmem:[%s0 + $0x48] sm:$0xf]
    %v41 = vld [vmem:[%s0 + $0x4c] sm:$0xf]
    %v42 = vld [vmem:[%s0 + $0x50] sm:$0x1]
    %v43 = vld [vmem:[%s0 + $0x54] sm:$0xf]
    %v44 = vld [vmem:[%s0 + $0x58] sm:$0xf]
    %v45 = vld [vmem:[%s0 + $0x5c] sm:$0x1]
    %v46 = vld [vmem:[%s0 + $0x60] sm:$0xf]
    %v47 = vld [vmem:[%s0 + $0x64] sm:$0xf]
    %v48 = vld [vmem:[%s0 + $0x68] sm:$0x1]
    %v49 = vld [vmem:[%s0 + $0x6c] sm:$0xf]
    %v50 = vld [vmem:[%s0 + $0x70] sm:$0xf]
    %v51 = vld [vmem:[%s0 + $0x74] sm:$0x1]
    %v52 = vld [vmem:[%s0 + $0x78] sm:$0xf]
    %v53 = vld [vmem:[%s0 + $0x7c] sm:$0xf]
    %v54 = vld [vmem:[%s0 + $0x80] sm:$0x1]
    %v55 = vld [vmem:[%s0 + $0x84] sm:$0xf]
    %v56 = vld [vmem:[%s0 + $0x88] sm:$0xf]
    %v57 = vld [vmem:[%s0 + $0x8c] sm:$0x1]
    %v58 = vld [vmem:[%s0 + $0x90] sm:$0xf]
    %v59 = vld [vmem:[%s0 + $0x94] sm:$0xf]
    %v60 = vld [vmem:[%s0 + $0x98] sm:$0x1]
    %v61 = vld [vmem:[%s0 + $0x9c] sm:$0xf]
    %v62 = vld [vmem:[%s0 + $0xa0] sm:$0xf]
    %v63 = vld [vmem:[%s0 + $0xa4] sm:$0x1]
    %v64 = vld [vmem:[%s0 + $0xa8] sm:$0xf]
    %v65 = vld [vmem:[%s0 + $0xac] sm:$0xf]
    %v66 = vld [vmem:[%s0 + $0xb0] sm:$0x1]
    %v67 = vld [vmem:[%s0 + $0xb4] sm:$0xf]
    %v68 = vld [vmem:[%s0 + $0xb8] sm:$0xf]
    %v69 = vld [vmem:[%s0 + $0xbc] sm:$0x1]
    %v70 = vld [vmem:[%s0 + $0xc0] sm:$0xf]
    %v71 = vld [vmem:[%s0 + $0xc4] sm:$0xf]
    %v72 = vld [vmem:[%s0 + $0xc8] sm:$0x1]
    %v73 = vld [vmem:[%s0 + $0xcc] sm:$0xf]
    %v74 = vld [vmem:[%s0 + $0xd0] sm:$0xf]
    %v75 = vld [vmem:[%s0 + $0xd4] sm:$0x1]
    %v76 = vld [vmem:[%s0 + $0xd8] sm:$0xf]
    %v77 = vld [vmem:[%s0 + $0xdc] sm:$0xf]
    %v78 = vld [vmem:[%s0 + $0xe0] sm:$0x1]
    %v79 = vld [vmem:[%s0 + $0xe4] sm:$0xf]
    %v80 = vld [vmem:[%s0 + $0xe8] sm:$0xf]
    %v81 = vld [vmem:[%s0 + $0xec] sm:$0x1]
    %v82 = vld [vmem:[%s0 + $0xf0] sm:$0xf]
    %v83 = vld [vmem:[%s0 + $0xf4] sm:$0xf]
    %v84 = vld [vmem:[%s0 + $0xf8] sm:$0x1]
    %v85 = vld [vmem:[%s0 + $0xfc] sm:$0xf]
    %v86 = vld [vmem:[%s0 + $0x100] sm:$0xf]
    %v87 = vld [vmem:[%s0 + $0x104] sm:$0x1]
    %v88 = vld [vmem:[%s0 + $0x108] sm:$0xf]
    %v89 = vld [vmem:[%s0 + $0x10c] sm:$0xf]
    %v90 = vld [vmem:[%s0 + $0x110] sm:$0x1]
    %v91 = vld [vmem:[%s0 + $0x114] sm:$0xf]
    %v92 = vld [vmem:[%s0 + $0x118] sm:$0xf]
    %v93 = vld [vmem:[%s0 + $0x11c] sm:$0x1]
    %v94 = vld [vmem:[%s0 + $0x120] sm:$0xf]
    %v95 = vld [vmem:[%s0 + $0x124] sm:$0xf]
    %v96 = vld [vmem:[%s0 + $0x128] sm:$0x1]
    %v97 = vld [vmem:[%s0 + $0x12c] sm:$0xf]
    %v98 = vld [vmem:[%s0 + $0x130] sm:$0xf]
    %v99 = vld [vmem:[%s0 + $0x134] sm:$0x1]
    %v100 = vld [vmem:[%s0 + $0x138] sm:$0xf]
    %v101 = vld [vmem:[%s0 + $0x13c] sm:$0xf]
    %v102 = vld [vmem:[%s0 + $0x140] sm:$0x1]
    %v103 = vld [vmem:[%s0 + $0x144] sm:$0xf]
    %v104 = vld [vmem:[%s0 + $0x148] sm:$0xf]
    %v105 = vld [vmem:[%s0 + $0x14c] sm:$0x1]
    %v106 = vld [vmem:[%s0 + $0x150] sm:$0xf]
    %v107 = vld [vmem:[%s0 + $0x154] sm:$0xf]
    %v108 = vld [vmem:[%s0 + $0x158] sm:$0x1]
    %v109 = vld [vmem:[%s0 + $0x15c] sm:$0xf]
    %v110 = vld [vmem:[%s0 + $0x160] sm:$0xf]
    %v111 = vld [vmem:[%s0 + $0x164] sm:$0x1]
    %v112 = vld [vmem:[%s0 + $0x168] sm:$0xf]
    %v113 = vld [vmem:[%s0 + $0x16c] sm:$0xf]
    %v114 = vld [vmem:[%s0 + $0x170] sm:$0x1]
    %v115 = vld [vmem:[%s0 + $0x174] sm:$0xf]
    %v116 = vld [vmem:[%s0 + $0x178] sm:$0xf]
    %v117 = vld [vmem:[%s0 + $0x17c] sm:$0x1]
    %v118 = vld [vmem:[%s0 + $0x180] sm:$0xf]
    %v119 = vld [vmem:[%s0 + $0x184] sm:$0xf]
    %v120 = vld [vmem:[%s0 + $0x188] sm:$0x1]
    %v121 = vld [vmem:[%s0 + $0x18c] sm:$0xf]
    %v122 = vld [vmem:[%s0 + $0x190] sm:$0xf]
    %v123 = vld [vmem:[%s0 + $0x194] sm:$0x1]
    %v124 = vld [vmem:[%s0 + $0x198] sm:$0xf]
    %v125 = vld [vmem:[%s0 + $0x19c] sm:$0xf]
    %v126 = vld [vmem:[%s0 + $0x1a0] sm:$0x1]
    %v127 = vld [vmem:[%s0 + $0x1a4] sm:$0xf]
    %v128 = vld [vmem:[%s0 + $0x1a8] sm:$0xf]
    %v129 = vld [vmem:[%s0 + $0x1ac] sm:$0x1]
    %vm130 = vcmask 27648
    %131 = vst.msk [vmem:[#allocation2] sm:$0xf] %vm130, %v22
    %132 = vst.msk [vmem:[#allocation2 + $0x4] sm:$0xf] %vm130, %v23
    %133 = vst.msk [vmem:[#allocation2 + $0x8] sm:$0xf] %vm130, %v25
    %134 = vst.msk [vmem:[#allocation2 + $0xc] sm:$0xf] %vm130, %v26
    %135 = vst.msk [vmem:[#allocation2 + $0x10] sm:$0xf] %vm130, %v28
    %136 = vst.msk [vmem:[#allocation2 + $0x14] sm:$0xf] %vm130, %v29
    %137 = vst.msk [vmem:[#allocation2 + $0x18] sm:$0xf] %vm130, %v31
    %138 = vst.msk [vmem:[#allocation2 + $0x1c] sm:$0xf] %vm130, %v32
    %139 = vst.msk [vmem:[#allocation2 + $0x20] sm:$0xf] %vm130, %v34
    %140 = vst.msk [vmem:[#allocation2 + $0x24] sm:$0xf] %vm130, %v35
    %141 = vst.msk [vmem:[#allocation2 + $0x28] sm:$0xf] %vm130, %v37
    %142 = vst.msk [vmem:[#allocation2 + $0x2c] sm:$0xf] %vm130, %v38
    %143 = vst.msk [vmem:[#allocation2 + $0x30] sm:$0xf] %vm130, %v40
    %144 = vst.msk [vmem:[#allocation2 + $0x34] sm:$0xf] %vm130, %v41
    %145 = vst.msk [vmem:[#allocation2 + $0x38] sm:$0xf] %vm130, %v43
    %146 = vst.msk [vmem:[#allocation2 + $0x3c] sm:$0xf] %vm130, %v44
    %147 = vst.msk [vmem:[#allocation2 + $0x40] sm:$0xf] %vm130, %v46
    %148 = vst.msk [vmem:[#allocation2 + $0x44] sm:$0xf] %vm130, %v47
    %149 = vst.msk [vmem:[#allocation2 + $0x48] sm:$0xf] %vm130, %v49
    %150 = vst.msk [vmem:[#allocation2 + $0x4c] sm:$0xf] %vm130, %v50
    %151 = vst.msk [vmem:[#allocation2 + $0x50] sm:$0xf] %vm130, %v52
    %152 = vst.msk [vmem:[#allocation2 + $0x54] sm:$0xf] %vm130, %v53
    %153 = vst.msk [vmem:[#allocation2 + $0x58] sm:$0xf] %vm130, %v55
    %154 = vst.msk [vmem:[#allocation2 + $0x5c] sm:$0xf] %vm130, %v56
    %155 = vst.msk [vmem:[#allocation2 + $0x60] sm:$0xf] %vm130, %v58
    %156 = vst.msk [vmem:[#allocation2 + $0x64] sm:$0xf] %vm130, %v59
    %157 = vst.msk [vmem:[#allocation2 + $0x68] sm:$0xf] %vm130, %v61
    %158 = vst.msk [vmem:[#allocation2 + $0x6c] sm:$0xf] %vm130, %v62
    %159 = vst.msk [vmem:[#allocation2 + $0x70] sm:$0xf] %vm130, %v64
    %160 = vst.msk [vmem:[#allocation2 + $0x74] sm:$0xf] %vm130, %v65
    %161 = vst.msk [vmem:[#allocation2 + $0x78] sm:$0xf] %vm130, %v67
    %162 = vst.msk [vmem:[#allocation2 + $0x7c] sm:$0xf] %vm130, %v68
    %163 = vst.msk [vmem:[#allocation2 + $0x80] sm:$0xf] %vm130, %v76
    %164 = vst.msk [vmem:[#allocation2 + $0x84] sm:$0xf] %vm130, %v77
    %165 = vst.msk [vmem:[#allocation2 + $0x88] sm:$0xf] %vm130, %v79
    %166 = vst.msk [vmem:[#allocation2 + $0x8c] sm:$0xf] %vm130, %v80
    %167 = vst.msk [vmem:[#allocation2 + $0x90] sm:$0xf] %vm130, %v82
    %168 = vst.msk [vmem:[#allocation2 + $0x94] sm:$0xf] %vm130, %v83
    %169 = vst.msk [vmem:[#allocation2 + $0x98] sm:$0xf] %vm130, %v85
    %170 = vst.msk [vmem:[#allocation2 + $0x9c] sm:$0xf] %vm130, %v86
    %171 = vst.msk [vmem:[#allocation2 + $0xa0] sm:$0xf] %vm130, %v88
    %172 = vst.msk [vmem:[#allocation2 + $0xa4] sm:$0xf] %vm130, %v89
    %173 = vst.msk [vmem:[#allocation2 + $0xa8] sm:$0xf] %vm130, %v91
    %174 = vst.msk [vmem:[#allocation2 + $0xac] sm:$0xf] %vm130, %v92
    %175 = vst.msk [vmem:[#allocation2 + $0xb0] sm:$0xf] %vm130, %v94
    %176 = vst.msk [vmem:[#allocation2 + $0xb4] sm:$0xf] %vm130, %v95
    %177 = vst.msk [vmem:[#allocation2 + $0xb8] sm:$0xf] %vm130, %v97
    %178 = vst.msk [vmem:[#allocation2 + $0xbc] sm:$0xf] %vm130, %v98
    %179 = vst.msk [vmem:[#allocation2 + $0xc0] sm:$0xf] %vm130, %v100
    %180 = vst.msk [vmem:[#allocation2 + $0xc4] sm:$0xf] %vm130, %v101
    %181 = vst.msk [vmem:[#allocation2 + $0xc8] sm:$0xf] %vm130, %v103
    %182 = vst.msk [vmem:[#allocation2 + $0xcc] sm:$0xf] %vm130, %v104
    %183 = vst.msk [vmem:[#allocation2 + $0xd0] sm:$0xf] %vm130, %v106
    %184 = vst.msk [vmem:[#allocation2 + $0xd4] sm:$0xf] %vm130, %v107
    %185 = vst.msk [vmem:[#allocation2 + $0xd8] sm:$0xf] %vm130, %v109
    %186 = vst.msk [vmem:[#allocation2 + $0xdc] sm:$0xf] %vm130, %v110
    %187 = vst.msk [vmem:[#allocation2 + $0xe0] sm:$0xf] %vm130, %v112
    %188 = vst.msk [vmem:[#allocation2 + $0xe4] sm:$0xf] %vm130, %v113
    %189 = vst.msk [vmem:[#allocation2 + $0xe8] sm:$0xf] %vm130, %v115
    %190 = vst.msk [vmem:[#allocation2 + $0xec] sm:$0xf] %vm130, %v116
    %191 = vst.msk [vmem:[#allocation2 + $0xf0] sm:$0xf] %vm130, %v118
    %192 = vst.msk [vmem:[#allocation2 + $0xf4] sm:$0xf] %vm130, %v119
    %193 = vst.msk [vmem:[#allocation2 + $0xf8] sm:$0xf] %vm130, %v121
    %194 = vst.msk [vmem:[#allocation2 + $0xfc] sm:$0xf] %vm130, %v122
    %vm195 = vsmask.f32 3328
    %vm196 = vsmask.f32 7440
    %vm197 = vmor %vm195, %vm196
    %v199 = vshrl.u32 %v22, 16
    %v201 = vrot.slane %v199, 4
    %v202 = vshll.u32 %v22, 16
    %v204 = vrot.slane %v202, 5
    %v205 = vor.u32 %v201, %v204
    %v206 = vrot.slane %v205, 4
    %v208 = vshll.u32 %v23, 16
    %v210 = vrot.slane %v208, 5
    %v211 = vsel %vm197, %v206, %v210
    %v212 = vshrl.u32 %v23, 16
    %v214 = vrot.slane %v212, 4
    %v215 = vor.u32 %v214, %v210
    %v216 = vrot.slane %v215, 4
    %v218 = vshll.u32 %v24, 16
    %v220 = vrot.slane %v218, 5
    %v221 = vsel %vm197, %v216, %v220
    %v223 = vshrl.u32 %v25, 16
    %v225 = vrot.slane %v223, 4
    %v226 = vshll.u32 %v25, 16
    %v228 = vrot.slane %v226, 5
    %v229 = vor.u32 %v225, %v228
    %v230 = vrot.slane %v229, 4
    %v232 = vshll.u32 %v26, 16
    %v234 = vrot.slane %v232, 5
    %v235 = vsel %vm197, %v230, %v234
    %v236 = vshrl.u32 %v26, 16
    %v238 = vrot.slane %v236, 4
    %v239 = vor.u32 %v238, %v234
    %v240 = vrot.slane %v239, 4
    %v242 = vshll.u32 %v27, 16
    %v244 = vrot.slane %v242, 5
    %v245 = vsel %vm197, %v240, %v244
    %v247 = vshrl.u32 %v28, 16
    %v249 = vrot.slane %v247, 4
    %v250 = vshll.u32 %v28, 16
    %v252 = vrot.slane %v250, 5
    %v253 = vor.u32 %v249, %v252
    %v254 = vrot.slane %v253, 4
    %v256 = vshll.u32 %v29, 16
    %v258 = vrot.slane %v256, 5
    %v259 = vsel %vm197, %v254, %v258
    %v260 = vshrl.u32 %v29, 16
    %v262 = vrot.slane %v260, 4
    %v263 = vor.u32 %v262, %v258
    %v264 = vrot.slane %v263, 4
    %v266 = vshll.u32 %v30, 16
    %v268 = vrot.slane %v266, 5
    %v269 = vsel %vm197, %v264, %v268
    %v271 = vshrl.u32 %v31, 16
    %v273 = vrot.slane %v271, 4
    %v274 = vshll.u32 %v31, 16
    %v276 = vrot.slane %v274, 5
    %v277 = vor.u32 %v273, %v276
    %v278 = vrot.slane %v277, 4
    %v280 = vshll.u32 %v32, 16
    %v282 = vrot.slane %v280, 5
    %v283 = vsel %vm197, %v278, %v282
    %v284 = vshrl.u32 %v32, 16
    %v286 = vrot.slane %v284, 4
    %v287 = vor.u32 %v286, %v282
    %v288 = vrot.slane %v287, 4
    %v290 = vshll.u32 %v33, 16
    %v292 = vrot.slane %v290, 5
    %v293 = vsel %vm197, %v288, %v292
    %v295 = vshrl.u32 %v34, 16
    %v297 = vrot.slane %v295, 4
    %v298 = vshll.u32 %v34, 16
    %v300 = vrot.slane %v298, 5
    %v301 = vor.u32 %v297, %v300
    %v302 = vrot.slane %v301, 4
    %v304 = vshll.u32 %v35, 16
    %v306 = vrot.slane %v304, 5
    %v307 = vsel %vm197, %v302, %v306
    %v308 = vshrl.u32 %v35, 16
    %v310 = vrot.slane %v308, 4
    %v311 = vor.u32 %v310, %v306
    %v312 = vrot.slane %v311, 4
    %v314 = vshll.u32 %v36, 16
    %v316 = vrot.slane %v314, 5
    %v317 = vsel %vm197, %v312, %v316
    %v319 = vshrl.u32 %v37, 16
    %v321 = vrot.slane %v319, 4
    %v322 = vshll.u32 %v37, 16
    %v324 = vrot.slane %v322, 5
    %v325 = vor.u32 %v321, %v324
    %v326 = vrot.slane %v325, 4
    %v328 = vshll.u32 %v38, 16
    %v330 = vrot.slane %v328, 5
    %v331 = vsel %vm197, %v326, %v330
    %v332 = vshrl.u32 %v38, 16
    %v334 = vrot.slane %v332, 4
    %v335 = vor.u32 %v334, %v330
    %v336 = vrot.slane %v335, 4
    %v338 = vshll.u32 %v39, 16
    %v340 = vrot.slane %v338, 5
    %v341 = vsel %vm197, %v336, %v340
    %v343 = vshrl.u32 %v40, 16
    %v345 = vrot.slane %v343, 4
    %v346 = vshll.u32 %v40, 16
    %v348 = vrot.slane %v346, 5
    %v349 = vor.u32 %v345, %v348
    %v350 = vrot.slane %v349, 4
    %v352 = vshll.u32 %v41, 16
    %v354 = vrot.slane %v352, 5
    %v355 = vsel %vm197, %v350, %v354
    %v356 = vshrl.u32 %v41, 16
    %v358 = vrot.slane %v356, 4
    %v359 = vor.u32 %v358, %v354
    %v360 = vrot.slane %v359, 4
    %v362 = vshll.u32 %v42, 16
    %v364 = vrot.slane %v362, 5
    %v365 = vsel %vm197, %v360, %v364
    %v367 = vshrl.u32 %v43, 16
    %v369 = vrot.slane %v367, 4
    %v370 = vshll.u32 %v43, 16
    %v372 = vrot.slane %v370, 5
    %v373 = vor.u32 %v369, %v372
    %v374 = vrot.slane %v373, 4
    %v376 = vshll.u32 %v44, 16
    %v378 = vrot.slane %v376, 5
    %v379 = vsel %vm197, %v374, %v378
    %v380 = vshrl.u32 %v44, 16
    %v382 = vrot.slane %v380, 4
    %v383 = vor.u32 %v382, %v378
    %v384 = vrot.slane %v383, 4
    %v386 = vshll.u32 %v45, 16
    %v388 = vrot.slane %v386, 5
    %v389 = vsel %vm197, %v384, %v388
    %v391 = vshrl.u32 %v46, 16
    %v393 = vrot.slane %v391, 4
    %v394 = vshll.u32 %v46, 16
    %v396 = vrot.slane %v394, 5
    %v397 = vor.u32 %v393, %v396
    %v398 = vrot.slane %v397, 4
    %v400 = vshll.u32 %v47, 16
    %v402 = vrot.slane %v400, 5
    %v403 = vsel %vm197, %v398, %v402
    %v404 = vshrl.u32 %v47, 16
    %v406 = vrot.slane %v404, 4
    %v407 = vor.u32 %v406, %v402
    %v408 = vrot.slane %v407, 4
    %v410 = vshll.u32 %v48, 16
    %v412 = vrot.slane %v410, 5
    %v413 = vsel %vm197, %v408, %v412
    %v415 = vshrl.u32 %v49, 16
    %v417 = vrot.slane %v415, 4
    %v418 = vshll.u32 %v49, 16
    %v420 = vrot.slane %v418, 5
    %v421 = vor.u32 %v417, %v420
    %v422 = vrot.slane %v421, 4
    %v424 = vshll.u32 %v50, 16
    %v426 = vrot.slane %v424, 5
    %v427 = vsel %vm197, %v422, %v426
    %v428 = vshrl.u32 %v50, 16
    %v430 = vrot.slane %v428, 4
    %v431 = vor.u32 %v430, %v426
    %v432 = vrot.slane %v431, 4
    %v434 = vshll.u32 %v51, 16
    %v436 = vrot.slane %v434, 5
    %v437 = vsel %vm197, %v432, %v436
    %v439 = vshrl.u32 %v52, 16
    %v441 = vrot.slane %v439, 4
    %v442 = vshll.u32 %v52, 16
    %v444 = vrot.slane %v442, 5
    %v445 = vor.u32 %v441, %v444
    %v446 = vrot.slane %v445, 4
    %v448 = vshll.u32 %v53, 16
    %v450 = vrot.slane %v448, 5
    %v451 = vsel %vm197, %v446, %v450
    %v452 = vshrl.u32 %v53, 16
    %v454 = vrot.slane %v452, 4
    %v455 = vor.u32 %v454, %v450
    %v456 = vrot.slane %v455, 4
    %v458 = vshll.u32 %v54, 16
    %v460 = vrot.slane %v458, 5
    %v461 = vsel %vm197, %v456, %v460
    %v463 = vshrl.u32 %v55, 16
    %v465 = vrot.slane %v463, 4
    %v466 = vshll.u32 %v55, 16
    %v468 = vrot.slane %v466, 5
    %v469 = vor.u32 %v465, %v468
    %v470 = vrot.slane %v469, 4
    %v472 = vshll.u32 %v56, 16
    %v474 = vrot.slane %v472, 5
    %v475 = vsel %vm197, %v470, %v474
    %v476 = vshrl.u32 %v56, 16
    %v478 = vrot.slane %v476, 4
    %v479 = vor.u32 %v478, %v474
    %v480 = vrot.slane %v479, 4
    %v482 = vshll.u32 %v57, 16
    %v484 = vrot.slane %v482, 5
    %v485 = vsel %vm197, %v480, %v484
    %v487 = vshrl.u32 %v58, 16
    %v489 = vrot.slane %v487, 4
    %v490 = vshll.u32 %v58, 16
    %v492 = vrot.slane %v490, 5
    %v493 = vor.u32 %v489, %v492
    %v494 = vrot.slane %v493, 4
    %v496 = vshll.u32 %v59, 16
    %v498 = vrot.slane %v496, 5
    %v499 = vsel %vm197, %v494, %v498
    %v500 = vshrl.u32 %v59, 16
    %v502 = vrot.slane %v500, 4
    %v503 = vor.u32 %v502, %v498
    %v504 = vrot.slane %v503, 4
    %v506 = vshll.u32 %v60, 16
    %v508 = vrot.slane %v506, 5
    %v509 = vsel %vm197, %v504, %v508
    %v511 = vshrl.u32 %v61, 16
    %v513 = vrot.slane %v511, 4
    %v514 = vshll.u32 %v61, 16
    %v516 = vrot.slane %v514, 5
    %v517 = vor.u32 %v513, %v516
    %v518 = vrot.slane %v517, 4
    %v520 = vshll.u32 %v62, 16
    %v522 = vrot.slane %v520, 5
    %v523 = vsel %vm197, %v518, %v522
    %v524 = vshrl.u32 %v62, 16
    %v526 = vrot.slane %v524, 4
    %v527 = vor.u32 %v526, %v522
    %v528 = vrot.slane %v527, 4
    %v530 = vshll.u32 %v63, 16
    %v532 = vrot.slane %v530, 5
    %v533 = vsel %vm197, %v528, %v532
    %v535 = vshrl.u32 %v64, 16
    %v537 = vrot.slane %v535, 4
    %v538 = vshll.u32 %v64, 16
    %v540 = vrot.slane %v538, 5
    %v541 = vor.u32 %v537, %v540
    %v542 = vrot.slane %v541, 4
    %v544 = vshll.u32 %v65, 16
    %v546 = vrot.slane %v544, 5
    %v547 = vsel %vm197, %v542, %v546
    %v548 = vshrl.u32 %v65, 16
    %v550 = vrot.slane %v548, 4
    %v551 = vor.u32 %v550, %v546
    %v552 = vrot.slane %v551, 4
    %v554 = vshll.u32 %v66, 16
    %v556 = vrot.slane %v554, 5
    %v557 = vsel %vm197, %v552, %v556
    %v559 = vshrl.u32 %v67, 16
    %v561 = vrot.slane %v559, 4
    %v562 = vshll.u32 %v67, 16
    %v564 = vrot.slane %v562, 5
    %v565 = vor.u32 %v561, %v564
    %v566 = vrot.slane %v565, 4
    %v568 = vshll.u32 %v68, 16
    %v570 = vrot.slane %v568, 5
    %v571 = vsel %vm197, %v566, %v570
    %v572 = vshrl.u32 %v68, 16
    %v574 = vrot.slane %v572, 4
    %v575 = vor.u32 %v574, %v570
    %v576 = vrot.slane %v575, 4
    %v578 = vshll.u32 %v69, 16
    %v580 = vrot.slane %v578, 5
    %v581 = vsel %vm197, %v576, %v580
    %v583 = vshrl.u32 %v76, 16
    %v585 = vrot.slane %v583, 4
    %v586 = vshll.u32 %v76, 16
    %v588 = vrot.slane %v586, 5
    %v589 = vor.u32 %v585, %v588
    %v590 = vrot.slane %v589, 4
    %v592 = vshll.u32 %v77, 16
    %v594 = vrot.slane %v592, 5
    %v595 = vsel %vm197, %v590, %v594
    %v596 = vshrl.u32 %v77, 16
    %v598 = vrot.slane %v596, 4
    %v599 = vor.u32 %v598, %v594
    %v600 = vrot.slane %v599, 4
    %v602 = vshll.u32 %v78, 16
    %v604 = vrot.slane %v602, 5
    %v605 = vsel %vm197, %v600, %v604
    %v607 = vshrl.u32 %v79, 16
    %v609 = vrot.slane %v607, 4
    %v610 = vshll.u32 %v79, 16
    %v612 = vrot.slane %v610, 5
    %v613 = vor.u32 %v609, %v612
    %v614 = vrot.slane %v613, 4
    %v616 = vshll.u32 %v80, 16
    %v618 = vrot.slane %v616, 5
    %v619 = vsel %vm197, %v614, %v618
    %v620 = vshrl.u32 %v80, 16
    %v622 = vrot.slane %v620, 4
    %v623 = vor.u32 %v622, %v618
    %v624 = vrot.slane %v623, 4
    %v626 = vshll.u32 %v81, 16
    %v628 = vrot.slane %v626, 5
    %v629 = vsel %vm197, %v624, %v628
    %v631 = vshrl.u32 %v82, 16
    %v633 = vrot.slane %v631, 4
    %v634 = vshll.u32 %v82, 16
    %v636 = vrot.slane %v634, 5
    %v637 = vor.u32 %v633, %v636
    %v638 = vrot.slane %v637, 4
    %v640 = vshll.u32 %v83, 16
    %v642 = vrot.slane %v640, 5
    %v643 = vsel %vm197, %v638, %v642
    %v644 = vshrl.u32 %v83, 16
    %v646 = vrot.slane %v644, 4
    %v647 = vor.u32 %v646, %v642
    %v648 = vrot.slane %v647, 4
    %v650 = vshll.u32 %v84, 16
    %v652 = vrot.slane %v650, 5
    %v653 = vsel %vm197, %v648, %v652
    %v655 = vshrl.u32 %v85, 16
    %v657 = vrot.slane %v655, 4
    %v658 = vshll.u32 %v85, 16
    %v660 = vrot.slane %v658, 5
    %v661 = vor.u32 %v657, %v660
    %v662 = vrot.slane %v661, 4
    %v664 = vshll.u32 %v86, 16
    %v666 = vrot.slane %v664, 5
    %v667 = vsel %vm197, %v662, %v666
    %v668 = vshrl.u32 %v86, 16
    %v670 = vrot.slane %v668, 4
    %v671 = vor.u32 %v670, %v666
    %v672 = vrot.slane %v671, 4
    %v674 = vshll.u32 %v87, 16
    %v676 = vrot.slane %v674, 5
    %v677 = vsel %vm197, %v672, %v676
    %v679 = vshrl.u32 %v88, 16
    %v681 = vrot.slane %v679, 4
    %v682 = vshll.u32 %v88, 16
    %v684 = vrot.slane %v682, 5
    %v685 = vor.u32 %v681, %v684
    %v686 = vrot.slane %v685, 4
    %v688 = vshll.u32 %v89, 16
    %v690 = vrot.slane %v688, 5
    %v691 = vsel %vm197, %v686, %v690
    %v692 = vshrl.u32 %v89, 16
    %v694 = vrot.slane %v692, 4
    %v695 = vor.u32 %v694, %v690
    %v696 = vrot.slane %v695, 4
    %v698 = vshll.u32 %v90, 16
    %v700 = vrot.slane %v698, 5
    %v701 = vsel %vm197, %v696, %v700
    %v703 = vshrl.u32 %v91, 16
    %v705 = vrot.slane %v703, 4
    %v706 = vshll.u32 %v91, 16
    %v708 = vrot.slane %v706, 5
    %v709 = vor.u32 %v705, %v708
    %v710 = vrot.slane %v709, 4
    %v712 = vshll.u32 %v92, 16
    %v714 = vrot.slane %v712, 5
    %v715 = vsel %vm197, %v710, %v714
    %v716 = vshrl.u32 %v92, 16
    %v718 = vrot.slane %v716, 4
    %v719 = vor.u32 %v718, %v714
    %v720 = vrot.slane %v719, 4
    %v722 = vshll.u32 %v93, 16
    %v724 = vrot.slane %v722, 5
    %v725 = vsel %vm197, %v720, %v724
    %v727 = vshrl.u32 %v94, 16
    %v729 = vrot.slane %v727, 4
    %v730 = vshll.u32 %v94, 16
    %v732 = vrot.slane %v730, 5
    %v733 = vor.u32 %v729, %v732
    %v734 = vrot.slane %v733, 4
    %v736 = vshll.u32 %v95, 16
    %v738 = vrot.slane %v736, 5
    %v739 = vsel %vm197, %v734, %v738
    %v740 = vshrl.u32 %v95, 16
    %v742 = vrot.slane %v740, 4
    %v743 = vor.u32 %v742, %v738
    %v744 = vrot.slane %v743, 4
    %v746 = vshll.u32 %v96, 16
    %v748 = vrot.slane %v746, 5
    %v749 = vsel %vm197, %v744, %v748
    %v751 = vshrl.u32 %v97, 16
    %v753 = vrot.slane %v751, 4
    %v754 = vshll.u32 %v97, 16
    %v756 = vrot.slane %v754, 5
    %v757 = vor.u32 %v753, %v756
    %v758 = vrot.slane %v757, 4
    %v760 = vshll.u32 %v98, 16
    %v762 = vrot.slane %v760, 5
    %v763 = vsel %vm197, %v758, %v762
    %v764 = vshrl.u32 %v98, 16
    %v766 = vrot.slane %v764, 4
    %v767 = vor.u32 %v766, %v762
    %v768 = vrot.slane %v767, 4
    %v770 = vshll.u32 %v99, 16
    %v772 = vrot.slane %v770, 5
    %v773 = vsel %vm197, %v768, %v772
    %v775 = vshrl.u32 %v100, 16
    %v777 = vrot.slane %v775, 4
    %v778 = vshll.u32 %v100, 16
    %v780 = vrot.slane %v778, 5
    %v781 = vor.u32 %v777, %v780
    %v782 = vrot.slane %v781, 4
    %v784 = vshll.u32 %v101, 16
    %v786 = vrot.slane %v784, 5
    %v787 = vsel %vm197, %v782, %v786
    %v788 = vshrl.u32 %v101, 16
    %v790 = vrot.slane %v788, 4
    %v791 = vor.u32 %v790, %v786
    %v792 = vrot.slane %v791, 4
    %v794 = vshll.u32 %v102, 16
    %v796 = vrot.slane %v794, 5
    %v797 = vsel %vm197, %v792, %v796
    %v799 = vshrl.u32 %v103, 16
    %v801 = vrot.slane %v799, 4
    %v802 = vshll.u32 %v103, 16
    %v804 = vrot.slane %v802, 5
    %v805 = vor.u32 %v801, %v804
    %v806 = vrot.slane %v805, 4
    %v808 = vshll.u32 %v104, 16
    %v810 = vrot.slane %v808, 5
    %v811 = vsel %vm197, %v806, %v810
    %v812 = vshrl.u32 %v104, 16
    %v814 = vrot.slane %v812, 4
    %v815 = vor.u32 %v814, %v810
    %v816 = vrot.slane %v815, 4
    %v818 = vshll.u32 %v105, 16
    %v820 = vrot.slane %v818, 5
    %v821 = vsel %vm197, %v816, %v820
    %v823 = vshrl.u32 %v106, 16
    %v825 = vrot.slane %v823, 4
    %v826 = vshll.u32 %v106, 16
    %v828 = vrot.slane %v826, 5
    %v829 = vor.u32 %v825, %v828
    %v830 = vrot.slane %v829, 4
    %v832 = vshll.u32 %v107, 16
    %v834 = vrot.slane %v832, 5
    %v835 = vsel %vm197, %v830, %v834
    %v836 = vshrl.u32 %v107, 16
    %v838 = vrot.slane %v836, 4
    %v839 = vor.u32 %v838, %v834
    %v840 = vrot.slane %v839, 4
    %v842 = vshll.u32 %v108, 16
    %v844 = vrot.slane %v842, 5
    %v845 = vsel %vm197, %v840, %v844
    %v847 = vshrl.u32 %v109, 16
    %v849 = vrot.slane %v847, 4
    %v850 = vshll.u32 %v109, 16
    %v852 = vrot.slane %v850, 5
    %v853 = vor.u32 %v849, %v852
    %v854 = vrot.slane %v853, 4
    %v856 = vshll.u32 %v110, 16
    %v858 = vrot.slane %v856, 5
    %v859 = vsel %vm197, %v854, %v858
    %v860 = vshrl.u32 %v110, 16
    %v862 = vrot.slane %v860, 4
    %v863 = vor.u32 %v862, %v858
    %v864 = vrot.slane %v863, 4
    %v866 = vshll.u32 %v111, 16
    %v868 = vrot.slane %v866, 5
    %v869 = vsel %vm197, %v864, %v868
    %v871 = vshrl.u32 %v112, 16
    %v873 = vrot.slane %v871, 4
    %v874 = vshll.u32 %v112, 16
    %v876 = vrot.slane %v874, 5
    %v877 = vor.u32 %v873, %v876
    %v878 = vrot.slane %v877, 4
    %v880 = vshll.u32 %v113, 16
    %v882 = vrot.slane %v880, 5
    %v883 = vsel %vm197, %v878, %v882
    %v884 = vshrl.u32 %v113, 16
    %v886 = vrot.slane %v884, 4
    %v887 = vor.u32 %v886, %v882
    %v888 = vrot.slane %v887, 4
    %v890 = vshll.u32 %v114, 16
    %v892 = vrot.slane %v890, 5
    %v893 = vsel %vm197, %v888, %v892
    %v895 = vshrl.u32 %v115, 16
    %v897 = vrot.slane %v895, 4
    %v898 = vshll.u32 %v115, 16
    %v900 = vrot.slane %v898, 5
    %v901 = vor.u32 %v897, %v900
    %v902 = vrot.slane %v901, 4
    %v904 = vshll.u32 %v116, 16
    %v906 = vrot.slane %v904, 5
    %v907 = vsel %vm197, %v902, %v906
    %v908 = vshrl.u32 %v116, 16
    %v910 = vrot.slane %v908, 4
    %v911 = vor.u32 %v910, %v906
    %v912 = vrot.slane %v911, 4
    %v914 = vshll.u32 %v117, 16
    %v916 = vrot.slane %v914, 5
    %v917 = vsel %vm197, %v912, %v916
    %v919 = vshrl.u32 %v118, 16
    %v921 = vrot.slane %v919, 4
    %v922 = vshll.u32 %v118, 16
    %v924 = vrot.slane %v922, 5
    %v925 = vor.u32 %v921, %v924
    %v926 = vrot.slane %v925, 4
    %v928 = vshll.u32 %v119, 16
    %v930 = vrot.slane %v928, 5
    %v931 = vsel %vm197, %v926, %v930
    %v932 = vshrl.u32 %v119, 16
    %v934 = vrot.slane %v932, 4
    %v935 = vor.u32 %v934, %v930
    %v936 = vrot.slane %v935, 4
    %v938 = vshll.u32 %v120, 16
    %v940 = vrot.slane %v938, 5
    %v941 = vsel %vm197, %v936, %v940
    %v943 = vshrl.u32 %v121, 16
    %v945 = vrot.slane %v943, 4
    %v946 = vshll.u32 %v121, 16
    %v948 = vrot.slane %v946, 5
    %v949 = vor.u32 %v945, %v948
    %v950 = vrot.slane %v949, 4
    %v952 = vshll.u32 %v122, 16
    %v954 = vrot.slane %v952, 5
    %v955 = vsel %vm197, %v950, %v954
    %v956 = vshrl.u32 %v122, 16
    %v958 = vrot.slane %v956, 4
    %v959 = vor.u32 %v958, %v954
    %v960 = vrot.slane %v959, 4
    %v962 = vshll.u32 %v123, 16
    %v964 = vrot.slane %v962, 5
    %v965 = vsel %vm197, %v960, %v964
    %966 = vrot.lane.b32.xlu0 %v211, 4
    %v967 = vpop.permute.xlu0 %966
    %968 = vrot.lane.b32.xlu0 %v221, 4
    %v969 = vpop.permute.xlu0 %968
    %970 = vrot.lane.b32.xlu0 %v235, 4
    %v971 = vpop.permute.xlu0 %970
    %972 = vrot.lane.b32.xlu0 %v245, 4
    %v973 = vpop.permute.xlu0 %972
    %974 = vrot.lane.b32.xlu0 %v259, 4
    %v975 = vpop.permute.xlu0 %974
    %976 = vrot.lane.b32.xlu0 %v269, 4
    %v977 = vpop.permute.xlu0 %976
    %978 = vrot.lane.b32.xlu0 %v283, 4
    %v979 = vpop.permute.xlu0 %978
    %980 = vrot.lane.b32.xlu0 %v293, 4
    %v981 = vpop.permute.xlu0 %980
    %982 = vrot.lane.b32.xlu0 %v307, 4
    %v983 = vpop.permute.xlu0 %982
    %984 = vrot.lane.b32.xlu0 %v317, 4
    %v985 = vpop.permute.xlu0 %984
    %986 = vrot.lane.b32.xlu0 %v331, 4
    %v987 = vpop.permute.xlu0 %986
    %988 = vrot.lane.b32.xlu0 %v341, 4
    %v989 = vpop.permute.xlu0 %988
    %990 = vrot.lane.b32.xlu0 %v355, 4
    %v991 = vpop.permute.xlu0 %990
    %992 = vrot.lane.b32.xlu0 %v365, 4
    %v993 = vpop.permute.xlu0 %992
    %994 = vrot.lane.b32.xlu0 %v379, 4
    %v995 = vpop.permute.xlu0 %994
    %996 = vrot.lane.b32.xlu0 %v389, 4
    %v997 = vpop.permute.xlu0 %996
    %998 = vrot.lane.b32.xlu0 %v403, 4
    %v999 = vpop.permute.xlu0 %998
    %1000 = vrot.lane.b32.xlu0 %v413, 4
    %v1001 = vpop.permute.xlu0 %1000
    %1002 = vrot.lane.b32.xlu0 %v427, 4
    %v1003 = vpop.permute.xlu0 %1002
    %1004 = vrot.lane.b32.xlu0 %v437, 4
    %v1005 = vpop.permute.xlu0 %1004
    %1006 = vrot.lane.b32.xlu0 %v451, 4
    %v1007 = vpop.permute.xlu0 %1006
    %1008 = vrot.lane.b32.xlu0 %v461, 4
    %v1009 = vpop.permute.xlu0 %1008
    %1010 = vrot.lane.b32.xlu0 %v475, 4
    %v1011 = vpop.permute.xlu0 %1010
    %1012 = vrot.lane.b32.xlu0 %v485, 4
    %v1013 = vpop.permute.xlu0 %1012
    %1014 = vrot.lane.b32.xlu0 %v499, 4
    %v1015 = vpop.permute.xlu0 %1014
    %1016 = vrot.lane.b32.xlu0 %v509, 4
    %v1017 = vpop.permute.xlu0 %1016
    %1018 = vrot.lane.b32.xlu0 %v523, 4
    %v1019 = vpop.permute.xlu0 %1018
    %1020 = vrot.lane.b32.xlu0 %v533, 4
    %v1021 = vpop.permute.xlu0 %1020
    %1022 = vrot.lane.b32.xlu0 %v547, 4
    %v1023 = vpop.permute.xlu0 %1022
    %1024 = vrot.lane.b32.xlu0 %v557, 4
    %v1025 = vpop.permute.xlu0 %1024
    %1026 = vrot.lane.b32.xlu0 %v571, 4
    %v1027 = vpop.permute.xlu0 %1026
    %1028 = vrot.lane.b32.xlu0 %v581, 4
    %v1029 = vpop.permute.xlu0 %1028
    %1030 = vrot.lane.b32.xlu0 %v595, 4
    %v1031 = vpop.permute.xlu0 %1030
    %1032 = vrot.lane.b32.xlu0 %v605, 4
    %v1033 = vpop.permute.xlu0 %1032
    %1034 = vrot.lane.b32.xlu0 %v619, 4
    %v1035 = vpop.permute.xlu0 %1034
    %1036 = vrot.lane.b32.xlu0 %v629, 4
    %v1037 = vpop.permute.xlu0 %1036
    %1038 = vrot.lane.b32.xlu0 %v643, 4
    %v1039 = vpop.permute.xlu0 %1038
    %1040 = vrot.lane.b32.xlu0 %v653, 4
    %v1041 = vpop.permute.xlu0 %1040
    %1042 = vrot.lane.b32.xlu0 %v667, 4
    %v1043 = vpop.permute.xlu0 %1042
    %1044 = vrot.lane.b32.xlu0 %v677, 4
    %v1045 = vpop.permute.xlu0 %1044
    %1046 = vrot.lane.b32.xlu0 %v691, 4
    %v1047 = vpop.permute.xlu0 %1046
    %1048 = vrot.lane.b32.xlu0 %v701, 4
    %v1049 = vpop.permute.xlu0 %1048
    %1050 = vrot.lane.b32.xlu0 %v715, 4
    %v1051 = vpop.permute.xlu0 %1050
    %1052 = vrot.lane.b32.xlu0 %v725, 4
    %v1053 = vpop.permute.xlu0 %1052
    %1054 = vrot.lane.b32.xlu0 %v739, 4
    %v1055 = vpop.permute.xlu0 %1054
    %1056 = vrot.lane.b32.xlu0 %v749, 4
    %v1057 = vpop.permute.xlu0 %1056
    %1058 = vrot.lane.b32.xlu0 %v763, 4
    %v1059 = vpop.permute.xlu0 %1058
    %1060 = vrot.lane.b32.xlu0 %v773, 4
    %v1061 = vpop.permute.xlu0 %1060
    %1062 = vrot.lane.b32.xlu0 %v787, 4
    %v1063 = vpop.permute.xlu0 %1062
    %1064 = vrot.lane.b32.xlu0 %v797, 4
    %v1065 = vpop.permute.xlu0 %1064
    %1066 = vrot.lane.b32.xlu0 %v811, 4
    %v1067 = vpop.permute.xlu0 %1066
    %1068 = vrot.lane.b32.xlu0 %v821, 4
    %v1069 = vpop.permute.xlu0 %1068
    %1070 = vrot.lane.b32.xlu0 %v835, 4
    %v1071 = vpop.permute.xlu0 %1070
    %1072 = vrot.lane.b32.xlu0 %v845, 4
    %v1073 = vpop.permute.xlu0 %1072
    %1074 = vrot.lane.b32.xlu0 %v859, 4
    %v1075 = vpop.permute.xlu0 %1074
    %1076 = vrot.lane.b32.xlu0 %v869, 4
    %v1077 = vpop.permute.xlu0 %1076
    %1078 = vrot.lane.b32.xlu0 %v883, 4
    %v1079 = vpop.permute.xlu0 %1078
    %1080 = vrot.lane.b32.xlu0 %v893, 4
    %v1081 = vpop.permute.xlu0 %1080
    %1082 = vrot.lane.b32.xlu0 %v907, 4
    %v1083 = vpop.permute.xlu0 %1082
    %1084 = vrot.lane.b32.xlu0 %v917, 4
    %v1085 = vpop.permute.xlu0 %1084
    %1086 = vrot.lane.b32.xlu0 %v931, 4
    %v1087 = vpop.permute.xlu0 %1086
    %1088 = vrot.lane.b32.xlu0 %v941, 4
    %v1089 = vpop.permute.xlu0 %1088
    %1090 = vrot.lane.b32.xlu0 %v955, 4
    %v1091 = vpop.permute.xlu0 %1090
    %1092 = vrot.lane.b32.xlu0 %v965, 4
    %v1093 = vpop.permute.xlu0 %1092
    %vm1158 = vcmask 60448
    %1159 = vst.msk [vmem:[#allocation2] sm:$0xf] %vm1158, %v967
    %1160 = vst.msk [vmem:[#allocation2 + $0x4] sm:$0xf] %vm1158, %v969
    %1161 = vst.msk [vmem:[#allocation2 + $0x8] sm:$0xf] %vm1158, %v971
    %1162 = vst.msk [vmem:[#allocation2 + $0xc] sm:$0xf] %vm1158, %v973
    %1163 = vst.msk [vmem:[#allocation2 + $0x10] sm:$0xf] %vm1158, %v975
    %1164 = vst.msk [vmem:[#allocation2 + $0x14] sm:$0xf] %vm1158, %v977
    %1165 = vst.msk [vmem:[#allocation2 + $0x18] sm:$0xf] %vm1158, %v979
    %1166 = vst.msk [vmem:[#allocation2 + $0x1c] sm:$0xf] %vm1158, %v981
    %1167 = vst.msk [vmem:[#allocation2 + $0x20] sm:$0xf] %vm1158, %v983
    %1168 = vst.msk [vmem:[#allocation2 + $0x24] sm:$0xf] %vm1158, %v985
    %1169 = vst.msk [vmem:[#allocation2 + $0x28] sm:$0xf] %vm1158, %v987
    %1170 = vst.msk [vmem:[#allocation2 + $0x2c] sm:$0xf] %vm1158, %v989
    %1171 = vst.msk [vmem:[#allocation2 + $0x30] sm:$0xf] %vm1158, %v991
    %1172 = vst.msk [vmem:[#allocation2 + $0x34] sm:$0xf] %vm1158, %v993
    %1173 = vst.msk [vmem:[#allocation2 + $0x38] sm:$0xf] %vm1158, %v995
    %1174 = vst.msk [vmem:[#allocation2 + $0x3c] sm:$0xf] %vm1158, %v997
    %1175 = vst.msk [vmem:[#allocation2 + $0x40] sm:$0xf] %vm1158, %v999
    %1176 = vst.msk [vmem:[#allocation2 + $0x44] sm:$0xf] %vm1158, %v1001
    %1177 = vst.msk [vmem:[#allocation2 + $0x48] sm:$0xf] %vm1158, %v1003
    %1178 = vst.msk [vmem:[#allocation2 + $0x4c] sm:$0xf] %vm1158, %v1005
    %1179 = vst.msk [vmem:[#allocation2 + $0x50] sm:$0xf] %vm1158, %v1007
    %1180 = vst.msk [vmem:[#allocation2 + $0x54] sm:$0xf] %vm1158, %v1009
    %1181 = vst.msk [vmem:[#allocation2 + $0x58] sm:$0xf] %vm1158, %v1011
    %1182 = vst.msk [vmem:[#allocation2 + $0x5c] sm:$0xf] %vm1158, %v1013
    %1183 = vst.msk [vmem:[#allocation2 + $0x60] sm:$0xf] %vm1158, %v1015
    %1184 = vst.msk [vmem:[#allocation2 + $0x64] sm:$0xf] %vm1158, %v1017
    %1185 = vst.msk [vmem:[#allocation2 + $0x68] sm:$0xf] %vm1158, %v1019
    %1186 = vst.msk [vmem:[#allocation2 + $0x6c] sm:$0xf] %vm1158, %v1021
    %1187 = vst.msk [vmem:[#allocation2 + $0x70] sm:$0xf] %vm1158, %v1023
    %1188 = vst.msk [vmem:[#allocation2 + $0x74] sm:$0xf] %vm1158, %v1025
    %1189 = vst.msk [vmem:[#allocation2 + $0x78] sm:$0xf] %vm1158, %v1027
    %1190 = vst.msk [vmem:[#allocation2 + $0x7c] sm:$0xf] %vm1158, %v1029
    %1191 = vst.msk [vmem:[#allocation2 + $0x80] sm:$0xf] %vm1158, %v1031
    %1192 = vst.msk [vmem:[#allocation2 + $0x84] sm:$0xf] %vm1158, %v1033
    %1193 = vst.msk [vmem:[#allocation2 + $0x88] sm:$0xf] %vm1158, %v1035
    %1194 = vst.msk [vmem:[#allocation2 + $0x8c] sm:$0xf] %vm1158, %v1037
    %1195 = vst.msk [vmem:[#allocation2 + $0x90] sm:$0xf] %vm1158, %v1039
    %1196 = vst.msk [vmem:[#allocation2 + $0x94] sm:$0xf] %vm1158, %v1041
    %1197 = vst.msk [vmem:[#allocation2 + $0x98] sm:$0xf] %vm1158, %v1043
    %1198 = vst.msk [vmem:[#allocation2 + $0x9c] sm:$0xf] %vm1158, %v1045
    %1199 = vst.msk [vmem:[#allocation2 + $0xa0] sm:$0xf] %vm1158, %v1047
    %1200 = vst.msk [vmem:[#allocation2 + $0xa4] sm:$0xf] %vm1158, %v1049
    %1201 = vst.msk [vmem:[#allocation2 + $0xa8] sm:$0xf] %vm1158, %v1051
    %1202 = vst.msk [vmem:[#allocation2 + $0xac] sm:$0xf] %vm1158, %v1053
    %1203 = vst.msk [vmem:[#allocation2 + $0xb0] sm:$0xf] %vm1158, %v1055
    %1204 = vst.msk [vmem:[#allocation2 + $0xb4] sm:$0xf] %vm1158, %v1057
    %1205 = vst.msk [vmem:[#allocation2 + $0xb8] sm:$0xf] %vm1158, %v1059
    %1206 = vst.msk [vmem:[#allocation2 + $0xbc] sm:$0xf] %vm1158, %v1061
    %1207 = vst.msk [vmem:[#allocation2 + $0xc0] sm:$0xf] %vm1158, %v1063
    %1208 = vst.msk [vmem:[#allocation2 + $0xc4] sm:$0xf] %vm1158, %v1065
    %1209 = vst.msk [vmem:[#allocation2 + $0xc8] sm:$0xf] %vm1158, %v1067
    %1210 = vst.msk [vmem:[#allocation2 + $0xcc] sm:$0xf] %vm1158, %v1069
    %1211 = vst.msk [vmem:[#allocation2 + $0xd0] sm:$0xf] %vm1158, %v1071
    %1212 = vst.msk [vmem:[#allocation2 + $0xd4] sm:$0xf] %vm1158, %v1073
    %1213 = vst.msk [vmem:[#allocation2 + $0xd8] sm:$0xf] %vm1158, %v1075
    %1214 = vst.msk [vmem:[#allocation2 + $0xdc] sm:$0xf] %vm1158, %v1077
    %1215 = vst.msk [vmem:[#allocation2 + $0xe0] sm:$0xf] %vm1158, %v1079
    %1216 = vst.msk [vmem:[#allocation2 + $0xe4] sm:$0xf] %vm1158, %v1081
    %1217 = vst.msk [vmem:[#allocation2 + $0xe8] sm:$0xf] %vm1158, %v1083
    %1218 = vst.msk [vmem:[#allocation2 + $0xec] sm:$0xf] %vm1158, %v1085
    %1219 = vst.msk [vmem:[#allocation2 + $0xf0] sm:$0xf] %vm1158, %v1087
    %1220 = vst.msk [vmem:[#allocation2 + $0xf4] sm:$0xf] %vm1158, %v1089
    %1221 = vst.msk [vmem:[#allocation2 + $0xf8] sm:$0xf] %vm1158, %v1091
    %1222 = vst.msk [vmem:[#allocation2 + $0xfc] sm:$0xf] %vm1158, %v1093
    %vm1319 = vcmask 1042432
    %vm1320 = vcmask 1046532
    %vm1321 = vmor %vm1319, %vm1320
    %v1322 = vrot.slane %v22, 5
    %v1323 = vrot.slane %v1322, 4
    %v1324 = vrot.slane %v23, 5
    %v1325 = vsel %vm1321, %v1323, %v1324
    %v1326 = vrot.slane %v1324, 4
    %v1327 = vrot.slane %v24, 5
    %v1328 = vsel %vm1321, %v1326, %v1327
    %v1329 = vrot.slane %v25, 5
    %v1330 = vrot.slane %v1329, 4
    %v1331 = vrot.slane %v26, 5
    %v1332 = vsel %vm1321, %v1330, %v1331
    %v1333 = vrot.slane %v1331, 4
    %v1334 = vrot.slane %v27, 5
    %v1335 = vsel %vm1321, %v1333, %v1334
    %v1336 = vrot.slane %v28, 5
    %v1337 = vrot.slane %v1336, 4
    %v1338 = vrot.slane %v29, 5
    %v1339 = vsel %vm1321, %v1337, %v1338
    %v1340 = vrot.slane %v1338, 4
    %v1341 = vrot.slane %v30, 5
    %v1342 = vsel %vm1321, %v1340, %v1341
    %v1343 = vrot.slane %v31, 5
    %v1344 = vrot.slane %v1343, 4
    %v1345 = vrot.slane %v32, 5
    %v1346 = vsel %vm1321, %v1344, %v1345
    %v1347 = vrot.slane %v1345, 4
    %v1348 = vrot.slane %v33, 5
    %v1349 = vsel %vm1321, %v1347, %v1348
    %v1350 = vrot.slane %v34, 5
    %v1351 = vrot.slane %v1350, 4
    %v1352 = vrot.slane %v35, 5
    %v1353 = vsel %vm1321, %v1351, %v1352
    %v1354 = vrot.slane %v1352, 4
    %v1355 = vrot.slane %v36, 5
    %v1356 = vsel %vm1321, %v1354, %v1355
    %v1357 = vrot.slane %v37, 5
    %v1358 = vrot.slane %v1357, 4
    %v1359 = vrot.slane %v38, 5
    %v1360 = vsel %vm1321, %v1358, %v1359
    %v1361 = vrot.slane %v1359, 4
    %v1362 = vrot.slane %v39, 5
    %v1363 = vsel %vm1321, %v1361, %v1362
    %v1364 = vrot.slane %v40, 5
    %v1365 = vrot.slane %v1364, 4
    %v1366 = vrot.slane %v41, 5
    %v1367 = vsel %vm1321, %v1365, %v1366
    %v1368 = vrot.slane %v1366, 4
    %v1369 = vrot.slane %v42, 5
    %v1370 = vsel %vm1321, %v1368, %v1369
    %v1371 = vrot.slane %v43, 5
    %v1372 = vrot.slane %v1371, 4
    %v1373 = vrot.slane %v44, 5
    %v1374 = vsel %vm1321, %v1372, %v1373
    %v1375 = vrot.slane %v1373, 4
    %v1376 = vrot.slane %v45, 5
    %v1377 = vsel %vm1321, %v1375, %v1376
    %v1378 = vrot.slane %v46, 5
    %v1379 = vrot.slane %v1378, 4
    %v1380 = vrot.slane %v47, 5
    %v1381 = vsel %vm1321, %v1379, %v1380
    %v1382 = vrot.slane %v1380, 4
    %v1383 = vrot.slane %v48, 5
    %v1384 = vsel %vm1321, %v1382, %v1383
    %v1385 = vrot.slane %v49, 5
    %v1386 = vrot.slane %v1385, 4
    %v1387 = vrot.slane %v50, 5
    %v1388 = vsel %vm1321, %v1386, %v1387
    %v1389 = vrot.slane %v1387, 4
    %v1390 = vrot.slane %v51, 5
    %v1391 = vsel %vm1321, %v1389, %v1390
    %v1392 = vrot.slane %v52, 5
    %v1393 = vrot.slane %v1392, 4
    %v1394 = vrot.slane %v53, 5
    %v1395 = vsel %vm1321, %v1393, %v1394
    %v1396 = vrot.slane %v1394, 4
    %v1397 = vrot.slane %v54, 5
    %v1398 = vsel %vm1321, %v1396, %v1397
    %v1399 = vrot.slane %v55, 5
    %v1400 = vrot.slane %v1399, 4
    %v1401 = vrot.slane %v56, 5
    %v1402 = vsel %vm1321, %v1400, %v1401
    %v1403 = vrot.slane %v1401, 4
    %v1404 = vrot.slane %v57, 5
    %v1405 = vsel %vm1321, %v1403, %v1404
    %v1406 = vrot.slane %v58, 5
    %v1407 = vrot.slane %v1406, 4
    %v1408 = vrot.slane %v59, 5
    %v1409 = vsel %vm1321, %v1407, %v1408
    %v1410 = vrot.slane %v1408, 4
    %v1411 = vrot.slane %v60, 5
    %v1412 = vsel %vm1321, %v1410, %v1411
    %v1413 = vrot.slane %v61, 5
    %v1414 = vrot.slane %v1413, 4
    %v1415 = vrot.slane %v62, 5
    %v1416 = vsel %vm1321, %v1414, %v1415
    %v1417 = vrot.slane %v1415, 4
    %v1418 = vrot.slane %v63, 5
    %v1419 = vsel %vm1321, %v1417, %v1418
    %v1420 = vrot.slane %v64, 5
    %v1421 = vrot.slane %v1420, 4
    %v1422 = vrot.slane %v65, 5
    %v1423 = vsel %vm1321, %v1421, %v1422
    %v1424 = vrot.slane %v1422, 4
    %v1425 = vrot.slane %v66, 5
    %v1426 = vsel %vm1321, %v1424, %v1425
    %v1427 = vrot.slane %v67, 5
    %v1428 = vrot.slane %v1427, 4
    %v1429 = vrot.slane %v68, 5
    %v1430 = vsel %vm1321, %v1428, %v1429
    %v1431 = vrot.slane %v1429, 4
    %v1432 = vrot.slane %v69, 5
    %v1433 = vsel %vm1321, %v1431, %v1432
    %v1434 = vrot.slane %v76, 5
    %v1435 = vrot.slane %v1434, 4
    %v1436 = vrot.slane %v77, 5
    %v1437 = vsel %vm1321, %v1435, %v1436
    %v1438 = vrot.slane %v1436, 4
    %v1439 = vrot.slane %v78, 5
    %v1440 = vsel %vm1321, %v1438, %v1439
    %v1441 = vrot.slane %v79, 5
    %v1442 = vrot.slane %v1441, 4
    %v1443 = vrot.slane %v80, 5
    %v1444 = vsel %vm1321, %v1442, %v1443
    %v1445 = vrot.slane %v1443, 4
    %v1446 = vrot.slane %v81, 5
    %v1447 = vsel %vm1321, %v1445, %v1446
    %v1448 = vrot.slane %v82, 5
    %v1449 = vrot.slane %v1448, 4
    %v1450 = vrot.slane %v83, 5
    %v1451 = vsel %vm1321, %v1449, %v1450
    %v1452 = vrot.slane %v1450, 4
    %v1453 = vrot.slane %v84, 5
    %v1454 = vsel %vm1321, %v1452, %v1453
    %v1455 = vrot.slane %v85, 5
    %v1456 = vrot.slane %v1455, 4
    %v1457 = vrot.slane %v86, 5
    %v1458 = vsel %vm1321, %v1456, %v1457
    %v1459 = vrot.slane %v1457, 4
    %v1460 = vrot.slane %v87, 5
    %v1461 = vsel %vm1321, %v1459, %v1460
    %v1462 = vrot.slane %v88, 5
    %v1463 = vrot.slane %v1462, 4
    %v1464 = vrot.slane %v89, 5
    %v1465 = vsel %vm1321, %v1463, %v1464
    %v1466 = vrot.slane %v1464, 4
    %v1467 = vrot.slane %v90, 5
    %v1468 = vsel %vm1321, %v1466, %v1467
    %v1469 = vrot.slane %v91, 5
    %v1470 = vrot.slane %v1469, 4
    %v1471 = vrot.slane %v92, 5
    %v1472 = vsel %vm1321, %v1470, %v1471
    %v1473 = vrot.slane %v1471, 4
    %v1474 = vrot.slane %v93, 5
    %v1475 = vsel %vm1321, %v1473, %v1474
    %v1476 = vrot.slane %v94, 5
    %v1477 = vrot.slane %v1476, 4
    %v1478 = vrot.slane %v95, 5
    %v1479 = vsel %vm1321, %v1477, %v1478
    %v1480 = vrot.slane %v1478, 4
    %v1481 = vrot.slane %v96, 5
    %v1482 = vsel %vm1321, %v1480, %v1481
    %v1483 = vrot.slane %v97, 5
    %v1484 = vrot.slane %v1483, 4
    %v1485 = vrot.slane %v98, 5
    %v1486 = vsel %vm1321, %v1484, %v1485
    %v1487 = vrot.slane %v1485, 4
    %v1488 = vrot.slane %v99, 5
    %v1489 = vsel %vm1321, %v1487, %v1488
    %v1490 = vrot.slane %v100, 5
    %v1491 = vrot.slane %v1490, 4
    %v1492 = vrot.slane %v101, 5
    %v1493 = vsel %vm1321, %v1491, %v1492
    %v1494 = vrot.slane %v1492, 4
    %v1495 = vrot.slane %v102, 5
    %v1496 = vsel %vm1321, %v1494, %v1495
    %v1497 = vrot.slane %v103, 5
    %v1498 = vrot.slane %v1497, 4
    %v1499 = vrot.slane %v104, 5
    %v1500 = vsel %vm1321, %v1498, %v1499
    %v1501 = vrot.slane %v1499, 4
    %v1502 = vrot.slane %v105, 5
    %v1503 = vsel %vm1321, %v1501, %v1502
    %v1504 = vrot.slane %v106, 5
    %v1505 = vrot.slane %v1504, 4
    %v1506 = vrot.slane %v107, 5
    %v1507 = vsel %vm1321, %v1505, %v1506
    %v1508 = vrot.slane %v1506, 4
    %v1509 = vrot.slane %v108, 5
    %v1510 = vsel %vm1321, %v1508, %v1509
    %v1511 = vrot.slane %v109, 5
    %v1512 = vrot.slane %v1511, 4
    %v1513 = vrot.slane %v110, 5
    %v1514 = vsel %vm1321, %v1512, %v1513
    %v1515 = vrot.slane %v1513, 4
    %v1516 = vrot.slane %v111, 5
    %v1517 = vsel %vm1321, %v1515, %v1516
    %v1518 = vrot.slane %v112, 5
    %v1519 = vrot.slane %v1518, 4
    %v1520 = vrot.slane %v113, 5
    %v1521 = vsel %vm1321, %v1519, %v1520
    %v1522 = vrot.slane %v1520, 4
    %v1523 = vrot.slane %v114, 5
    %v1524 = vsel %vm1321, %v1522, %v1523
    %v1525 = vrot.slane %v115, 5
    %v1526 = vrot.slane %v1525, 4
    %v1527 = vrot.slane %v116, 5
    %v1528 = vsel %vm1321, %v1526, %v1527
    %v1529 = vrot.slane %v1527, 4
    %v1530 = vrot.slane %v117, 5
    %v1531 = vsel %vm1321, %v1529, %v1530
    %v1532 = vrot.slane %v118, 5
    %v1533 = vrot.slane %v1532, 4
    %v1534 = vrot.slane %v119, 5
    %v1535 = vsel %vm1321, %v1533, %v1534
    %v1536 = vrot.slane %v1534, 4
    %v1537 = vrot.slane %v120, 5
    %v1538 = vsel %vm1321, %v1536, %v1537
    %v1539 = vrot.slane %v121, 5
    %v1540 = vrot.slane %v1539, 4
    %v1541 = vrot.slane %v122, 5
    %v1542 = vsel %vm1321, %v1540, %v1541
    %v1543 = vrot.slane %v1541, 4
    %v1544 = vrot.slane %v123, 5
    %v1545 = vsel %vm1321, %v1543, %v1544
    %1546 = vrot.lane.b32.xlu0 %v1325, 8
    %v1547 = vpop.permute.xlu0 %1546
    %1548 = vrot.lane.b32.xlu0 %v1328, 8
    %v1549 = vpop.permute.xlu0 %1548
    %1550 = vrot.lane.b32.xlu0 %v1332, 8
    %v1551 = vpop.permute.xlu0 %1550
    %1552 = vrot.lane.b32.xlu0 %v1335, 8
    %v1553 = vpop.permute.xlu0 %1552
    %1554 = vrot.lane.b32.xlu0 %v1339, 8
    %v1555 = vpop.permute.xlu0 %1554
    %1556 = vrot.lane.b32.xlu0 %v1342, 8
    %v1557 = vpop.permute.xlu0 %1556
    %1558 = vrot.lane.b32.xlu0 %v1346, 8
    %v1559 = vpop.permute.xlu0 %1558
    %1560 = vrot.lane.b32.xlu0 %v1349, 8
    %v1561 = vpop.permute.xlu0 %1560
    %1562 = vrot.lane.b32.xlu0 %v1353, 8
    %v1563 = vpop.permute.xlu0 %1562
    %1564 = vrot.lane.b32.xlu0 %v1356, 8
    %v1565 = vpop.permute.xlu0 %1564
    %1566 = vrot.lane.b32.xlu0 %v1360, 8
    %v1567 = vpop.permute.xlu0 %1566
    %1568 = vrot.lane.b32.xlu0 %v1363, 8
    %v1569 = vpop.permute.xlu0 %1568
    %1570 = vrot.lane.b32.xlu0 %v1367, 8
    %v1571 = vpop.permute.xlu0 %1570
    %1572 = vrot.lane.b32.xlu0 %v1370, 8
    %v1573 = vpop.permute.xlu0 %1572
    %1574 = vrot.lane.b32.xlu0 %v1374, 8
    %v1575 = vpop.permute.xlu0 %1574
    %1576 = vrot.lane.b32.xlu0 %v1377, 8
    %v1577 = vpop.permute.xlu0 %1576
    %1578 = vrot.lane.b32.xlu0 %v1381, 8
    %v1579 = vpop.permute.xlu0 %1578
    %1580 = vrot.lane.b32.xlu0 %v1384, 8
    %v1581 = vpop.permute.xlu0 %1580
    %1582 = vrot.lane.b32.xlu0 %v1388, 8
    %v1583 = vpop.permute.xlu0 %1582
    %1584 = vrot.lane.b32.xlu0 %v1391, 8
    %v1585 = vpop.permute.xlu0 %1584
    %1586 = vrot.lane.b32.xlu0 %v1395, 8
    %v1587 = vpop.permute.xlu0 %1586
    %1588 = vrot.lane.b32.xlu0 %v1398, 8
    %v1589 = vpop.permute.xlu0 %1588
    %1590 = vrot.lane.b32.xlu0 %v1402, 8
    %v1591 = vpop.permute.xlu0 %1590
    %1592 = vrot.lane.b32.xlu0 %v1405, 8
    %v1593 = vpop.permute.xlu0 %1592
    %1594 = vrot.lane.b32.xlu0 %v1409, 8
    %v1595 = vpop.permute.xlu0 %1594
    %1596 = vrot.lane.b32.xlu0 %v1412, 8
    %v1597 = vpop.permute.xlu0 %1596
    %1598 = vrot.lane.b32.xlu0 %v1416, 8
    %v1599 = vpop.permute.xlu0 %1598
    %1600 = vrot.lane.b32.xlu0 %v1419, 8
    %v1601 = vpop.permute.xlu0 %1600
    %1602 = vrot.lane.b32.xlu0 %v1423, 8
    %v1603 = vpop.permute.xlu0 %1602
    %1604 = vrot.lane.b32.xlu0 %v1426, 8
    %v1605 = vpop.permute.xlu0 %1604
    %1606 = vrot.lane.b32.xlu0 %v1430, 8
    %v1607 = vpop.permute.xlu0 %1606
    %1608 = vrot.lane.b32.xlu0 %v1433, 8
    %v1609 = vpop.permute.xlu0 %1608
    %1610 = vrot.lane.b32.xlu0 %v1437, 8
    %v1611 = vpop.permute.xlu0 %1610
    %1612 = vrot.lane.b32.xlu0 %v1440, 8
    %v1613 = vpop.permute.xlu0 %1612
    %1614 = vrot.lane.b32.xlu0 %v1444, 8
    %v1615 = vpop.permute.xlu0 %1614
    %1616 = vrot.lane.b32.xlu0 %v1447, 8
    %v1617 = vpop.permute.xlu0 %1616
    %1618 = vrot.lane.b32.xlu0 %v1451, 8
    %v1619 = vpop.permute.xlu0 %1618
    %1620 = vrot.lane.b32.xlu0 %v1454, 8
    %v1621 = vpop.permute.xlu0 %1620
    %1622 = vrot.lane.b32.xlu0 %v1458, 8
    %v1623 = vpop.permute.xlu0 %1622
    %1624 = vrot.lane.b32.xlu0 %v1461, 8
    %v1625 = vpop.permute.xlu0 %1624
    %1626 = vrot.lane.b32.xlu0 %v1465, 8
    %v1627 = vpop.permute.xlu0 %1626
    %1628 = vrot.lane.b32.xlu0 %v1468, 8
    %v1629 = vpop.permute.xlu0 %1628
    %1630 = vrot.lane.b32.xlu0 %v1472, 8
    %v1631 = vpop.permute.xlu0 %1630
    %1632 = vrot.lane.b32.xlu0 %v1475, 8
    %v1633 = vpop.permute.xlu0 %1632
    %1634 = vrot.lane.b32.xlu0 %v1479, 8
    %v1635 = vpop.permute.xlu0 %1634
    %1636 = vrot.lane.b32.xlu0 %v1482, 8
    %v1637 = vpop.permute.xlu0 %1636
    %1638 = vrot.lane.b32.xlu0 %v1486, 8
    %v1639 = vpop.permute.xlu0 %1638
    %1640 = vrot.lane.b32.xlu0 %v1489, 8
    %v1641 = vpop.permute.xlu0 %1640
    %1642 = vrot.lane.b32.xlu0 %v1493, 8
    %v1643 = vpop.permute.xlu0 %1642
    %1644 = vrot.lane.b32.xlu0 %v1496, 8
    %v1645 = vpop.permute.xlu0 %1644
    %1646 = vrot.lane.b32.xlu0 %v1500, 8
    %v1647 = vpop.permute.xlu0 %1646
    %1648 = vrot.lane.b32.xlu0 %v1503, 8
    %v1649 = vpop.permute.xlu0 %1648
    %1650 = vrot.lane.b32.xlu0 %v1507, 8
    %v1651 = vpop.permute.xlu0 %1650
    %1652 = vrot.lane.b32.xlu0 %v1510, 8
    %v1653 = vpop.permute.xlu0 %1652
    %1654 = vrot.lane.b32.xlu0 %v1514, 8
    %v1655 = vpop.permute.xlu0 %1654
    %1656 = vrot.lane.b32.xlu0 %v1517, 8
    %v1657 = vpop.permute.xlu0 %1656
    %1658 = vrot.lane.b32.xlu0 %v1521, 8
    %v1659 = vpop.permute.xlu0 %1658
    %1660 = vrot.lane.b32.xlu0 %v1524, 8
    %v1661 = vpop.permute.xlu0 %1660
    %1662 = vrot.lane.b32.xlu0 %v1528, 8
    %v1663 = vpop.permute.xlu0 %1662
    %1664 = vrot.lane.b32.xlu0 %v1531, 8
    %v1665 = vpop.permute.xlu0 %1664
    %1666 = vrot.lane.b32.xlu0 %v1535, 8
    %v1667 = vpop.permute.xlu0 %1666
    %1668 = vrot.lane.b32.xlu0 %v1538, 8
    %v1669 = vpop.permute.xlu0 %1668
    %1670 = vrot.lane.b32.xlu0 %v1542, 8
    %v1671 = vpop.permute.xlu0 %1670
    %1672 = vrot.lane.b32.xlu0 %v1545, 8
    %v1673 = vpop.permute.xlu0 %1672
    %vm1738 = vcmask 93248
    %1739 = vst.msk [vmem:[#allocation2] sm:$0xf] %vm1738, %v1547
    %1740 = vst.msk [vmem:[#allocation2 + $0x4] sm:$0xf] %vm1738, %v1549
    %1741 = vst.msk [vmem:[#allocation2 + $0x8] sm:$0xf] %vm1738, %v1551
    %1742 = vst.msk [vmem:[#allocation2 + $0xc] sm:$0xf] %vm1738, %v1553
    %1743 = vst.msk [vmem:[#allocation2 + $0x10] sm:$0xf] %vm1738, %v1555
    %1744 = vst.msk [vmem:[#allocation2 + $0x14] sm:$0xf] %vm1738, %v1557
    %1745 = vst.msk [vmem:[#allocation2 + $0x18] sm:$0xf] %vm1738, %v1559
    %1746 = vst.msk [vmem:[#allocation2 + $0x1c] sm:$0xf] %vm1738, %v1561
    %1747 = vst.msk [vmem:[#allocation2 + $0x20] sm:$0xf] %vm1738, %v1563
    %1748 = vst.msk [vmem:[#allocation2 + $0x24] sm:$0xf] %vm1738, %v1565
    %1749 = vst.msk [vmem:[#allocation2 + $0x28] sm:$0xf] %vm1738, %v1567
    %1750 = vst.msk [vmem:[#allocation2 + $0x2c] sm:$0xf] %vm1738, %v1569
    %1751 = vst.msk [vmem:[#allocation2 + $0x30] sm:$0xf] %vm1738, %v1571
    %1752 = vst.msk [vmem:[#allocation2 + $0x34] sm:$0xf] %vm1738, %v1573
    %1753 = vst.msk [vmem:[#allocation2 + $0x38] sm:$0xf] %vm1738, %v1575
    %1754 = vst.msk [vmem:[#allocation2 + $0x3c] sm:$0xf] %vm1738, %v1577
    %1755 = vst.msk [vmem:[#allocation2 + $0x40] sm:$0xf] %vm1738, %v1579
    %1756 = vst.msk [vmem:[#allocation2 + $0x44] sm:$0xf] %vm1738, %v1581
    %1757 = vst.msk [vmem:[#allocation2 + $0x48] sm:$0xf] %vm1738, %v1583
    %1758 = vst.msk [vmem:[#allocation2 + $0x4c] sm:$0xf] %vm1738, %v1585
    %1759 = vst.msk [vmem:[#allocation2 + $0x50] sm:$0xf] %vm1738, %v1587
    %1760 = vst.msk [vmem:[#allocation2 + $0x54] sm:$0xf] %vm1738, %v1589
    %1761 = vst.msk [vmem:[#allocation2 + $0x58] sm:$0xf] %vm1738, %v1591
    %1762 = vst.msk [vmem:[#allocation2 + $0x5c] sm:$0xf] %vm1738, %v1593
    %1763 = vst.msk [vmem:[#allocation2 + $0x60] sm:$0xf] %vm1738, %v1595
    %1764 = vst.msk [vmem:[#allocation2 + $0x64] sm:$0xf] %vm1738, %v1597
    %1765 = vst.msk [vmem:[#allocation2 + $0x68] sm:$0xf] %vm1738, %v1599
    %1766 = vst.msk [vmem:[#allocation2 + $0x6c] sm:$0xf] %vm1738, %v1601
    %1767 = vst.msk [vmem:[#allocation2 + $0x70] sm:$0xf] %vm1738, %v1603
    %1768 = vst.msk [vmem:[#allocation2 + $0x74] sm:$0xf] %vm1738, %v1605
    %1769 = vst.msk [vmem:[#allocation2 + $0x78] sm:$0xf] %vm1738, %v1607
    %1770 = vst.msk [vmem:[#allocation2 + $0x7c] sm:$0xf] %vm1738, %v1609
    %1771 = vst.msk [vmem:[#allocation2 + $0x80] sm:$0xf] %vm1738, %v1611
    %1772 = vst.msk [vmem:[#allocation2 + $0x84] sm:$0xf] %vm1738, %v1613
    %1773 = vst.msk [vmem:[#allocation2 + $0x88] sm:$0xf] %vm1738, %v1615
    %1774 = vst.msk [vmem:[#allocation2 + $0x8c] sm:$0xf] %vm1738, %v1617
    %1775 = vst.msk [vmem:[#allocation2 + $0x90] sm:$0xf] %vm1738, %v1619
    %1776 = vst.msk [vmem:[#allocation2 + $0x94] sm:$0xf] %vm1738, %v1621
    %1777 = vst.msk [vmem:[#allocation2 + $0x98] sm:$0xf] %vm1738, %v1623
    %1778 = vst.msk [vmem:[#allocation2 + $0x9c] sm:$0xf] %vm1738, %v1625
    %1779 = vst.msk [vmem:[#allocation2 + $0xa0] sm:$0xf] %vm1738, %v1627
    %1780 = vst.msk [vmem:[#allocation2 + $0xa4] sm:$0xf] %vm1738, %v1629
    %1781 = vst.msk [vmem:[#allocation2 + $0xa8] sm:$0xf] %vm1738, %v1631
    %1782 = vst.msk [vmem:[#allocation2 + $0xac] sm:$0xf] %vm1738, %v1633
    %1783 = vst.msk [vmem:[#allocation2 + $0xb0] sm:$0xf] %vm1738, %v1635
    %1784 = vst.msk [vmem:[#allocation2 + $0xb4] sm:$0xf] %vm1738, %v1637
    %1785 = vst.msk [vmem:[#allocation2 + $0xb8] sm:$0xf] %vm1738, %v1639
    %1786 = vst.msk [vmem:[#allocation2 + $0xbc] sm:$0xf] %vm1738, %v1641
    %1787 = vst.msk [vmem:[#allocation2 + $0xc0] sm:$0xf] %vm1738, %v1643
    %1788 = vst.msk [vmem:[#allocation2 + $0xc4] sm:$0xf] %vm1738, %v1645
    %1789 = vst.msk [vmem:[#allocation2 + $0xc8] sm:$0xf] %vm1738, %v1647
    %1790 = vst.msk [vmem:[#allocation2 + $0xcc] sm:$0xf] %vm1738, %v1649
    %1791 = vst.msk [vmem:[#allocation2 + $0xd0] sm:$0xf] %vm1738, %v1651
    %1792 = vst.msk [vmem:[#allocation2 + $0xd4] sm:$0xf] %vm1738, %v1653
    %1793 = vst.msk [vmem:[#allocation2 + $0xd8] sm:$0xf] %vm1738, %v1655
    %1794 = vst.msk [vmem:[#allocation2 + $0xdc] sm:$0xf] %vm1738, %v1657
    %1795 = vst.msk [vmem:[#allocation2 + $0xe0] sm:$0xf] %vm1738, %v1659
    %1796 = vst.msk [vmem:[#allocation2 + $0xe4] sm:$0xf] %vm1738, %v1661
    %1797 = vst.msk [vmem:[#allocation2 + $0xe8] sm:$0xf] %vm1738, %v1663
    %1798 = vst.msk [vmem:[#allocation2 + $0xec] sm:$0xf] %vm1738, %v1665
    %1799 = vst.msk [vmem:[#allocation2 + $0xf0] sm:$0xf] %vm1738, %v1667
    %1800 = vst.msk [vmem:[#allocation2 + $0xf4] sm:$0xf] %vm1738, %v1669
    %1801 = vst.msk [vmem:[#allocation2 + $0xf8] sm:$0xf] %vm1738, %v1671
    %1802 = vst.msk [vmem:[#allocation2 + $0xfc] sm:$0xf] %vm1738, %v1673
    %1807 = vrot.lane.b32.xlu0 %v25, 12
    %v1808 = vpop.permute.xlu0 %1807
    %1809 = vrot.lane.b32.xlu0 %v26, 12
    %v1810 = vpop.permute.xlu0 %1809
    %1811 = vrot.lane.b32.xlu0 %v28, 12
    %v1812 = vpop.permute.xlu0 %1811
    %1813 = vrot.lane.b32.xlu0 %v29, 12
    %v1814 = vpop.permute.xlu0 %1813
    %1815 = vrot.lane.b32.xlu0 %v31, 12
    %v1816 = vpop.permute.xlu0 %1815
    %1817 = vrot.lane.b32.xlu0 %v32, 12
    %v1818 = vpop.permute.xlu0 %1817
    %1819 = vrot.lane.b32.xlu0 %v34, 12
    %v1820 = vpop.permute.xlu0 %1819
    %1821 = vrot.lane.b32.xlu0 %v35, 12
    %v1822 = vpop.permute.xlu0 %1821
    %1823 = vrot.lane.b32.xlu0 %v37, 12
    %v1824 = vpop.permute.xlu0 %1823
    %1825 = vrot.lane.b32.xlu0 %v38, 12
    %v1826 = vpop.permute.xlu0 %1825
    %1827 = vrot.lane.b32.xlu0 %v40, 12
    %v1828 = vpop.permute.xlu0 %1827
    %1829 = vrot.lane.b32.xlu0 %v41, 12
    %v1830 = vpop.permute.xlu0 %1829
    %1831 = vrot.lane.b32.xlu0 %v43, 12
    %v1832 = vpop.permute.xlu0 %1831
    %1833 = vrot.lane.b32.xlu0 %v44, 12
    %v1834 = vpop.permute.xlu0 %1833
    %1835 = vrot.lane.b32.xlu0 %v46, 12
    %v1836 = vpop.permute.xlu0 %1835
    %1837 = vrot.lane.b32.xlu0 %v47, 12
    %v1838 = vpop.permute.xlu0 %1837
    %1839 = vrot.lane.b32.xlu0 %v49, 12
    %v1840 = vpop.permute.xlu0 %1839
    %1841 = vrot.lane.b32.xlu0 %v50, 12
    %v1842 = vpop.permute.xlu0 %1841
    %1843 = vrot.lane.b32.xlu0 %v52, 12
    %v1844 = vpop.permute.xlu0 %1843
    %1845 = vrot.lane.b32.xlu0 %v53, 12
    %v1846 = vpop.permute.xlu0 %1845
    %1847 = vrot.lane.b32.xlu0 %v55, 12
    %v1848 = vpop.permute.xlu0 %1847
    %1849 = vrot.lane.b32.xlu0 %v56, 12
    %v1850 = vpop.permute.xlu0 %1849
    %1851 = vrot.lane.b32.xlu0 %v58, 12
    %v1852 = vpop.permute.xlu0 %1851
    %1853 = vrot.lane.b32.xlu0 %v59, 12
    %v1854 = vpop.permute.xlu0 %1853
    %1855 = vrot.lane.b32.xlu0 %v61, 12
    %v1856 = vpop.permute.xlu0 %1855
    %1857 = vrot.lane.b32.xlu0 %v62, 12
    %v1858 = vpop.permute.xlu0 %1857
    %1859 = vrot.lane.b32.xlu0 %v64, 12
    %v1860 = vpop.permute.xlu0 %1859
    %1861 = vrot.lane.b32.xlu0 %v65, 12
    %v1862 = vpop.permute.xlu0 %1861
    %1863 = vrot.lane.b32.xlu0 %v67, 12
    %v1864 = vpop.permute.xlu0 %1863
    %1865 = vrot.lane.b32.xlu0 %v68, 12
    %v1866 = vpop.permute.xlu0 %1865
    %1867 = vrot.lane.b32.xlu0 %v70, 12
    %v1868 = vpop.permute.xlu0 %1867
    %1869 = vrot.lane.b32.xlu0 %v71, 12
    %v1870 = vpop.permute.xlu0 %1869
    %1871 = vrot.lane.b32.xlu0 %v79, 12
    %v1872 = vpop.permute.xlu0 %1871
    %1873 = vrot.lane.b32.xlu0 %v80, 12
    %v1874 = vpop.permute.xlu0 %1873
    %1875 = vrot.lane.b32.xlu0 %v82, 12
    %v1876 = vpop.permute.xlu0 %1875
    %1877 = vrot.lane.b32.xlu0 %v83, 12
    %v1878 = vpop.permute.xlu0 %1877
    %1879 = vrot.lane.b32.xlu0 %v85, 12
    %v1880 = vpop.permute.xlu0 %1879
    %1881 = vrot.lane.b32.xlu0 %v86, 12
    %v1882 = vpop.permute.xlu0 %1881
    %1883 = vrot.lane.b32.xlu0 %v88, 12
    %v1884 = vpop.permute.xlu0 %1883
    %1885 = vrot.lane.b32.xlu0 %v89, 12
    %v1886 = vpop.permute.xlu0 %1885
    %1887 = vrot.lane.b32.xlu0 %v91, 12
    %v1888 = vpop.permute.xlu0 %1887
    %1889 = vrot.lane.b32.xlu0 %v92, 12
    %v1890 = vpop.permute.xlu0 %1889
    %1891 = vrot.lane.b32.xlu0 %v94, 12
    %v1892 = vpop.permute.xlu0 %1891
    %1893 = vrot.lane.b32.xlu0 %v95, 12
    %v1894 = vpop.permute.xlu0 %1893
    %1895 = vrot.lane.b32.xlu0 %v97, 12
    %v1896 = vpop.permute.xlu0 %1895
    %1897 = vrot.lane.b32.xlu0 %v98, 12
    %v1898 = vpop.permute.xlu0 %1897
    %1899 = vrot.lane.b32.xlu0 %v100, 12
    %v1900 = vpop.permute.xlu0 %1899
    %1901 = vrot.lane.b32.xlu0 %v101, 12
    %v1902 = vpop.permute.xlu0 %1901
    %1903 = vrot.lane.b32.xlu0 %v103, 12
    %v1904 = vpop.permute.xlu0 %1903
    %1905 = vrot.lane.b32.xlu0 %v104, 12
    %v1906 = vpop.permute.xlu0 %1905
    %1907 = vrot.lane.b32.xlu0 %v106, 12
    %v1908 = vpop.permute.xlu0 %1907
    %1909 = vrot.lane.b32.xlu0 %v107, 12
    %v1910 = vpop.permute.xlu0 %1909
    %1911 = vrot.lane.b32.xlu0 %v109, 12
    %v1912 = vpop.permute.xlu0 %1911
    %1913 = vrot.lane.b32.xlu0 %v110, 12
    %v1914 = vpop.permute.xlu0 %1913
    %1915 = vrot.lane.b32.xlu0 %v112, 12
    %v1916 = vpop.permute.xlu0 %1915
    %1917 = vrot.lane.b32.xlu0 %v113, 12
    %v1918 = vpop.permute.xlu0 %1917
    %1919 = vrot.lane.b32.xlu0 %v115, 12
    %v1920 = vpop.permute.xlu0 %1919
    %1921 = vrot.lane.b32.xlu0 %v116, 12
    %v1922 = vpop.permute.xlu0 %1921
    %1923 = vrot.lane.b32.xlu0 %v118, 12
    %v1924 = vpop.permute.xlu0 %1923
    %1925 = vrot.lane.b32.xlu0 %v119, 12
    %v1926 = vpop.permute.xlu0 %1925
    %1927 = vrot.lane.b32.xlu0 %v121, 12
    %v1928 = vpop.permute.xlu0 %1927
    %1929 = vrot.lane.b32.xlu0 %v122, 12
    %v1930 = vpop.permute.xlu0 %1929
    %1931 = vrot.lane.b32.xlu0 %v124, 12
    %v1932 = vpop.permute.xlu0 %1931
    %1933 = vrot.lane.b32.xlu0 %v125, 12
    %v1934 = vpop.permute.xlu0 %1933
    %vm1999 = vcmask 126048
    %2000 = vst.msk [vmem:[#allocation2] sm:$0xf] %vm1999, %v1808
    %2001 = vst.msk [vmem:[#allocation2 + $0x4] sm:$0xf] %vm1999, %v1810
    %2002 = vst.msk [vmem:[#allocation2 + $0x8] sm:$0xf] %vm1999, %v1812
    %2003 = vst.msk [vmem:[#allocation2 + $0xc] sm:$0xf] %vm1999, %v1814
    %2004 = vst.msk [vmem:[#allocation2 + $0x10] sm:$0xf] %vm1999, %v1816
    %2005 = vst.msk [vmem:[#allocation2 + $0x14] sm:$0xf] %vm1999, %v1818
    %2006 = vst.msk [vmem:[#allocation2 + $0x18] sm:$0xf] %vm1999, %v1820
    %2007 = vst.msk [vmem:[#allocation2 + $0x1c] sm:$0xf] %vm1999, %v1822
    %2008 = vst.msk [vmem:[#allocation2 + $0x20] sm:$0xf] %vm1999, %v1824
    %2009 = vst.msk [vmem:[#allocation2 + $0x24] sm:$0xf] %vm1999, %v1826
    %2010 = vst.msk [vmem:[#allocation2 + $0x28] sm:$0xf] %vm1999, %v1828
    %2011 = vst.msk [vmem:[#allocation2 + $0x2c] sm:$0xf] %vm1999, %v1830
    %2012 = vst.msk [vmem:[#allocation2 + $0x30] sm:$0xf] %vm1999, %v1832
    %2013 = vst.msk [vmem:[#allocation2 + $0x34] sm:$0xf] %vm1999, %v1834
    %2014 = vst.msk [vmem:[#allocation2 + $0x38] sm:$0xf] %vm1999, %v1836
    %2015 = vst.msk [vmem:[#allocation2 + $0x3c] sm:$0xf] %vm1999, %v1838
    %2016 = vst.msk [vmem:[#allocation2 + $0x40] sm:$0xf] %vm1999, %v1840
    %2017 = vst.msk [vmem:[#allocation2 + $0x44] sm:$0xf] %vm1999, %v1842
    %2018 = vst.msk [vmem:[#allocation2 + $0x48] sm:$0xf] %vm1999, %v1844
    %2019 = vst.msk [vmem:[#allocation2 + $0x4c] sm:$0xf] %vm1999, %v1846
    %2020 = vst.msk [vmem:[#allocation2 + $0x50] sm:$0xf] %vm1999, %v1848
    %2021 = vst.msk [vmem:[#allocation2 + $0x54] sm:$0xf] %vm1999, %v1850
    %2022 = vst.msk [vmem:[#allocation2 + $0x58] sm:$0xf] %vm1999, %v1852
    %2023 = vst.msk [vmem:[#allocation2 + $0x5c] sm:$0xf] %vm1999, %v1854
    %2024 = vst.msk [vmem:[#allocation2 + $0x60] sm:$0xf] %vm1999, %v1856
    %2025 = vst.msk [vmem:[#allocation2 + $0x64] sm:$0xf] %vm1999, %v1858
    %2026 = vst.msk [vmem:[#allocation2 + $0x68] sm:$0xf] %vm1999, %v1860
    %2027 = vst.msk [vmem:[#allocation2 + $0x6c] sm:$0xf] %vm1999, %v1862
    %2028 = vst.msk [vmem:[#allocation2 + $0x70] sm:$0xf] %vm1999, %v1864
    %2029 = vst.msk [vmem:[#allocation2 + $0x74] sm:$0xf] %vm1999, %v1866
    %2030 = vst.msk [vmem:[#allocation2 + $0x78] sm:$0xf] %vm1999, %v1868
    %2031 = vst.msk [vmem:[#allocation2 + $0x7c] sm:$0xf] %vm1999, %v1870
    %2032 = vst.msk [vmem:[#allocation2 + $0x80] sm:$0xf] %vm1999, %v1872
    %2033 = vst.msk [vmem:[#allocation2 + $0x84] sm:$0xf] %vm1999, %v1874
    %2034 = vst.msk [vmem:[#allocation2 + $0x88] sm:$0xf] %vm1999, %v1876
    %2035 = vst.msk [vmem:[#allocation2 + $0x8c] sm:$0xf] %vm1999, %v1878
    %2036 = vst.msk [vmem:[#allocation2 + $0x90] sm:$0xf] %vm1999, %v1880
    %2037 = vst.msk [vmem:[#allocation2 + $0x94] sm:$0xf] %vm1999, %v1882
    %2038 = vst.msk [vmem:[#allocation2 + $0x98] sm:$0xf] %vm1999, %v1884
    %2039 = vst.msk [vmem:[#allocation2 + $0x9c] sm:$0xf] %vm1999, %v1886
    %2040 = vst.msk [vmem:[#allocation2 + $0xa0] sm:$0xf] %vm1999, %v1888
    %2041 = vst.msk [vmem:[#allocation2 + $0xa4] sm:$0xf] %vm1999, %v1890
    %2042 = vst.msk [vmem:[#allocation2 + $0xa8] sm:$0xf] %vm1999, %v1892
    %2043 = vst.msk [vmem:[#allocation2 + $0xac] sm:$0xf] %vm1999, %v1894
    %2044 = vst.msk [vmem:[#allocation2 + $0xb0] sm:$0xf] %vm1999, %v1896
    %2045 = vst.msk [vmem:[#allocation2 + $0xb4] sm:$0xf] %vm1999, %v1898
    %2046 = vst.msk [vmem:[#allocation2 + $0xb8] sm:$0xf] %vm1999, %v1900
    %2047 = vst.msk [vmem:[#allocation2 + $0xbc] sm:$0xf] %vm1999, %v1902
    %2048 = vst.msk [vmem:[#allocation2 + $0xc0] sm:$0xf] %vm1999, %v1904
    %2049 = vst.msk [vmem:[#allocation2 + $0xc4] sm:$0xf] %vm1999, %v1906
    %2050 = vst.msk [vmem:[#allocation2 + $0xc8] sm:$0xf] %vm1999, %v1908
    %2051 = vst.msk [vmem:[#allocation2 + $0xcc] sm:$0xf] %vm1999, %v1910
    %2052 = vst.msk [vmem:[#allocation2 + $0xd0] sm:$0xf] %vm1999, %v1912
    %2053 = vst.msk [vmem:[#allocation2 + $0xd4] sm:$0xf] %vm1999, %v1914
    %2054 = vst.msk [vmem:[#allocation2 + $0xd8] sm:$0xf] %vm1999, %v1916
    %2055 = vst.msk [vmem:[#allocation2 + $0xdc] sm:$0xf] %vm1999, %v1918
    %2056 = vst.msk [vmem:[#allocation2 + $0xe0] sm:$0xf] %vm1999, %v1920
    %2057 = vst.msk [vmem:[#allocation2 + $0xe4] sm:$0xf] %vm1999, %v1922
    %2058 = vst.msk [vmem:[#allocation2 + $0xe8] sm:$0xf] %vm1999, %v1924
    %2059 = vst.msk [vmem:[#allocation2 + $0xec] sm:$0xf] %vm1999, %v1926
    %2060 = vst.msk [vmem:[#allocation2 + $0xf0] sm:$0xf] %vm1999, %v1928
    %2061 = vst.msk [vmem:[#allocation2 + $0xf4] sm:$0xf] %vm1999, %v1930
    %2062 = vst.msk [vmem:[#allocation2 + $0xf8] sm:$0xf] %vm1999, %v1932
    %2063 = vst.msk [vmem:[#allocation2 + $0xfc] sm:$0xf] %vm1999, %v1934
    %v2065 = vshrl.u32 %v70, 16
    %v2067 = vrot.slane %v2065, 4
    %v2068 = vshll.u32 %v70, 16
    %v2070 = vrot.slane %v2068, 5
    %v2071 = vor.u32 %v2067, %v2070
    %v2072 = vrot.slane %v2071, 4
    %v2074 = vshll.u32 %v71, 16
    %v2076 = vrot.slane %v2074, 5
    %v2077 = vsel %vm197, %v2072, %v2076
    %v2078 = vshrl.u32 %v71, 16
    %v2080 = vrot.slane %v2078, 4
    %v2081 = vor.u32 %v2080, %v2076
    %v2082 = vrot.slane %v2081, 4
    %v2084 = vshll.u32 %v72, 16
    %v2086 = vrot.slane %v2084, 5
    %v2087 = vsel %vm197, %v2082, %v2086
    %v2089 = vshrl.u32 %v124, 16
    %v2091 = vrot.slane %v2089, 4
    %v2092 = vshll.u32 %v124, 16
    %v2094 = vrot.slane %v2092, 5
    %v2095 = vor.u32 %v2091, %v2094
    %v2096 = vrot.slane %v2095, 4
    %v2098 = vshll.u32 %v125, 16
    %v2100 = vrot.slane %v2098, 5
    %v2101 = vsel %vm197, %v2096, %v2100
    %v2102 = vshrl.u32 %v125, 16
    %v2104 = vrot.slane %v2102, 4
    %v2105 = vor.u32 %v2104, %v2100
    %v2106 = vrot.slane %v2105, 4
    %v2108 = vshll.u32 %v126, 16
    %v2110 = vrot.slane %v2108, 5
    %v2111 = vsel %vm197, %v2106, %v2110
    %2112 = vrot.lane.b32.xlu0 %v235, 16
    %v2113 = vpop.permute.xlu0 %2112
    %2114 = vrot.lane.b32.xlu0 %v245, 16
    %v2115 = vpop.permute.xlu0 %2114
    %2116 = vrot.lane.b32.xlu0 %v259, 16
    %v2117 = vpop.permute.xlu0 %2116
    %2118 = vrot.lane.b32.xlu0 %v269, 16
    %v2119 = vpop.permute.xlu0 %2118
    %2120 = vrot.lane.b32.xlu0 %v283, 16
    %v2121 = vpop.permute.xlu0 %2120
    %2122 = vrot.lane.b32.xlu0 %v293, 16
    %v2123 = vpop.permute.xlu0 %2122
    %2124 = vrot.lane.b32.xlu0 %v307, 16
    %v2125 = vpop.permute.xlu0 %2124
    %2126 = vrot.lane.b32.xlu0 %v317, 16
    %v2127 = vpop.permute.xlu0 %2126
    %2128 = vrot.lane.b32.xlu0 %v331, 16
    %v2129 = vpop.permute.xlu0 %2128
    %2130 = vrot.lane.b32.xlu0 %v341, 16
    %v2131 = vpop.permute.xlu0 %2130
    %2132 = vrot.lane.b32.xlu0 %v355, 16
    %v2133 = vpop.permute.xlu0 %2132
    %2134 = vrot.lane.b32.xlu0 %v365, 16
    %v2135 = vpop.permute.xlu0 %2134
    %2136 = vrot.lane.b32.xlu0 %v379, 16
    %v2137 = vpop.permute.xlu0 %2136
    %2138 = vrot.lane.b32.xlu0 %v389, 16
    %v2139 = vpop.permute.xlu0 %2138
    %2140 = vrot.lane.b32.xlu0 %v403, 16
    %v2141 = vpop.permute.xlu0 %2140
    %2142 = vrot.lane.b32.xlu0 %v413, 16
    %v2143 = vpop.permute.xlu0 %2142
    %2144 = vrot.lane.b32.xlu0 %v427, 16
    %v2145 = vpop.permute.xlu0 %2144
    %2146 = vrot.lane.b32.xlu0 %v437, 16
    %v2147 = vpop.permute.xlu0 %2146
    %2148 = vrot.lane.b32.xlu0 %v451, 16
    %v2149 = vpop.permute.xlu0 %2148
    %2150 = vrot.lane.b32.xlu0 %v461, 16
    %v2151 = vpop.permute.xlu0 %2150
    %2152 = vrot.lane.b32.xlu0 %v475, 16
    %v2153 = vpop.permute.xlu0 %2152
    %2154 = vrot.lane.b32.xlu0 %v485, 16
    %v2155 = vpop.permute.xlu0 %2154
    %2156 = vrot.lane.b32.xlu0 %v499, 16
    %v2157 = vpop.permute.xlu0 %2156
    %2158 = vrot.lane.b32.xlu0 %v509, 16
    %v2159 = vpop.permute.xlu0 %2158
    %2160 = vrot.lane.b32.xlu0 %v523, 16
    %v2161 = vpop.permute.xlu0 %2160
    %2162 = vrot.lane.b32.xlu0 %v533, 16
    %v2163 = vpop.permute.xlu0 %2162
    %2164 = vrot.lane.b32.xlu0 %v547, 16
    %v2165 = vpop.permute.xlu0 %2164
    %2166 = vrot.lane.b32.xlu0 %v557, 16
    %v2167 = vpop.permute.xlu0 %2166
    %2168 = vrot.lane.b32.xlu0 %v571, 16
    %v2169 = vpop.permute.xlu0 %2168
    %2170 = vrot.lane.b32.xlu0 %v581, 16
    %v2171 = vpop.permute.xlu0 %2170
    %2172 = vrot.lane.b32.xlu0 %v2077, 16
    %v2173 = vpop.permute.xlu0 %2172
    %2174 = vrot.lane.b32.xlu0 %v2087, 16
    %v2175 = vpop.permute.xlu0 %2174
    %2176 = vrot.lane.b32.xlu0 %v619, 16
    %v2177 = vpop.permute.xlu0 %2176
    %2178 = vrot.lane.b32.xlu0 %v629, 16
    %v2179 = vpop.permute.xlu0 %2178
    %2180 = vrot.lane.b32.xlu0 %v643, 16
    %v2181 = vpop.permute.xlu0 %2180
    %2182 = vrot.lane.b32.xlu0 %v653, 16
    %v2183 = vpop.permute.xlu0 %2182
    %2184 = vrot.lane.b32.xlu0 %v667, 16
    %v2185 = vpop.permute.xlu0 %2184
    %2186 = vrot.lane.b32.xlu0 %v677, 16
    %v2187 = vpop.permute.xlu0 %2186
    %2188 = vrot.lane.b32.xlu0 %v691, 16
    %v2189 = vpop.permute.xlu0 %2188
    %2190 = vrot.lane.b32.xlu0 %v701, 16
    %v2191 = vpop.permute.xlu0 %2190
    %2192 = vrot.lane.b32.xlu0 %v715, 16
    %v2193 = vpop.permute.xlu0 %2192
    %2194 = vrot.lane.b32.xlu0 %v725, 16
    %v2195 = vpop.permute.xlu0 %2194
    %2196 = vrot.lane.b32.xlu0 %v739, 16
    %v2197 = vpop.permute.xlu0 %2196
    %2198 = vrot.lane.b32.xlu0 %v749, 16
    %v2199 = vpop.permute.xlu0 %2198
    %2200 = vrot.lane.b32.xlu0 %v763, 16
    %v2201 = vpop.permute.xlu0 %2200
    %2202 = vrot.lane.b32.xlu0 %v773, 16
    %v2203 = vpop.permute.xlu0 %2202
    %2204 = vrot.lane.b32.xlu0 %v787, 16
    %v2205 = vpop.permute.xlu0 %2204
    %2206 = vrot.lane.b32.xlu0 %v797, 16
    %v2207 = vpop.permute.xlu0 %2206
    %2208 = vrot.lane.b32.xlu0 %v811, 16
    %v2209 = vpop.permute.xlu0 %2208
    %2210 = vrot.lane.b32.xlu0 %v821, 16
    %v2211 = vpop.permute.xlu0 %2210
    %2212 = vrot.lane.b32.xlu0 %v835, 16
    %v2213 = vpop.permute.xlu0 %2212
    %2214 = vrot.lane.b32.xlu0 %v845, 16
    %v2215 = vpop.permute.xlu0 %2214
    %2216 = vrot.lane.b32.xlu0 %v859, 16
    %v2217 = vpop.permute.xlu0 %2216
    %2218 = vrot.lane.b32.xlu0 %v869, 16
    %v2219 = vpop.permute.xlu0 %2218
    %2220 = vrot.lane.b32.xlu0 %v883, 16
    %v2221 = vpop.permute.xlu0 %2220
    %2222 = vrot.lane.b32.xlu0 %v893, 16
    %v2223 = vpop.permute.xlu0 %2222
    %2224 = vrot.lane.b32.xlu0 %v907, 16
    %v2225 = vpop.permute.xlu0 %2224
    %2226 = vrot.lane.b32.xlu0 %v917, 16
    %v2227 = vpop.permute.xlu0 %2226
    %2228 = vrot.lane.b32.xlu0 %v931, 16
    %v2229 = vpop.permute.xlu0 %2228
    %2230 = vrot.lane.b32.xlu0 %v941, 16
    %v2231 = vpop.permute.xlu0 %2230
    %2232 = vrot.lane.b32.xlu0 %v955, 16
    %v2233 = vpop.permute.xlu0 %2232
    %2234 = vrot.lane.b32.xlu0 %v965, 16
    %v2235 = vpop.permute.xlu0 %2234
    %2236 = vrot.lane.b32.xlu0 %v2101, 16
    %v2237 = vpop.permute.xlu0 %2236
    %2238 = vrot.lane.b32.xlu0 %v2111, 16
    %v2239 = vpop.permute.xlu0 %2238
    %vm2304 = vcmask 158848
    %2305 = vst.msk [vmem:[#allocation2] sm:$0xf] %vm2304, %v2113
    %2306 = vst.msk [vmem:[#allocation2 + $0x4] sm:$0xf] %vm2304, %v2115
    %2307 = vst.msk [vmem:[#allocation2 + $0x8] sm:$0xf] %vm2304, %v2117
    %2308 = vst.msk [vmem:[#allocation2 + $0xc] sm:$0xf] %vm2304, %v2119
    %2309 = vst.msk [vmem:[#allocation2 + $0x10] sm:$0xf] %vm2304, %v2121
    %2310 = vst.msk [vmem:[#allocation2 + $0x14] sm:$0xf] %vm2304, %v2123
    %2311 = vst.msk [vmem:[#allocation2 + $0x18] sm:$0xf] %vm2304, %v2125
    %2312 = vst.msk [vmem:[#allocation2 + $0x1c] sm:$0xf] %vm2304, %v2127
    %2313 = vst.msk [vmem:[#allocation2 + $0x20] sm:$0xf] %vm2304, %v2129
    %2314 = vst.msk [vmem:[#allocation2 + $0x24] sm:$0xf] %vm2304, %v2131
    %2315 = vst.msk [vmem:[#allocation2 + $0x28] sm:$0xf] %vm2304, %v2133
    %2316 = vst.msk [vmem:[#allocation2 + $0x2c] sm:$0xf] %vm2304, %v2135
    %2317 = vst.msk [vmem:[#allocation2 + $0x30] sm:$0xf] %vm2304, %v2137
    %2318 = vst.msk [vmem:[#allocation2 + $0x34] sm:$0xf] %vm2304, %v2139
    %2319 = vst.msk [vmem:[#allocation2 + $0x38] sm:$0xf] %vm2304, %v2141
    %2320 = vst.msk [vmem:[#allocation2 + $0x3c] sm:$0xf] %vm2304, %v2143
    %2321 = vst.msk [vmem:[#allocation2 + $0x40] sm:$0xf] %vm2304, %v2145
    %2322 = vst.msk [vmem:[#allocation2 + $0x44] sm:$0xf] %vm2304, %v2147
    %2323 = vst.msk [vmem:[#allocation2 + $0x48] sm:$0xf] %vm2304, %v2149
    %2324 = vst.msk [vmem:[#allocation2 + $0x4c] sm:$0xf] %vm2304, %v2151
    %2325 = vst.msk [vmem:[#allocation2 + $0x50] sm:$0xf] %vm2304, %v2153
    %2326 = vst.msk [vmem:[#allocation2 + $0x54] sm:$0xf] %vm2304, %v2155
    %2327 = vst.msk [vmem:[#allocation2 + $0x58] sm:$0xf] %vm2304, %v2157
    %2328 = vst.msk [vmem:[#allocation2 + $0x5c] sm:$0xf] %vm2304, %v2159
    %2329 = vst.msk [vmem:[#allocation2 + $0x60] sm:$0xf] %vm2304, %v2161
    %2330 = vst.msk [vmem:[#allocation2 + $0x64] sm:$0xf] %vm2304, %v2163
    %2331 = vst.msk [vmem:[#allocation2 + $0x68] sm:$0xf] %vm2304, %v2165
    %2332 = vst.msk [vmem:[#allocation2 + $0x6c] sm:$0xf] %vm2304, %v2167
    %2333 = vst.msk [vmem:[#allocation2 + $0x70] sm:$0xf] %vm2304, %v2169
    %2334 = vst.msk [vmem:[#allocation2 + $0x74] sm:$0xf] %vm2304, %v2171
    %2335 = vst.msk [vmem:[#allocation2 + $0x78] sm:$0xf] %vm2304, %v2173
    %2336 = vst.msk [vmem:[#allocation2 + $0x7c] sm:$0xf] %vm2304, %v2175
    %2337 = vst.msk [vmem:[#allocation2 + $0x80] sm:$0xf] %vm2304, %v2177
    %2338 = vst.msk [vmem:[#allocation2 + $0x84] sm:$0xf] %vm2304, %v2179
    %2339 = vst.msk [vmem:[#allocation2 + $0x88] sm:$0xf] %vm2304, %v2181
    %2340 = vst.msk [vmem:[#allocation2 + $0x8c] sm:$0xf] %vm2304, %v2183
    %2341 = vst.msk [vmem:[#allocation2 + $0x90] sm:$0xf] %vm2304, %v2185
    %2342 = vst.msk [vmem:[#allocation2 + $0x94] sm:$0xf] %vm2304, %v2187
    %2343 = vst.msk [vmem:[#allocation2 + $0x98] sm:$0xf] %vm2304, %v2189
    %2344 = vst.msk [vmem:[#allocation2 + $0x9c] sm:$0xf] %vm2304, %v2191
    %2345 = vst.msk [vmem:[#allocation2 + $0xa0] sm:$0xf] %vm2304, %v2193
    %2346 = vst.msk [vmem:[#allocation2 + $0xa4] sm:$0xf] %vm2304, %v2195
    %2347 = vst.msk [vmem:[#allocation2 + $0xa8] sm:$0xf] %vm2304, %v2197
    %2348 = vst.msk [vmem:[#allocation2 + $0xac] sm:$0xf] %vm2304, %v2199
    %2349 = vst.msk [vmem:[#allocation2 + $0xb0] sm:$0xf] %vm2304, %v2201
    %2350 = vst.msk [vmem:[#allocation2 + $0xb4] sm:$0xf] %vm2304, %v2203
    %2351 = vst.msk [vmem:[#allocation2 + $0xb8] sm:$0xf] %vm2304, %v2205
    %2352 = vst.msk [vmem:[#allocation2 + $0xbc] sm:$0xf] %vm2304, %v2207
    %2353 = vst.msk [vmem:[#allocation2 + $0xc0] sm:$0xf] %vm2304, %v2209
    %2354 = vst.msk [vmem:[#allocation2 + $0xc4] sm:$0xf] %vm2304, %v2211
    %2355 = vst.msk [vmem:[#allocation2 + $0xc8] sm:$0xf] %vm2304, %v2213
    %2356 = vst.msk [vmem:[#allocation2 + $0xcc] sm:$0xf] %vm2304, %v2215
    %2357 = vst.msk [vmem:[#allocation2 + $0xd0] sm:$0xf] %vm2304, %v2217
    %2358 = vst.msk [vmem:[#allocation2 + $0xd4] sm:$0xf] %vm2304, %v2219
    %2359 = vst.msk [vmem:[#allocation2 + $0xd8] sm:$0xf] %vm2304, %v2221
    %2360 = vst.msk [vmem:[#allocation2 + $0xdc] sm:$0xf] %vm2304, %v2223
    %2361 = vst.msk [vmem:[#allocation2 + $0xe0] sm:$0xf] %vm2304, %v2225
    %2362 = vst.msk [vmem:[#allocation2 + $0xe4] sm:$0xf] %vm2304, %v2227
    %2363 = vst.msk [vmem:[#allocation2 + $0xe8] sm:$0xf] %vm2304, %v2229
    %2364 = vst.msk [vmem:[#allocation2 + $0xec] sm:$0xf] %vm2304, %v2231
    %2365 = vst.msk [vmem:[#allocation2 + $0xf0] sm:$0xf] %vm2304, %v2233
    %2366 = vst.msk [vmem:[#allocation2 + $0xf4] sm:$0xf] %vm2304, %v2235
    %2367 = vst.msk [vmem:[#allocation2 + $0xf8] sm:$0xf] %vm2304, %v2237
    %2368 = vst.msk [vmem:[#allocation2 + $0xfc] sm:$0xf] %vm2304, %v2239
    %v2371 = vrot.slane %v70, 5
    %v2372 = vrot.slane %v2371, 4
    %v2373 = vrot.slane %v71, 5
    %v2374 = vsel %vm1321, %v2372, %v2373
    %v2375 = vrot.slane %v2373, 4
    %v2376 = vrot.slane %v72, 5
    %v2377 = vsel %vm1321, %v2375, %v2376
    %v2378 = vrot.slane %v124, 5
    %v2379 = vrot.slane %v2378, 4
    %v2380 = vrot.slane %v125, 5
    %v2381 = vsel %vm1321, %v2379, %v2380
    %v2382 = vrot.slane %v2380, 4
    %v2383 = vrot.slane %v126, 5
    %v2384 = vsel %vm1321, %v2382, %v2383
    %2385 = vrot.lane.b32.xlu0 %v1332, 20
    %v2386 = vpop.permute.xlu0 %2385
    %2387 = vrot.lane.b32.xlu0 %v1335, 20
    %v2388 = vpop.permute.xlu0 %2387
    %2389 = vrot.lane.b32.xlu0 %v1339, 20
    %v2390 = vpop.permute.xlu0 %2389
    %2391 = vrot.lane.b32.xlu0 %v1342, 20
    %v2392 = vpop.permute.xlu0 %2391
    %2393 = vrot.lane.b32.xlu0 %v1346, 20
    %v2394 = vpop.permute.xlu0 %2393
    %2395 = vrot.lane.b32.xlu0 %v1349, 20
    %v2396 = vpop.permute.xlu0 %2395
    %2397 = vrot.lane.b32.xlu0 %v1353, 20
    %v2398 = vpop.permute.xlu0 %2397
    %2399 = vrot.lane.b32.xlu0 %v1356, 20
    %v2400 = vpop.permute.xlu0 %2399
    %2401 = vrot.lane.b32.xlu0 %v1360, 20
    %v2402 = vpop.permute.xlu0 %2401
    %2403 = vrot.lane.b32.xlu0 %v1363, 20
    %v2404 = vpop.permute.xlu0 %2403
    %2405 = vrot.lane.b32.xlu0 %v1367, 20
    %v2406 = vpop.permute.xlu0 %2405
    %2407 = vrot.lane.b32.xlu0 %v1370, 20
    %v2408 = vpop.permute.xlu0 %2407
    %2409 = vrot.lane.b32.xlu0 %v1374, 20
    %v2410 = vpop.permute.xlu0 %2409
    %2411 = vrot.lane.b32.xlu0 %v1377, 20
    %v2412 = vpop.permute.xlu0 %2411
    %2413 = vrot.lane.b32.xlu0 %v1381, 20
    %v2414 = vpop.permute.xlu0 %2413
    %2415 = vrot.lane.b32.xlu0 %v1384, 20
    %v2416 = vpop.permute.xlu0 %2415
    %2417 = vrot.lane.b32.xlu0 %v1388, 20
    %v2418 = vpop.permute.xlu0 %2417
    %2419 = vrot.lane.b32.xlu0 %v1391, 20
    %v2420 = vpop.permute.xlu0 %2419
    %2421 = vrot.lane.b32.xlu0 %v1395, 20
    %v2422 = vpop.permute.xlu0 %2421
    %2423 = vrot.lane.b32.xlu0 %v1398, 20
    %v2424 = vpop.permute.xlu0 %2423
    %2425 = vrot.lane.b32.xlu0 %v1402, 20
    %v2426 = vpop.permute.xlu0 %2425
    %2427 = vrot.lane.b32.xlu0 %v1405, 20
    %v2428 = vpop.permute.xlu0 %2427
    %2429 = vrot.lane.b32.xlu0 %v1409, 20
    %v2430 = vpop.permute.xlu0 %2429
    %2431 = vrot.lane.b32.xlu0 %v1412, 20
    %v2432 = vpop.permute.xlu0 %2431
    %2433 = vrot.lane.b32.xlu0 %v1416, 20
    %v2434 = vpop.permute.xlu0 %2433
    %2435 = vrot.lane.b32.xlu0 %v1419, 20
    %v2436 = vpop.permute.xlu0 %2435
    %2437 = vrot.lane.b32.xlu0 %v1423, 20
    %v2438 = vpop.permute.xlu0 %2437
    %2439 = vrot.lane.b32.xlu0 %v1426, 20
    %v2440 = vpop.permute.xlu0 %2439
    %2441 = vrot.lane.b32.xlu0 %v1430, 20
    %v2442 = vpop.permute.xlu0 %2441
    %2443 = vrot.lane.b32.xlu0 %v1433, 20
    %v2444 = vpop.permute.xlu0 %2443
    %2445 = vrot.lane.b32.xlu0 %v2374, 20
    %v2446 = vpop.permute.xlu0 %2445
    %2447 = vrot.lane.b32.xlu0 %v2377, 20
    %v2448 = vpop.permute.xlu0 %2447
    %2449 = vrot.lane.b32.xlu0 %v1444, 20
    %v2450 = vpop.permute.xlu0 %2449
    %2451 = vrot.lane.b32.xlu0 %v1447, 20
    %v2452 = vpop.permute.xlu0 %2451
    %2453 = vrot.lane.b32.xlu0 %v1451, 20
    %v2454 = vpop.permute.xlu0 %2453
    %2455 = vrot.lane.b32.xlu0 %v1454, 20
    %v2456 = vpop.permute.xlu0 %2455
    %2457 = vrot.lane.b32.xlu0 %v1458, 20
    %v2458 = vpop.permute.xlu0 %2457
    %2459 = vrot.lane.b32.xlu0 %v1461, 20
    %v2460 = vpop.permute.xlu0 %2459
    %2461 = vrot.lane.b32.xlu0 %v1465, 20
    %v2462 = vpop.permute.xlu0 %2461
    %2463 = vrot.lane.b32.xlu0 %v1468, 20
    %v2464 = vpop.permute.xlu0 %2463
    %2465 = vrot.lane.b32.xlu0 %v1472, 20
    %v2466 = vpop.permute.xlu0 %2465
    %2467 = vrot.lane.b32.xlu0 %v1475, 20
    %v2468 = vpop.permute.xlu0 %2467
    %2469 = vrot.lane.b32.xlu0 %v1479, 20
    %v2470 = vpop.permute.xlu0 %2469
    %2471 = vrot.lane.b32.xlu0 %v1482, 20
    %v2472 = vpop.permute.xlu0 %2471
    %2473 = vrot.lane.b32.xlu0 %v1486, 20
    %v2474 = vpop.permute.xlu0 %2473
    %2475 = vrot.lane.b32.xlu0 %v1489, 20
    %v2476 = vpop.permute.xlu0 %2475
    %2477 = vrot.lane.b32.xlu0 %v1493, 20
    %v2478 = vpop.permute.xlu0 %2477
    %2479 = vrot.lane.b32.xlu0 %v1496, 20
    %v2480 = vpop.permute.xlu0 %2479
    %2481 = vrot.lane.b32.xlu0 %v1500, 20
    %v2482 = vpop.permute.xlu0 %2481
    %2483 = vrot.lane.b32.xlu0 %v1503, 20
    %v2484 = vpop.permute.xlu0 %2483
    %2485 = vrot.lane.b32.xlu0 %v1507, 20
    %v2486 = vpop.permute.xlu0 %2485
    %2487 = vrot.lane.b32.xlu0 %v1510, 20
    %v2488 = vpop.permute.xlu0 %2487
    %2489 = vrot.lane.b32.xlu0 %v1514, 20
    %v2490 = vpop.permute.xlu0 %2489
    %2491 = vrot.lane.b32.xlu0 %v1517, 20
    %v2492 = vpop.permute.xlu0 %2491
    %2493 = vrot.lane.b32.xlu0 %v1521, 20
    %v2494 = vpop.permute.xlu0 %2493
    %2495 = vrot.lane.b32.xlu0 %v1524, 20
    %v2496 = vpop.permute.xlu0 %2495
    %2497 = vrot.lane.b32.xlu0 %v1528, 20
    %v2498 = vpop.permute.xlu0 %2497
    %2499 = vrot.lane.b32.xlu0 %v1531, 20
    %v2500 = vpop.permute.xlu0 %2499
    %2501 = vrot.lane.b32.xlu0 %v1535, 20
    %v2502 = vpop.permute.xlu0 %2501
    %2503 = vrot.lane.b32.xlu0 %v1538, 20
    %v2504 = vpop.permute.xlu0 %2503
    %2505 = vrot.lane.b32.xlu0 %v1542, 20
    %v2506 = vpop.permute.xlu0 %2505
    %2507 = vrot.lane.b32.xlu0 %v1545, 20
    %v2508 = vpop.permute.xlu0 %2507
    %2509 = vrot.lane.b32.xlu0 %v2381, 20
    %v2510 = vpop.permute.xlu0 %2509
    %2511 = vrot.lane.b32.xlu0 %v2384, 20
    %v2512 = vpop.permute.xlu0 %2511
    %vm2577 = vcmask 191648
    %2578 = vst.msk [vmem:[#allocation2] sm:$0xf] %vm2577, %v2386
    %2579 = vst.msk [vmem:[#allocation2 + $0x4] sm:$0xf] %vm2577, %v2388
    %2580 = vst.msk [vmem:[#allocation2 + $0x8] sm:$0xf] %vm2577, %v2390
    %2581 = vst.msk [vmem:[#allocation2 + $0xc] sm:$0xf] %vm2577, %v2392
    %2582 = vst.msk [vmem:[#allocation2 + $0x10] sm:$0xf] %vm2577, %v2394
    %2583 = vst.msk [vmem:[#allocation2 + $0x14] sm:$0xf] %vm2577, %v2396
    %2584 = vst.msk [vmem:[#allocation2 + $0x18] sm:$0xf] %vm2577, %v2398
    %2585 = vst.msk [vmem:[#allocation2 + $0x1c] sm:$0xf] %vm2577, %v2400
    %2586 = vst.msk [vmem:[#allocation2 + $0x20] sm:$0xf] %vm2577, %v2402
    %2587 = vst.msk [vmem:[#allocation2 + $0x24] sm:$0xf] %vm2577, %v2404
    %2588 = vst.msk [vmem:[#allocation2 + $0x28] sm:$0xf] %vm2577, %v2406
    %2589 = vst.msk [vmem:[#allocation2 + $0x2c] sm:$0xf] %vm2577, %v2408
    %2590 = vst.msk [vmem:[#allocation2 + $0x30] sm:$0xf] %vm2577, %v2410
    %2591 = vst.msk [vmem:[#allocation2 + $0x34] sm:$0xf] %vm2577, %v2412
    %2592 = vst.msk [vmem:[#allocation2 + $0x38] sm:$0xf] %vm2577, %v2414
    %2593 = vst.msk [vmem:[#allocation2 + $0x3c] sm:$0xf] %vm2577, %v2416
    %2594 = vst.msk [vmem:[#allocation2 + $0x40] sm:$0xf] %vm2577, %v2418
    %2595 = vst.msk [vmem:[#allocation2 + $0x44] sm:$0xf] %vm2577, %v2420
    %2596 = vst.msk [vmem:[#allocation2 + $0x48] sm:$0xf] %vm2577, %v2422
    %2597 = vst.msk [vmem:[#allocation2 + $0x4c] sm:$0xf] %vm2577, %v2424
    %2598 = vst.msk [vmem:[#allocation2 + $0x50] sm:$0xf] %vm2577, %v2426
    %2599 = vst.msk [vmem:[#allocation2 + $0x54] sm:$0xf] %vm2577, %v2428
    %2600 = vst.msk [vmem:[#allocation2 + $0x58] sm:$0xf] %vm2577, %v2430
    %2601 = vst.msk [vmem:[#allocation2 + $0x5c] sm:$0xf] %vm2577, %v2432
    %2602 = vst.msk [vmem:[#allocation2 + $0x60] sm:$0xf] %vm2577, %v2434
    %2603 = vst.msk [vmem:[#allocation2 + $0x64] sm:$0xf] %vm2577, %v2436
    %2604 = vst.msk [vmem:[#allocation2 + $0x68] sm:$0xf] %vm2577, %v2438
    %2605 = vst.msk [vmem:[#allocation2 + $0x6c] sm:$0xf] %vm2577, %v2440
    %2606 = vst.msk [vmem:[#allocation2 + $0x70] sm:$0xf] %vm2577, %v2442
    %2607 = vst.msk [vmem:[#allocation2 + $0x74] sm:$0xf] %vm2577, %v2444
    %2608 = vst.msk [vmem:[#allocation2 + $0x78] sm:$0xf] %vm2577, %v2446
    %2609 = vst.msk [vmem:[#allocation2 + $0x7c] sm:$0xf] %vm2577, %v2448
    %2610 = vst.msk [vmem:[#allocation2 + $0x80] sm:$0xf] %vm2577, %v2450
    %2611 = vst.msk [vmem:[#allocation2 + $0x84] sm:$0xf] %vm2577, %v2452
    %2612 = vst.msk [vmem:[#allocation2 + $0x88] sm:$0xf] %vm2577, %v2454
    %2613 = vst.msk [vmem:[#allocation2 + $0x8c] sm:$0xf] %vm2577, %v2456
    %2614 = vst.msk [vmem:[#allocation2 + $0x90] sm:$0xf] %vm2577, %v2458
    %2615 = vst.msk [vmem:[#allocation2 + $0x94] sm:$0xf] %vm2577, %v2460
    %2616 = vst.msk [vmem:[#allocation2 + $0x98] sm:$0xf] %vm2577, %v2462
    %2617 = vst.msk [vmem:[#allocation2 + $0x9c] sm:$0xf] %vm2577, %v2464
    %2618 = vst.msk [vmem:[#allocation2 + $0xa0] sm:$0xf] %vm2577, %v2466
    %2619 = vst.msk [vmem:[#allocation2 + $0xa4] sm:$0xf] %vm2577, %v2468
    %2620 = vst.msk [vmem:[#allocation2 + $0xa8] sm:$0xf] %vm2577, %v2470
    %2621 = vst.msk [vmem:[#allocation2 + $0xac] sm:$0xf] %vm2577, %v2472
    %2622 = vst.msk [vmem:[#allocation2 + $0xb0] sm:$0xf] %vm2577, %v2474
    %2623 = vst.msk [vmem:[#allocation2 + $0xb4] sm:$0xf] %vm2577, %v2476
    %2624 = vst.msk [vmem:[#allocation2 + $0xb8] sm:$0xf] %vm2577, %v2478
    %2625 = vst.msk [vmem:[#allocation2 + $0xbc] sm:$0xf] %vm2577, %v2480
    %2626 = vst.msk [vmem:[#allocation2 + $0xc0] sm:$0xf] %vm2577, %v2482
    %2627 = vst.msk [vmem:[#allocation2 + $0xc4] sm:$0xf] %vm2577, %v2484
    %2628 = vst.msk [vmem:[#allocation2 + $0xc8] sm:$0xf] %vm2577, %v2486
    %2629 = vst.msk [vmem:[#allocation2 + $0xcc] sm:$0xf] %vm2577, %v2488
    %2630 = vst.msk [vmem:[#allocation2 + $0xd0] sm:$0xf] %vm2577, %v2490
    %2631 = vst.msk [vmem:[#allocation2 + $0xd4] sm:$0xf] %vm2577, %v2492
    %2632 = vst.msk [vmem:[#allocation2 + $0xd8] sm:$0xf] %vm2577, %v2494
    %2633 = vst.msk [vmem:[#allocation2 + $0xdc] sm:$0xf] %vm2577, %v2496
    %2634 = vst.msk [vmem:[#allocation2 + $0xe0] sm:$0xf] %vm2577, %v2498
    %2635 = vst.msk [vmem:[#allocation2 + $0xe4] sm:$0xf] %vm2577, %v2500
    %2636 = vst.msk [vmem:[#allocation2 + $0xe8] sm:$0xf] %vm2577, %v2502
    %2637 = vst.msk [vmem:[#allocation2 + $0xec] sm:$0xf] %vm2577, %v2504
    %2638 = vst.msk [vmem:[#allocation2 + $0xf0] sm:$0xf] %vm2577, %v2506
    %2639 = vst.msk [vmem:[#allocation2 + $0xf4] sm:$0xf] %vm2577, %v2508
    %2640 = vst.msk [vmem:[#allocation2 + $0xf8] sm:$0xf] %vm2577, %v2510
    %2641 = vst.msk [vmem:[#allocation2 + $0xfc] sm:$0xf] %vm2577, %v2512
    %2646 = vrot.lane.b32.xlu0 %v28, 24
    %v2647 = vpop.permute.xlu0 %2646
    %2648 = vrot.lane.b32.xlu0 %v29, 24
    %v2649 = vpop.permute.xlu0 %2648
    %2650 = vrot.lane.b32.xlu0 %v31, 24
    %v2651 = vpop.permute.xlu0 %2650
    %2652 = vrot.lane.b32.xlu0 %v32, 24
    %v2653 = vpop.permute.xlu0 %2652
    %2654 = vrot.lane.b32.xlu0 %v34, 24
    %v2655 = vpop.permute.xlu0 %2654
    %2656 = vrot.lane.b32.xlu0 %v35, 24
    %v2657 = vpop.permute.xlu0 %2656
    %2658 = vrot.lane.b32.xlu0 %v37, 24
    %v2659 = vpop.permute.xlu0 %2658
    %2660 = vrot.lane.b32.xlu0 %v38, 24
    %v2661 = vpop.permute.xlu0 %2660
    %2662 = vrot.lane.b32.xlu0 %v40, 24
    %v2663 = vpop.permute.xlu0 %2662
    %2664 = vrot.lane.b32.xlu0 %v41, 24
    %v2665 = vpop.permute.xlu0 %2664
    %2666 = vrot.lane.b32.xlu0 %v43, 24
    %v2667 = vpop.permute.xlu0 %2666
    %2668 = vrot.lane.b32.xlu0 %v44, 24
    %v2669 = vpop.permute.xlu0 %2668
    %2670 = vrot.lane.b32.xlu0 %v46, 24
    %v2671 = vpop.permute.xlu0 %2670
    %2672 = vrot.lane.b32.xlu0 %v47, 24
    %v2673 = vpop.permute.xlu0 %2672
    %2674 = vrot.lane.b32.xlu0 %v49, 24
    %v2675 = vpop.permute.xlu0 %2674
    %2676 = vrot.lane.b32.xlu0 %v50, 24
    %v2677 = vpop.permute.xlu0 %2676
    %2678 = vrot.lane.b32.xlu0 %v52, 24
    %v2679 = vpop.permute.xlu0 %2678
    %2680 = vrot.lane.b32.xlu0 %v53, 24
    %v2681 = vpop.permute.xlu0 %2680
    %2682 = vrot.lane.b32.xlu0 %v55, 24
    %v2683 = vpop.permute.xlu0 %2682
    %2684 = vrot.lane.b32.xlu0 %v56, 24
    %v2685 = vpop.permute.xlu0 %2684
    %2686 = vrot.lane.b32.xlu0 %v58, 24
    %v2687 = vpop.permute.xlu0 %2686
    %2688 = vrot.lane.b32.xlu0 %v59, 24
    %v2689 = vpop.permute.xlu0 %2688
    %2690 = vrot.lane.b32.xlu0 %v61, 24
    %v2691 = vpop.permute.xlu0 %2690
    %2692 = vrot.lane.b32.xlu0 %v62, 24
    %v2693 = vpop.permute.xlu0 %2692
    %2694 = vrot.lane.b32.xlu0 %v64, 24
    %v2695 = vpop.permute.xlu0 %2694
    %2696 = vrot.lane.b32.xlu0 %v65, 24
    %v2697 = vpop.permute.xlu0 %2696
    %2698 = vrot.lane.b32.xlu0 %v67, 24
    %v2699 = vpop.permute.xlu0 %2698
    %2700 = vrot.lane.b32.xlu0 %v68, 24
    %v2701 = vpop.permute.xlu0 %2700
    %2702 = vrot.lane.b32.xlu0 %v70, 24
    %v2703 = vpop.permute.xlu0 %2702
    %2704 = vrot.lane.b32.xlu0 %v71, 24
    %v2705 = vpop.permute.xlu0 %2704
    %2706 = vrot.lane.b32.xlu0 %v73, 24
    %v2707 = vpop.permute.xlu0 %2706
    %2708 = vrot.lane.b32.xlu0 %v74, 24
    %v2709 = vpop.permute.xlu0 %2708
    %2710 = vrot.lane.b32.xlu0 %v82, 24
    %v2711 = vpop.permute.xlu0 %2710
    %2712 = vrot.lane.b32.xlu0 %v83, 24
    %v2713 = vpop.permute.xlu0 %2712
    %2714 = vrot.lane.b32.xlu0 %v85, 24
    %v2715 = vpop.permute.xlu0 %2714
    %2716 = vrot.lane.b32.xlu0 %v86, 24
    %v2717 = vpop.permute.xlu0 %2716
    %2718 = vrot.lane.b32.xlu0 %v88, 24
    %v2719 = vpop.permute.xlu0 %2718
    %2720 = vrot.lane.b32.xlu0 %v89, 24
    %v2721 = vpop.permute.xlu0 %2720
    %2722 = vrot.lane.b32.xlu0 %v91, 24
    %v2723 = vpop.permute.xlu0 %2722
    %2724 = vrot.lane.b32.xlu0 %v92, 24
    %v2725 = vpop.permute.xlu0 %2724
    %2726 = vrot.lane.b32.xlu0 %v94, 24
    %v2727 = vpop.permute.xlu0 %2726
    %2728 = vrot.lane.b32.xlu0 %v95, 24
    %v2729 = vpop.permute.xlu0 %2728
    %2730 = vrot.lane.b32.xlu0 %v97, 24
    %v2731 = vpop.permute.xlu0 %2730
    %2732 = vrot.lane.b32.xlu0 %v98, 24
    %v2733 = vpop.permute.xlu0 %2732
    %2734 = vrot.lane.b32.xlu0 %v100, 24
    %v2735 = vpop.permute.xlu0 %2734
    %2736 = vrot.lane.b32.xlu0 %v101, 24
    %v2737 = vpop.permute.xlu0 %2736
    %2738 = vrot.lane.b32.xlu0 %v103, 24
    %v2739 = vpop.permute.xlu0 %2738
    %2740 = vrot.lane.b32.xlu0 %v104, 24
    %v2741 = vpop.permute.xlu0 %2740
    %2742 = vrot.lane.b32.xlu0 %v106, 24
    %v2743 = vpop.permute.xlu0 %2742
    %2744 = vrot.lane.b32.xlu0 %v107, 24
    %v2745 = vpop.permute.xlu0 %2744
    %2746 = vrot.lane.b32.xlu0 %v109, 24
    %v2747 = vpop.permute.xlu0 %2746
    %2748 = vrot.lane.b32.xlu0 %v110, 24
    %v2749 = vpop.permute.xlu0 %2748
    %2750 = vrot.lane.b32.xlu0 %v112, 24
    %v2751 = vpop.permute.xlu0 %2750
    %2752 = vrot.lane.b32.xlu0 %v113, 24
    %v2753 = vpop.permute.xlu0 %2752
    %2754 = vrot.lane.b32.xlu0 %v115, 24
    %v2755 = vpop.permute.xlu0 %2754
    %2756 = vrot.lane.b32.xlu0 %v116, 24
    %v2757 = vpop.permute.xlu0 %2756
    %2758 = vrot.lane.b32.xlu0 %v118, 24
    %v2759 = vpop.permute.xlu0 %2758
    %2760 = vrot.lane.b32.xlu0 %v119, 24
    %v2761 = vpop.permute.xlu0 %2760
    %2762 = vrot.lane.b32.xlu0 %v121, 24
    %v2763 = vpop.permute.xlu0 %2762
    %2764 = vrot.lane.b32.xlu0 %v122, 24
    %v2765 = vpop.permute.xlu0 %2764
    %2766 = vrot.lane.b32.xlu0 %v124, 24
    %v2767 = vpop.permute.xlu0 %2766
    %2768 = vrot.lane.b32.xlu0 %v125, 24
    %v2769 = vpop.permute.xlu0 %2768
    %2770 = vrot.lane.b32.xlu0 %v127, 24
    %v2771 = vpop.permute.xlu0 %2770
    %2772 = vrot.lane.b32.xlu0 %v128, 24
    %v2773 = vpop.permute.xlu0 %2772
    %vm2838 = vcmask 224448
    %2839 = vst.msk [vmem:[#allocation2] sm:$0xf] %vm2838, %v2647
    %2840 = vst.msk [vmem:[#allocation2 + $0x4] sm:$0xf] %vm2838, %v2649
    %2841 = vst.msk [vmem:[#allocation2 + $0x8] sm:$0xf] %vm2838, %v2651
    %2842 = vst.msk [vmem:[#allocation2 + $0xc] sm:$0xf] %vm2838, %v2653
    %2843 = vst.msk [vmem:[#allocation2 + $0x10] sm:$0xf] %vm2838, %v2655
    %2844 = vst.msk [vmem:[#allocation2 + $0x14] sm:$0xf] %vm2838, %v2657
    %2845 = vst.msk [vmem:[#allocation2 + $0x18] sm:$0xf] %vm2838, %v2659
    %2846 = vst.msk [vmem:[#allocation2 + $0x1c] sm:$0xf] %vm2838, %v2661
    %2847 = vst.msk [vmem:[#allocation2 + $0x20] sm:$0xf] %vm2838, %v2663
    %2848 = vst.msk [vmem:[#allocation2 + $0x24] sm:$0xf] %vm2838, %v2665
    %2849 = vst.msk [vmem:[#allocation2 + $0x28] sm:$0xf] %vm2838, %v2667
    %2850 = vst.msk [vmem:[#allocation2 + $0x2c] sm:$0xf] %vm2838, %v2669
    %2851 = vst.msk [vmem:[#allocation2 + $0x30] sm:$0xf] %vm2838, %v2671
    %2852 = vst.msk [vmem:[#allocation2 + $0x34] sm:$0xf] %vm2838, %v2673
    %2853 = vst.msk [vmem:[#allocation2 + $0x38] sm:$0xf] %vm2838, %v2675
    %2854 = vst.msk [vmem:[#allocation2 + $0x3c] sm:$0xf] %vm2838, %v2677
    %2855 = vst.msk [vmem:[#allocation2 + $0x40] sm:$0xf] %vm2838, %v2679
    %2856 = vst.msk [vmem:[#allocation2 + $0x44] sm:$0xf] %vm2838, %v2681
    %2857 = vst.msk [vmem:[#allocation2 + $0x48] sm:$0xf] %vm2838, %v2683
    %2858 = vst.msk [vmem:[#allocation2 + $0x4c] sm:$0xf] %vm2838, %v2685
    %2859 = vst.msk [vmem:[#allocation2 + $0x50] sm:$0xf] %vm2838, %v2687
    %2860 = vst.msk [vmem:[#allocation2 + $0x54] sm:$0xf] %vm2838, %v2689
    %2861 = vst.msk [vmem:[#allocation2 + $0x58] sm:$0xf] %vm2838, %v2691
    %2862 = vst.msk [vmem:[#allocation2 + $0x5c] sm:$0xf] %vm2838, %v2693
    %2863 = vst.msk [vmem:[#allocation2 + $0x60] sm:$0xf] %vm2838, %v2695
    %2864 = vst.msk [vmem:[#allocation2 + $0x64] sm:$0xf] %vm2838, %v2697
    %2865 = vst.msk [vmem:[#allocation2 + $0x68] sm:$0xf] %vm2838, %v2699
    %2866 = vst.msk [vmem:[#allocation2 + $0x6c] sm:$0xf] %vm2838, %v2701
    %2867 = vst.msk [vmem:[#allocation2 + $0x70] sm:$0xf] %vm2838, %v2703
    %2868 = vst.msk [vmem:[#allocation2 + $0x74] sm:$0xf] %vm2838, %v2705
    %2869 = vst.msk [vmem:[#allocation2 + $0x78] sm:$0xf] %vm2838, %v2707
    %2870 = vst.msk [vmem:[#allocation2 + $0x7c] sm:$0xf] %vm2838, %v2709
    %2871 = vst.msk [vmem:[#allocation2 + $0x80] sm:$0xf] %vm2838, %v2711
    %2872 = vst.msk [vmem:[#allocation2 + $0x84] sm:$0xf] %vm2838, %v2713
    %2873 = vst.msk [vmem:[#allocation2 + $0x88] sm:$0xf] %vm2838, %v2715
    %2874 = vst.msk [vmem:[#allocation2 + $0x8c] sm:$0xf] %vm2838, %v2717
    %2875 = vst.msk [vmem:[#allocation2 + $0x90] sm:$0xf] %vm2838, %v2719
    %2876 = vst.msk [vmem:[#allocation2 + $0x94] sm:$0xf] %vm2838, %v2721
    %2877 = vst.msk [vmem:[#allocation2 + $0x98] sm:$0xf] %vm2838, %v2723
    %2878 = vst.msk [vmem:[#allocation2 + $0x9c] sm:$0xf] %vm2838, %v2725
    %2879 = vst.msk [vmem:[#allocation2 + $0xa0] sm:$0xf] %vm2838, %v2727
    %2880 = vst.msk [vmem:[#allocation2 + $0xa4] sm:$0xf] %vm2838, %v2729
    %2881 = vst.msk [vmem:[#allocation2 + $0xa8] sm:$0xf] %vm2838, %v2731
    %2882 = vst.msk [vmem:[#allocation2 + $0xac] sm:$0xf] %vm2838, %v2733
    %2883 = vst.msk [vmem:[#allocation2 + $0xb0] sm:$0xf] %vm2838, %v2735
    %2884 = vst.msk [vmem:[#allocation2 + $0xb4] sm:$0xf] %vm2838, %v2737
    %2885 = vst.msk [vmem:[#allocation2 + $0xb8] sm:$0xf] %vm2838, %v2739
    %2886 = vst.msk [vmem:[#allocation2 + $0xbc] sm:$0xf] %vm2838, %v2741
    %2887 = vst.msk [vmem:[#allocation2 + $0xc0] sm:$0xf] %vm2838, %v2743
    %2888 = vst.msk [vmem:[#allocation2 + $0xc4] sm:$0xf] %vm2838, %v2745
    %2889 = vst.msk [vmem:[#allocation2 + $0xc8] sm:$0xf] %vm2838, %v2747
    %2890 = vst.msk [vmem:[#allocation2 + $0xcc] sm:$0xf] %vm2838, %v2749
    %2891 = vst.msk [vmem:[#allocation2 + $0xd0] sm:$0xf] %vm2838, %v2751
    %2892 = vst.msk [vmem:[#allocation2 + $0xd4] sm:$0xf] %vm2838, %v2753
    %2893 = vst.msk [vmem:[#allocation2 + $0xd8] sm:$0xf] %vm2838, %v2755
    %2894 = vst.msk [vmem:[#allocation2 + $0xdc] sm:$0xf] %vm2838, %v2757
    %2895 = vst.msk [vmem:[#allocation2 + $0xe0] sm:$0xf] %vm2838, %v2759
    %2896 = vst.msk [vmem:[#allocation2 + $0xe4] sm:$0xf] %vm2838, %v2761
    %2897 = vst.msk [vmem:[#allocation2 + $0xe8] sm:$0xf] %vm2838, %v2763
    %2898 = vst.msk [vmem:[#allocation2 + $0xec] sm:$0xf] %vm2838, %v2765
    %2899 = vst.msk [vmem:[#allocation2 + $0xf0] sm:$0xf] %vm2838, %v2767
    %2900 = vst.msk [vmem:[#allocation2 + $0xf4] sm:$0xf] %vm2838, %v2769
    %2901 = vst.msk [vmem:[#allocation2 + $0xf8] sm:$0xf] %vm2838, %v2771
    %2902 = vst.msk [vmem:[#allocation2 + $0xfc] sm:$0xf] %vm2838, %v2773
    %v2904 = vshrl.u32 %v73, 16
    %v2906 = vrot.slane %v2904, 4
    %v2907 = vshll.u32 %v73, 16
    %v2909 = vrot.slane %v2907, 5
    %v2910 = vor.u32 %v2906, %v2909
    %v2911 = vrot.slane %v2910, 4
    %v2913 = vshll.u32 %v74, 16
    %v2915 = vrot.slane %v2913, 5
    %v2916 = vsel %vm197, %v2911, %v2915
    %v2917 = vshrl.u32 %v74, 16
    %v2919 = vrot.slane %v2917, 4
    %v2920 = vor.u32 %v2919, %v2915
    %v2921 = vrot.slane %v2920, 4
    %v2923 = vshll.u32 %v75, 16
    %v2925 = vrot.slane %v2923, 5
    %v2926 = vsel %vm197, %v2921, %v2925
    %v2928 = vshrl.u32 %v127, 16
    %v2930 = vrot.slane %v2928, 4
    %v2931 = vshll.u32 %v127, 16
    %v2933 = vrot.slane %v2931, 5
    %v2934 = vor.u32 %v2930, %v2933
    %v2935 = vrot.slane %v2934, 4
    %v2937 = vshll.u32 %v128, 16
    %v2939 = vrot.slane %v2937, 5
    %v2940 = vsel %vm197, %v2935, %v2939
    %v2941 = vshrl.u32 %v128, 16
    %v2943 = vrot.slane %v2941, 4
    %v2944 = vor.u32 %v2943, %v2939
    %v2945 = vrot.slane %v2944, 4
    %v2947 = vshll.u32 %v129, 16
    %v2949 = vrot.slane %v2947, 5
    %v2950 = vsel %vm197, %v2945, %v2949
    %2951 = vrot.lane.b32.xlu0 %v259, 28
    %v2952 = vpop.permute.xlu0 %2951
    %2953 = vrot.lane.b32.xlu0 %v269, 28
    %v2954 = vpop.permute.xlu0 %2953
    %2955 = vrot.lane.b32.xlu0 %v283, 28
    %v2956 = vpop.permute.xlu0 %2955
    %2957 = vrot.lane.b32.xlu0 %v293, 28
    %v2958 = vpop.permute.xlu0 %2957
    %2959 = vrot.lane.b32.xlu0 %v307, 28
    %v2960 = vpop.permute.xlu0 %2959
    %2961 = vrot.lane.b32.xlu0 %v317, 28
    %v2962 = vpop.permute.xlu0 %2961
    %2963 = vrot.lane.b32.xlu0 %v331, 28
    %v2964 = vpop.permute.xlu0 %2963
    %2965 = vrot.lane.b32.xlu0 %v341, 28
    %v2966 = vpop.permute.xlu0 %2965
    %2967 = vrot.lane.b32.xlu0 %v355, 28
    %v2968 = vpop.permute.xlu0 %2967
    %2969 = vrot.lane.b32.xlu0 %v365, 28
    %v2970 = vpop.permute.xlu0 %2969
    %2971 = vrot.lane.b32.xlu0 %v379, 28
    %v2972 = vpop.permute.xlu0 %2971
    %2973 = vrot.lane.b32.xlu0 %v389, 28
    %v2974 = vpop.permute.xlu0 %2973
    %2975 = vrot.lane.b32.xlu0 %v403, 28
    %v2976 = vpop.permute.xlu0 %2975
    %2977 = vrot.lane.b32.xlu0 %v413, 28
    %v2978 = vpop.permute.xlu0 %2977
    %2979 = vrot.lane.b32.xlu0 %v427, 28
    %v2980 = vpop.permute.xlu0 %2979
    %2981 = vrot.lane.b32.xlu0 %v437, 28
    %v2982 = vpop.permute.xlu0 %2981
    %2983 = vrot.lane.b32.xlu0 %v451, 28
    %v2984 = vpop.permute.xlu0 %2983
    %2985 = vrot.lane.b32.xlu0 %v461, 28
    %v2986 = vpop.permute.xlu0 %2985
    %2987 = vrot.lane.b32.xlu0 %v475, 28
    %v2988 = vpop.permute.xlu0 %2987
    %2989 = vrot.lane.b32.xlu0 %v485, 28
    %v2990 = vpop.permute.xlu0 %2989
    %2991 = vrot.lane.b32.xlu0 %v499, 28
    %v2992 = vpop.permute.xlu0 %2991
    %2993 = vrot.lane.b32.xlu0 %v509, 28
    %v2994 = vpop.permute.xlu0 %2993
    %2995 = vrot.lane.b32.xlu0 %v523, 28
    %v2996 = vpop.permute.xlu0 %2995
    %2997 = vrot.lane.b32.xlu0 %v533, 28
    %v2998 = vpop.permute.xlu0 %2997
    %2999 = vrot.lane.b32.xlu0 %v547, 28
    %v3000 = vpop.permute.xlu0 %2999
    %3001 = vrot.lane.b32.xlu0 %v557, 28
    %v3002 = vpop.permute.xlu0 %3001
    %3003 = vrot.lane.b32.xlu0 %v571, 28
    %v3004 = vpop.permute.xlu0 %3003
    %3005 = vrot.lane.b32.xlu0 %v581, 28
    %v3006 = vpop.permute.xlu0 %3005
    %3007 = vrot.lane.b32.xlu0 %v2077, 28
    %v3008 = vpop.permute.xlu0 %3007
    %3009 = vrot.lane.b32.xlu0 %v2087, 28
    %v3010 = vpop.permute.xlu0 %3009
    %3011 = vrot.lane.b32.xlu0 %v2916, 28
    %v3012 = vpop.permute.xlu0 %3011
    %3013 = vrot.lane.b32.xlu0 %v2926, 28
    %v3014 = vpop.permute.xlu0 %3013
    %3015 = vrot.lane.b32.xlu0 %v643, 28
    %v3016 = vpop.permute.xlu0 %3015
    %3017 = vrot.lane.b32.xlu0 %v653, 28
    %v3018 = vpop.permute.xlu0 %3017
    %3019 = vrot.lane.b32.xlu0 %v667, 28
    %v3020 = vpop.permute.xlu0 %3019
    %3021 = vrot.lane.b32.xlu0 %v677, 28
    %v3022 = vpop.permute.xlu0 %3021
    %3023 = vrot.lane.b32.xlu0 %v691, 28
    %v3024 = vpop.permute.xlu0 %3023
    %3025 = vrot.lane.b32.xlu0 %v701, 28
    %v3026 = vpop.permute.xlu0 %3025
    %3027 = vrot.lane.b32.xlu0 %v715, 28
    %v3028 = vpop.permute.xlu0 %3027
    %3029 = vrot.lane.b32.xlu0 %v725, 28
    %v3030 = vpop.permute.xlu0 %3029
    %3031 = vrot.lane.b32.xlu0 %v739, 28
    %v3032 = vpop.permute.xlu0 %3031
    %3033 = vrot.lane.b32.xlu0 %v749, 28
    %v3034 = vpop.permute.xlu0 %3033
    %3035 = vrot.lane.b32.xlu0 %v763, 28
    %v3036 = vpop.permute.xlu0 %3035
    %3037 = vrot.lane.b32.xlu0 %v773, 28
    %v3038 = vpop.permute.xlu0 %3037
    %3039 = vrot.lane.b32.xlu0 %v787, 28
    %v3040 = vpop.permute.xlu0 %3039
    %3041 = vrot.lane.b32.xlu0 %v797, 28
    %v3042 = vpop.permute.xlu0 %3041
    %3043 = vrot.lane.b32.xlu0 %v811, 28
    %v3044 = vpop.permute.xlu0 %3043
    %3045 = vrot.lane.b32.xlu0 %v821, 28
    %v3046 = vpop.permute.xlu0 %3045
    %3047 = vrot.lane.b32.xlu0 %v835, 28
    %v3048 = vpop.permute.xlu0 %3047
    %3049 = vrot.lane.b32.xlu0 %v845, 28
    %v3050 = vpop.permute.xlu0 %3049
    %3051 = vrot.lane.b32.xlu0 %v859, 28
    %v3052 = vpop.permute.xlu0 %3051
    %3053 = vrot.lane.b32.xlu0 %v869, 28
    %v3054 = vpop.permute.xlu0 %3053
    %3055 = vrot.lane.b32.xlu0 %v883, 28
    %v3056 = vpop.permute.xlu0 %3055
    %3057 = vrot.lane.b32.xlu0 %v893, 28
    %v3058 = vpop.permute.xlu0 %3057
    %3059 = vrot.lane.b32.xlu0 %v907, 28
    %v3060 = vpop.permute.xlu0 %3059
    %3061 = vrot.lane.b32.xlu0 %v917, 28
    %v3062 = vpop.permute.xlu0 %3061
    %3063 = vrot.lane.b32.xlu0 %v931, 28
    %v3064 = vpop.permute.xlu0 %3063
    %3065 = vrot.lane.b32.xlu0 %v941, 28
    %v3066 = vpop.permute.xlu0 %3065
    %3067 = vrot.lane.b32.xlu0 %v955, 28
    %v3068 = vpop.permute.xlu0 %3067
    %3069 = vrot.lane.b32.xlu0 %v965, 28
    %v3070 = vpop.permute.xlu0 %3069
    %3071 = vrot.lane.b32.xlu0 %v2101, 28
    %v3072 = vpop.permute.xlu0 %3071
    %3073 = vrot.lane.b32.xlu0 %v2111, 28
    %v3074 = vpop.permute.xlu0 %3073
    %3075 = vrot.lane.b32.xlu0 %v2940, 28
    %v3076 = vpop.permute.xlu0 %3075
    %3077 = vrot.lane.b32.xlu0 %v2950, 28
    %v3078 = vpop.permute.xlu0 %3077
    %vm3143 = vcmask 257248
    %3144 = vst.msk [vmem:[#allocation2] sm:$0xf] %vm3143, %v2952
    %3145 = vst.msk [vmem:[#allocation2 + $0x4] sm:$0xf] %vm3143, %v2954
    %3146 = vst.msk [vmem:[#allocation2 + $0x8] sm:$0xf] %vm3143, %v2956
    %3147 = vst.msk [vmem:[#allocation2 + $0xc] sm:$0xf] %vm3143, %v2958
    %3148 = vst.msk [vmem:[#allocation2 + $0x10] sm:$0xf] %vm3143, %v2960
    %3149 = vst.msk [vmem:[#allocation2 + $0x14] sm:$0xf] %vm3143, %v2962
    %3150 = vst.msk [vmem:[#allocation2 + $0x18] sm:$0xf] %vm3143, %v2964
    %3151 = vst.msk [vmem:[#allocation2 + $0x1c] sm:$0xf] %vm3143, %v2966
    %3152 = vst.msk [vmem:[#allocation2 + $0x20] sm:$0xf] %vm3143, %v2968
    %3153 = vst.msk [vmem:[#allocation2 + $0x24] sm:$0xf] %vm3143, %v2970
    %3154 = vst.msk [vmem:[#allocation2 + $0x28] sm:$0xf] %vm3143, %v2972
    %3155 = vst.msk [vmem:[#allocation2 + $0x2c] sm:$0xf] %vm3143, %v2974
    %3156 = vst.msk [vmem:[#allocation2 + $0x30] sm:$0xf] %vm3143, %v2976
    %3157 = vst.msk [vmem:[#allocation2 + $0x34] sm:$0xf] %vm3143, %v2978
    %3158 = vst.msk [vmem:[#allocation2 + $0x38] sm:$0xf] %vm3143, %v2980
    %3159 = vst.msk [vmem:[#allocation2 + $0x3c] sm:$0xf] %vm3143, %v2982
    %3160 = vst.msk [vmem:[#allocation2 + $0x40] sm:$0xf] %vm3143, %v2984
    %3161 = vst.msk [vmem:[#allocation2 + $0x44] sm:$0xf] %vm3143, %v2986
    %3162 = vst.msk [vmem:[#allocation2 + $0x48] sm:$0xf] %vm3143, %v2988
    %3163 = vst.msk [vmem:[#allocation2 + $0x4c] sm:$0xf] %vm3143, %v2990
    %3164 = vst.msk [vmem:[#allocation2 + $0x50] sm:$0xf] %vm3143, %v2992
    %3165 = vst.msk [vmem:[#allocation2 + $0x54] sm:$0xf] %vm3143, %v2994
    %3166 = vst.msk [vmem:[#allocation2 + $0x58] sm:$0xf] %vm3143, %v2996
    %3167 = vst.msk [vmem:[#allocation2 + $0x5c] sm:$0xf] %vm3143, %v2998
    %3168 = vst.msk [vmem:[#allocation2 + $0x60] sm:$0xf] %vm3143, %v3000
    %3169 = vst.msk [vmem:[#allocation2 + $0x64] sm:$0xf] %vm3143, %v3002
    %3170 = vst.msk [vmem:[#allocation2 + $0x68] sm:$0xf] %vm3143, %v3004
    %3171 = vst.msk [vmem:[#allocation2 + $0x6c] sm:$0xf] %vm3143, %v3006
    %3172 = vst.msk [vmem:[#allocation2 + $0x70] sm:$0xf] %vm3143, %v3008
    %3173 = vst.msk [vmem:[#allocation2 + $0x74] sm:$0xf] %vm3143, %v3010
    %3174 = vst.msk [vmem:[#allocation2 + $0x78] sm:$0xf] %vm3143, %v3012
    %3175 = vst.msk [vmem:[#allocation2 + $0x7c] sm:$0xf] %vm3143, %v3014
    %3176 = vst.msk [vmem:[#allocation2 + $0x80] sm:$0xf] %vm3143, %v3016
    %3177 = vst.msk [vmem:[#allocation2 + $0x84] sm:$0xf] %vm3143, %v3018
    %3178 = vst.msk [vmem:[#allocation2 + $0x88] sm:$0xf] %vm3143, %v3020
    %3179 = vst.msk [vmem:[#allocation2 + $0x8c] sm:$0xf] %vm3143, %v3022
    %3180 = vst.msk [vmem:[#allocation2 + $0x90] sm:$0xf] %vm3143, %v3024
    %3181 = vst.msk [vmem:[#allocation2 + $0x94] sm:$0xf] %vm3143, %v3026
    %3182 = vst.msk [vmem:[#allocation2 + $0x98] sm:$0xf] %vm3143, %v3028
    %3183 = vst.msk [vmem:[#allocation2 + $0x9c] sm:$0xf] %vm3143, %v3030
    %3184 = vst.msk [vmem:[#allocation2 + $0xa0] sm:$0xf] %vm3143, %v3032
    %3185 = vst.msk [vmem:[#allocation2 + $0xa4] sm:$0xf] %vm3143, %v3034
    %3186 = vst.msk [vmem:[#allocation2 + $0xa8] sm:$0xf] %vm3143, %v3036
    %3187 = vst.msk [vmem:[#allocation2 + $0xac] sm:$0xf] %vm3143, %v3038
    %3188 = vst.msk [vmem:[#allocation2 + $0xb0] sm:$0xf] %vm3143, %v3040
    %3189 = vst.msk [vmem:[#allocation2 + $0xb4] sm:$0xf] %vm3143, %v3042
    %3190 = vst.msk [vmem:[#allocation2 + $0xb8] sm:$0xf] %vm3143, %v3044
    %3191 = vst.msk [vmem:[#allocation2 + $0xbc] sm:$0xf] %vm3143, %v3046
    %3192 = vst.msk [vmem:[#allocation2 + $0xc0] sm:$0xf] %vm3143, %v3048
    %3193 = vst.msk [vmem:[#allocation2 + $0xc4] sm:$0xf] %vm3143, %v3050
    %3194 = vst.msk [vmem:[#allocation2 + $0xc8] sm:$0xf] %vm3143, %v3052
    %3195 = vst.msk [vmem:[#allocation2 + $0xcc] sm:$0xf] %vm3143, %v3054
    %3196 = vst.msk [vmem:[#allocation2 + $0xd0] sm:$0xf] %vm3143, %v3056
    %3197 = vst.msk [vmem:[#allocation2 + $0xd4] sm:$0xf] %vm3143, %v3058
    %3198 = vst.msk [vmem:[#allocation2 + $0xd8] sm:$0xf] %vm3143, %v3060
    %3199 = vst.msk [vmem:[#allocation2 + $0xdc] sm:$0xf] %vm3143, %v3062
    %3200 = vst.msk [vmem:[#allocation2 + $0xe0] sm:$0xf] %vm3143, %v3064
    %3201 = vst.msk [vmem:[#allocation2 + $0xe4] sm:$0xf] %vm3143, %v3066
    %3202 = vst.msk [vmem:[#allocation2 + $0xe8] sm:$0xf] %vm3143, %v3068
    %3203 = vst.msk [vmem:[#allocation2 + $0xec] sm:$0xf] %vm3143, %v3070
    %3204 = vst.msk [vmem:[#allocation2 + $0xf0] sm:$0xf] %vm3143, %v3072
    %3205 = vst.msk [vmem:[#allocation2 + $0xf4] sm:$0xf] %vm3143, %v3074
    %3206 = vst.msk [vmem:[#allocation2 + $0xf8] sm:$0xf] %vm3143, %v3076
    %3207 = vst.msk [vmem:[#allocation2 + $0xfc] sm:$0xf] %vm3143, %v3078
    %v3210 = vrot.slane %v73, 5
    %v3211 = vrot.slane %v3210, 4
    %v3212 = vrot.slane %v74, 5
    %v3213 = vsel %vm1321, %v3211, %v3212
    %v3214 = vrot.slane %v3212, 4
    %v3215 = vrot.slane %v75, 5
    %v3216 = vsel %vm1321, %v3214, %v3215
    %v3217 = vrot.slane %v127, 5
    %v3218 = vrot.slane %v3217, 4
    %v3219 = vrot.slane %v128, 5
    %v3220 = vsel %vm1321, %v3218, %v3219
    %v3221 = vrot.slane %v3219, 4
    %v3222 = vrot.slane %v129, 5
    %v3223 = vsel %vm1321, %v3221, %v3222
    %3224 = vrot.lane.b32.xlu0 %v1339, 32
    %v3225 = vpop.permute.xlu0 %3224
    %3226 = vrot.lane.b32.xlu0 %v1342, 32
    %v3227 = vpop.permute.xlu0 %3226
    %3228 = vrot.lane.b32.xlu0 %v1346, 32
    %v3229 = vpop.permute.xlu0 %3228
    %3230 = vrot.lane.b32.xlu0 %v1349, 32
    %v3231 = vpop.permute.xlu0 %3230
    %3232 = vrot.lane.b32.xlu0 %v1353, 32
    %v3233 = vpop.permute.xlu0 %3232
    %3234 = vrot.lane.b32.xlu0 %v1356, 32
    %v3235 = vpop.permute.xlu0 %3234
    %3236 = vrot.lane.b32.xlu0 %v1360, 32
    %v3237 = vpop.permute.xlu0 %3236
    %3238 = vrot.lane.b32.xlu0 %v1363, 32
    %v3239 = vpop.permute.xlu0 %3238
    %3240 = vrot.lane.b32.xlu0 %v1367, 32
    %v3241 = vpop.permute.xlu0 %3240
    %3242 = vrot.lane.b32.xlu0 %v1370, 32
    %v3243 = vpop.permute.xlu0 %3242
    %3244 = vrot.lane.b32.xlu0 %v1374, 32
    %v3245 = vpop.permute.xlu0 %3244
    %3246 = vrot.lane.b32.xlu0 %v1377, 32
    %v3247 = vpop.permute.xlu0 %3246
    %3248 = vrot.lane.b32.xlu0 %v1381, 32
    %v3249 = vpop.permute.xlu0 %3248
    %3250 = vrot.lane.b32.xlu0 %v1384, 32
    %v3251 = vpop.permute.xlu0 %3250
    %3252 = vrot.lane.b32.xlu0 %v1388, 32
    %v3253 = vpop.permute.xlu0 %3252
    %3254 = vrot.lane.b32.xlu0 %v1391, 32
    %v3255 = vpop.permute.xlu0 %3254
    %3256 = vrot.lane.b32.xlu0 %v1395, 32
    %v3257 = vpop.permute.xlu0 %3256
    %3258 = vrot.lane.b32.xlu0 %v1398, 32
    %v3259 = vpop.permute.xlu0 %3258
    %3260 = vrot.lane.b32.xlu0 %v1402, 32
    %v3261 = vpop.permute.xlu0 %3260
    %3262 = vrot.lane.b32.xlu0 %v1405, 32
    %v3263 = vpop.permute.xlu0 %3262
    %3264 = vrot.lane.b32.xlu0 %v1409, 32
    %v3265 = vpop.permute.xlu0 %3264
    %3266 = vrot.lane.b32.xlu0 %v1412, 32
    %v3267 = vpop.permute.xlu0 %3266
    %3268 = vrot.lane.b32.xlu0 %v1416, 32
    %v3269 = vpop.permute.xlu0 %3268
    %3270 = vrot.lane.b32.xlu0 %v1419, 32
    %v3271 = vpop.permute.xlu0 %3270
    %3272 = vrot.lane.b32.xlu0 %v1423, 32
    %v3273 = vpop.permute.xlu0 %3272
    %3274 = vrot.lane.b32.xlu0 %v1426, 32
    %v3275 = vpop.permute.xlu0 %3274
    %3276 = vrot.lane.b32.xlu0 %v1430, 32
    %v3277 = vpop.permute.xlu0 %3276
    %3278 = vrot.lane.b32.xlu0 %v1433, 32
    %v3279 = vpop.permute.xlu0 %3278
    %3280 = vrot.lane.b32.xlu0 %v2374, 32
    %v3281 = vpop.permute.xlu0 %3280
    %3282 = vrot.lane.b32.xlu0 %v2377, 32
    %v3283 = vpop.permute.xlu0 %3282
    %3284 = vrot.lane.b32.xlu0 %v3213, 32
    %v3285 = vpop.permute.xlu0 %3284
    %3286 = vrot.lane.b32.xlu0 %v3216, 32
    %v3287 = vpop.permute.xlu0 %3286
    %3288 = vrot.lane.b32.xlu0 %v1451, 32
    %v3289 = vpop.permute.xlu0 %3288
    %3290 = vrot.lane.b32.xlu0 %v1454, 32
    %v3291 = vpop.permute.xlu0 %3290
    %3292 = vrot.lane.b32.xlu0 %v1458, 32
    %v3293 = vpop.permute.xlu0 %3292
    %3294 = vrot.lane.b32.xlu0 %v1461, 32
    %v3295 = vpop.permute.xlu0 %3294
    %3296 = vrot.lane.b32.xlu0 %v1465, 32
    %v3297 = vpop.permute.xlu0 %3296
    %3298 = vrot.lane.b32.xlu0 %v1468, 32
    %v3299 = vpop.permute.xlu0 %3298
    %3300 = vrot.lane.b32.xlu0 %v1472, 32
    %v3301 = vpop.permute.xlu0 %3300
    %3302 = vrot.lane.b32.xlu0 %v1475, 32
    %v3303 = vpop.permute.xlu0 %3302
    %3304 = vrot.lane.b32.xlu0 %v1479, 32
    %v3305 = vpop.permute.xlu0 %3304
    %3306 = vrot.lane.b32.xlu0 %v1482, 32
    %v3307 = vpop.permute.xlu0 %3306
    %3308 = vrot.lane.b32.xlu0 %v1486, 32
    %v3309 = vpop.permute.xlu0 %3308
    %3310 = vrot.lane.b32.xlu0 %v1489, 32
    %v3311 = vpop.permute.xlu0 %3310
    %3312 = vrot.lane.b32.xlu0 %v1493, 32
    %v3313 = vpop.permute.xlu0 %3312
    %3314 = vrot.lane.b32.xlu0 %v1496, 32
    %v3315 = vpop.permute.xlu0 %3314
    %3316 = vrot.lane.b32.xlu0 %v1500, 32
    %v3317 = vpop.permute.xlu0 %3316
    %3318 = vrot.lane.b32.xlu0 %v1503, 32
    %v3319 = vpop.permute.xlu0 %3318
    %3320 = vrot.lane.b32.xlu0 %v1507, 32
    %v3321 = vpop.permute.xlu0 %3320
    %3322 = vrot.lane.b32.xlu0 %v1510, 32
    %v3323 = vpop.permute.xlu0 %3322
    %3324 = vrot.lane.b32.xlu0 %v1514, 32
    %v3325 = vpop.permute.xlu0 %3324
    %3326 = vrot.lane.b32.xlu0 %v1517, 32
    %v3327 = vpop.permute.xlu0 %3326
    %3328 = vrot.lane.b32.xlu0 %v1521, 32
    %v3329 = vpop.permute.xlu0 %3328
    %3330 = vrot.lane.b32.xlu0 %v1524, 32
    %v3331 = vpop.permute.xlu0 %3330
    %3332 = vrot.lane.b32.xlu0 %v1528, 32
    %v3333 = vpop.permute.xlu0 %3332
    %3334 = vrot.lane.b32.xlu0 %v1531, 32
    %v3335 = vpop.permute.xlu0 %3334
    %3336 = vrot.lane.b32.xlu0 %v1535, 32
    %v3337 = vpop.permute.xlu0 %3336
    %3338 = vrot.lane.b32.xlu0 %v1538, 32
    %v3339 = vpop.permute.xlu0 %3338
    %3340 = vrot.lane.b32.xlu0 %v1542, 32
    %v3341 = vpop.permute.xlu0 %3340
    %3342 = vrot.lane.b32.xlu0 %v1545, 32
    %v3343 = vpop.permute.xlu0 %3342
    %3344 = vrot.lane.b32.xlu0 %v2381, 32
    %v3345 = vpop.permute.xlu0 %3344
    %3346 = vrot.lane.b32.xlu0 %v2384, 32
    %v3347 = vpop.permute.xlu0 %3346
    %3348 = vrot.lane.b32.xlu0 %v3220, 32
    %v3349 = vpop.permute.xlu0 %3348
    %3350 = vrot.lane.b32.xlu0 %v3223, 32
    %v3351 = vpop.permute.xlu0 %3350
    %vm3416 = vcmask 290048
    %3417 = vst.msk [vmem:[#allocation2] sm:$0xf] %vm3416, %v3225
    %3418 = vst.msk [vmem:[#allocation2 + $0x4] sm:$0xf] %vm3416, %v3227
    %3419 = vst.msk [vmem:[#allocation2 + $0x8] sm:$0xf] %vm3416, %v3229
    %3420 = vst.msk [vmem:[#allocation2 + $0xc] sm:$0xf] %vm3416, %v3231
    %3421 = vst.msk [vmem:[#allocation2 + $0x10] sm:$0xf] %vm3416, %v3233
    %3422 = vst.msk [vmem:[#allocation2 + $0x14] sm:$0xf] %vm3416, %v3235
    %3423 = vst.msk [vmem:[#allocation2 + $0x18] sm:$0xf] %vm3416, %v3237
    %3424 = vst.msk [vmem:[#allocation2 + $0x1c] sm:$0xf] %vm3416, %v3239
    %3425 = vst.msk [vmem:[#allocation2 + $0x20] sm:$0xf] %vm3416, %v3241
    %3426 = vst.msk [vmem:[#allocation2 + $0x24] sm:$0xf] %vm3416, %v3243
    %3427 = vst.msk [vmem:[#allocation2 + $0x28] sm:$0xf] %vm3416, %v3245
    %3428 = vst.msk [vmem:[#allocation2 + $0x2c] sm:$0xf] %vm3416, %v3247
    %3429 = vst.msk [vmem:[#allocation2 + $0x30] sm:$0xf] %vm3416, %v3249
    %3430 = vst.msk [vmem:[#allocation2 + $0x34] sm:$0xf] %vm3416, %v3251
    %3431 = vst.msk [vmem:[#allocation2 + $0x38] sm:$0xf] %vm3416, %v3253
    %3432 = vst.msk [vmem:[#allocation2 + $0x3c] sm:$0xf] %vm3416, %v3255
    %3433 = vst.msk [vmem:[#allocation2 + $0x40] sm:$0xf] %vm3416, %v3257
    %3434 = vst.msk [vmem:[#allocation2 + $0x44] sm:$0xf] %vm3416, %v3259
    %3435 = vst.msk [vmem:[#allocation2 + $0x48] sm:$0xf] %vm3416, %v3261
    %3436 = vst.msk [vmem:[#allocation2 + $0x4c] sm:$0xf] %vm3416, %v3263
    %3437 = vst.msk [vmem:[#allocation2 + $0x50] sm:$0xf] %vm3416, %v3265
    %3438 = vst.msk [vmem:[#allocation2 + $0x54] sm:$0xf] %vm3416, %v3267
    %3439 = vst.msk [vmem:[#allocation2 + $0x58] sm:$0xf] %vm3416, %v3269
    %3440 = vst.msk [vmem:[#allocation2 + $0x5c] sm:$0xf] %vm3416, %v3271
    %3441 = vst.msk [vmem:[#allocation2 + $0x60] sm:$0xf] %vm3416, %v3273
    %3442 = vst.msk [vmem:[#allocation2 + $0x64] sm:$0xf] %vm3416, %v3275
    %3443 = vst.msk [vmem:[#allocation2 + $0x68] sm:$0xf] %vm3416, %v3277
    %3444 = vst.msk [vmem:[#allocation2 + $0x6c] sm:$0xf] %vm3416, %v3279
    %3445 = vst.msk [vmem:[#allocation2 + $0x70] sm:$0xf] %vm3416, %v3281
    %3446 = vst.msk [vmem:[#allocation2 + $0x74] sm:$0xf] %vm3416, %v3283
    %3447 = vst.msk [vmem:[#allocation2 + $0x78] sm:$0xf] %vm3416, %v3285
    %3448 = vst.msk [vmem:[#allocation2 + $0x7c] sm:$0xf] %vm3416, %v3287
    %3449 = vst.msk [vmem:[#allocation2 + $0x80] sm:$0xf] %vm3416, %v3289
    %3450 = vst.msk [vmem:[#allocation2 + $0x84] sm:$0xf] %vm3416, %v3291
    %3451 = vst.msk [vmem:[#allocation2 + $0x88] sm:$0xf] %vm3416, %v3293
    %3452 = vst.msk [vmem:[#allocation2 + $0x8c] sm:$0xf] %vm3416, %v3295
    %3453 = vst.msk [vmem:[#allocation2 + $0x90] sm:$0xf] %vm3416, %v3297
    %3454 = vst.msk [vmem:[#allocation2 + $0x94] sm:$0xf] %vm3416, %v3299
    %3455 = vst.msk [vmem:[#allocation2 + $0x98] sm:$0xf] %vm3416, %v3301
    %3456 = vst.msk [vmem:[#allocation2 + $0x9c] sm:$0xf] %vm3416, %v3303
    %3457 = vst.msk [vmem:[#allocation2 + $0xa0] sm:$0xf] %vm3416, %v3305
    %3458 = vst.msk [vmem:[#allocation2 + $0xa4] sm:$0xf] %vm3416, %v3307
    %3459 = vst.msk [vmem:[#allocation2 + $0xa8] sm:$0xf] %vm3416, %v3309
    %3460 = vst.msk [vmem:[#allocation2 + $0xac] sm:$0xf] %vm3416, %v3311
    %3461 = vst.msk [vmem:[#allocation2 + $0xb0] sm:$0xf] %vm3416, %v3313
    %3462 = vst.msk [vmem:[#allocation2 + $0xb4] sm:$0xf] %vm3416, %v3315
    %3463 = vst.msk [vmem:[#allocation2 + $0xb8] sm:$0xf] %vm3416, %v3317
    %3464 = vst.msk [vmem:[#allocation2 + $0xbc] sm:$0xf] %vm3416, %v3319
    %3465 = vst.msk [vmem:[#allocation2 + $0xc0] sm:$0xf] %vm3416, %v3321
    %3466 = vst.msk [vmem:[#allocation2 + $0xc4] sm:$0xf] %vm3416, %v3323
    %3467 = vst.msk [vmem:[#allocation2 + $0xc8] sm:$0xf] %vm3416, %v3325
    %3468 = vst.msk [vmem:[#allocation2 + $0xcc] sm:$0xf] %vm3416, %v3327
    %3469 = vst.msk [vmem:[#allocation2 + $0xd0] sm:$0xf] %vm3416, %v3329
    %3470 = vst.msk [vmem:[#allocation2 + $0xd4] sm:$0xf] %vm3416, %v3331
    %3471 = vst.msk [vmem:[#allocation2 + $0xd8] sm:$0xf] %vm3416, %v3333
    %3472 = vst.msk [vmem:[#allocation2 + $0xdc] sm:$0xf] %vm3416, %v3335
    %3473 = vst.msk [vmem:[#allocation2 + $0xe0] sm:$0xf] %vm3416, %v3337
    %3474 = vst.msk [vmem:[#allocation2 + $0xe4] sm:$0xf] %vm3416, %v3339
    %3475 = vst.msk [vmem:[#allocation2 + $0xe8] sm:$0xf] %vm3416, %v3341
    %3476 = vst.msk [vmem:[#allocation2 + $0xec] sm:$0xf] %vm3416, %v3343
    %3477 = vst.msk [vmem:[#allocation2 + $0xf0] sm:$0xf] %vm3416, %v3345
    %3478 = vst.msk [vmem:[#allocation2 + $0xf4] sm:$0xf] %vm3416, %v3347
    %3479 = vst.msk [vmem:[#allocation2 + $0xf8] sm:$0xf] %vm3416, %v3349
    %3480 = vst.msk [vmem:[#allocation2 + $0xfc] sm:$0xf] %vm3416, %v3351
    %v3481 = vld [vmem:[#allocation2] sm:$0xf]
    %v3482 = vld [vmem:[#allocation2 + $0x4] sm:$0xf]
    %v3483 = vld [vmem:[#allocation2 + $0x8] sm:$0xf]
    %v3484 = vld [vmem:[#allocation2 + $0xc] sm:$0xf]
    %v3485 = vld [vmem:[#allocation2 + $0x10] sm:$0xf]
    %v3486 = vld [vmem:[#allocation2 + $0x14] sm:$0xf]
    %v3487 = vld [vmem:[#allocation2 + $0x18] sm:$0xf]
    %v3488 = vld [vmem:[#allocation2 + $0x1c] sm:$0xf]
    %v3489 = vld [vmem:[#allocation2 + $0x20] sm:$0xf]
    %v3490 = vld [vmem:[#allocation2 + $0x24] sm:$0xf]
    %v3491 = vld [vmem:[#allocation2 + $0x28] sm:$0xf]
    %v3492 = vld [vmem:[#allocation2 + $0x2c] sm:$0xf]
    %v3493 = vld [vmem:[#allocation2 + $0x30] sm:$0xf]
    %v3494 = vld [vmem:[#allocation2 + $0x34] sm:$0xf]
    %v3495 = vld [vmem:[#allocation2 + $0x38] sm:$0xf]
    %v3496 = vld [vmem:[#allocation2 + $0x3c] sm:$0xf]
    %v3497 = vld [vmem:[#allocation2 + $0x40] sm:$0xf]
    %v3498 = vld [vmem:[#allocation2 + $0x44] sm:$0xf]
    %v3499 = vld [vmem:[#allocation2 + $0x48] sm:$0xf]
    %v3500 = vld [vmem:[#allocation2 + $0x4c] sm:$0xf]
    %v3501 = vld [vmem:[#allocation2 + $0x50] sm:$0xf]
    %v3502 = vld [vmem:[#allocation2 + $0x54] sm:$0xf]
    %v3503 = vld [vmem:[#allocation2 + $0x58] sm:$0xf]
    %v3504 = vld [vmem:[#allocation2 + $0x5c] sm:$0xf]
    %v3505 = vld [vmem:[#allocation2 + $0x60] sm:$0xf]
    %v3506 = vld [vmem:[#allocation2 + $0x64] sm:$0xf]
    %v3507 = vld [vmem:[#allocation2 + $0x68] sm:$0xf]
    %v3508 = vld [vmem:[#allocation2 + $0x6c] sm:$0xf]
    %v3509 = vld [vmem:[#allocation2 + $0x70] sm:$0xf]
    %v3510 = vld [vmem:[#allocation2 + $0x74] sm:$0xf]
    %v3511 = vld [vmem:[#allocation2 + $0x78] sm:$0xf]
    %v3512 = vld [vmem:[#allocation2 + $0x7c] sm:$0xf]
    %v3513 = vld [vmem:[#allocation2 + $0x80] sm:$0xf]
    %v3514 = vld [vmem:[#allocation2 + $0x84] sm:$0xf]
    %v3515 = vld [vmem:[#allocation2 + $0x88] sm:$0xf]
    %v3516 = vld [vmem:[#allocation2 + $0x8c] sm:$0xf]
    %v3517 = vld [vmem:[#allocation2 + $0x90] sm:$0xf]
    %v3518 = vld [vmem:[#allocation2 + $0x94] sm:$0xf]
    %v3519 = vld [vmem:[#allocation2 + $0x98] sm:$0xf]
    %v3520 = vld [vmem:[#allocation2 + $0x9c] sm:$0xf]
    %v3521 = vld [vmem:[#allocation2 + $0xa0] sm:$0xf]
    %v3522 = vld [vmem:[#allocation2 + $0xa4] sm:$0xf]
    %v3523 = vld [vmem:[#allocation2 + $0xa8] sm:$0xf]
    %v3524 = vld [vmem:[#allocation2 + $0xac] sm:$0xf]
    %v3525 = vld [vmem:[#allocation2 + $0xb0] sm:$0xf]
    %v3526 = vld [vmem:[#allocation2 + $0xb4] sm:$0xf]
    %v3527 = vld [vmem:[#allocation2 + $0xb8] sm:$0xf]
    %v3528 = vld [vmem:[#allocation2 + $0xbc] sm:$0xf]
    %v3529 = vld [vmem:[#allocation2 + $0xc0] sm:$0xf]
    %v3530 = vld [vmem:[#allocation2 + $0xc4] sm:$0xf]
    %v3531 = vld [vmem:[#allocation2 + $0xc8] sm:$0xf]
    %v3532 = vld [vmem:[#allocation2 + $0xcc] sm:$0xf]
    %v3533 = vld [vmem:[#allocation2 + $0xd0] sm:$0xf]
    %v3534 = vld [vmem:[#allocation2 + $0xd4] sm:$0xf]
    %v3535 = vld [vmem:[#allocation2 + $0xd8] sm:$0xf]
    %v3536 = vld [vmem:[#allocation2 + $0xdc] sm:$0xf]
    %v3537 = vld [vmem:[#allocation2 + $0xe0] sm:$0xf]
    %v3538 = vld [vmem:[#allocation2 + $0xe4] sm:$0xf]
    %v3539 = vld [vmem:[#allocation2 + $0xe8] sm:$0xf]
    %v3540 = vld [vmem:[#allocation2 + $0xec] sm:$0xf]
    %v3541 = vld [vmem:[#allocation2 + $0xf0] sm:$0xf]
    %v3542 = vld [vmem:[#allocation2 + $0xf4] sm:$0xf]
    %v3543 = vld [vmem:[#allocation2 + $0xf8] sm:$0xf]
    %v3544 = vld [vmem:[#allocation2 + $0xfc] sm:$0xf]
    %v3545 = vld [vmem:[%s1] sm:$0xf]
    %v3546 = vld [vmem:[%s1 + $0x4] sm:$0xf]
    %v3547 = vld [vmem:[%s1 + $0x8] sm:$0xf]
    %v3548 = vld [vmem:[%s1 + $0xc] sm:$0xf]
    %v3549 = vld [vmem:[%s1 + $0x10] sm:$0x3]
    %v3614 = vunpack.c.l.b16 %v3481
    %v3615 = vunpack.c.l.b16 %v3482
    %v3616 = vunpack.c.l.b16 %v3483
    %v3617 = vunpack.c.l.b16 %v3484
    %v3618 = vunpack.c.l.b16 %v3485
    %v3619 = vunpack.c.l.b16 %v3486
    %v3620 = vunpack.c.l.b16 %v3487
    %v3621 = vunpack.c.l.b16 %v3488
    %v3622 = vunpack.c.l.b16 %v3489
    %v3623 = vunpack.c.l.b16 %v3490
    %v3624 = vunpack.c.l.b16 %v3491
    %v3625 = vunpack.c.l.b16 %v3492
    %v3626 = vunpack.c.l.b16 %v3493
    %v3627 = vunpack.c.l.b16 %v3494
    %v3628 = vunpack.c.l.b16 %v3495
    %v3629 = vunpack.c.l.b16 %v3496
    %v3630 = vunpack.c.l.b16 %v3497
    %v3631 = vunpack.c.l.b16 %v3498
    %v3632 = vunpack.c.l.b16 %v3499
    %v3633 = vunpack.c.l.b16 %v3500
    %v3634 = vunpack.c.l.b16 %v3501
    %v3635 = vunpack.c.l.b16 %v3502
    %v3636 = vunpack.c.l.b16 %v3503
    %v3637 = vunpack.c.l.b16 %v3504
    %v3638 = vunpack.c.l.b16 %v3505
    %v3639 = vunpack.c.l.b16 %v3506
    %v3640 = vunpack.c.l.b16 %v3507
    %v3641 = vunpack.c.l.b16 %v3508
    %v3642 = vunpack.c.l.b16 %v3509
    %v3643 = vunpack.c.l.b16 %v3510
    %v3644 = vunpack.c.l.b16 %v3511
    %v3645 = vunpack.c.l.b16 %v3512
    %v3646 = vunpack.c.l.b16 %v3513
    %v3647 = vunpack.c.l.b16 %v3514
    %v3648 = vunpack.c.l.b16 %v3515
    %v3649 = vunpack.c.l.b16 %v3516
    %v3650 = vunpack.c.l.b16 %v3517
    %v3651 = vunpack.c.l.b16 %v3518
    %v3652 = vunpack.c.l.b16 %v3519
    %v3653 = vunpack.c.l.b16 %v3520
    %v3654 = vunpack.c.l.b16 %v3521
    %v3655 = vunpack.c.l.b16 %v3522
    %v3656 = vunpack.c.l.b16 %v3523
    %v3657 = vunpack.c.l.b16 %v3524
    %v3658 = vunpack.c.l.b16 %v3525
    %v3659 = vunpack.c.l.b16 %v3526
    %v3660 = vunpack.c.l.b16 %v3527
    %v3661 = vunpack.c.l.b16 %v3528
    %v3662 = vunpack.c.l.b16 %v3529
    %v3663 = vunpack.c.l.b16 %v3530
    %v3664 = vunpack.c.l.b16 %v3531
    %v3665 = vunpack.c.l.b16 %v3532
    %v3666 = vunpack.c.l.b16 %v3533
    %v3667 = vunpack.c.l.b16 %v3534
    %v3668 = vunpack.c.l.b16 %v3535
    %v3669 = vunpack.c.l.b16 %v3536
    %v3670 = vunpack.c.l.b16 %v3537
    %v3671 = vunpack.c.l.b16 %v3538
    %v3672 = vunpack.c.l.b16 %v3539
    %v3673 = vunpack.c.l.b16 %v3540
    %v3674 = vunpack.c.l.b16 %v3541
    %v3675 = vunpack.c.l.b16 %v3542
    %v3676 = vunpack.c.l.b16 %v3543
    %v3677 = vunpack.c.l.b16 %v3544
    %v3678 = vpack.c.b16 %v3615, %v3614
    %v3679 = vpack.c.b16 %v3617, %v3616
    %v3680 = vpack.c.b16 %v3619, %v3618
    %v3681 = vpack.c.b16 %v3621, %v3620
    %v3682 = vpack.c.b16 %v3623, %v3622
    %v3683 = vpack.c.b16 %v3625, %v3624
    %v3684 = vpack.c.b16 %v3627, %v3626
    %v3685 = vpack.c.b16 %v3629, %v3628
    %v3686 = vpack.c.b16 %v3631, %v3630
    %v3687 = vpack.c.b16 %v3633, %v3632
    %v3688 = vpack.c.b16 %v3635, %v3634
    %v3689 = vpack.c.b16 %v3637, %v3636
    %v3690 = vpack.c.b16 %v3639, %v3638
    %v3691 = vpack.c.b16 %v3641, %v3640
    %v3692 = vpack.c.b16 %v3643, %v3642
    %v3693 = vpack.c.b16 %v3645, %v3644
    %v3694 = vpack.c.b16 %v3647, %v3646
    %v3695 = vpack.c.b16 %v3649, %v3648
    %v3696 = vpack.c.b16 %v3651, %v3650
    %v3697 = vpack.c.b16 %v3653, %v3652
    %v3698 = vpack.c.b16 %v3655, %v3654
    %v3699 = vpack.c.b16 %v3657, %v3656
    %v3700 = vpack.c.b16 %v3659, %v3658
    %v3701 = vpack.c.b16 %v3661, %v3660
    %v3702 = vpack.c.b16 %v3663, %v3662
    %v3703 = vpack.c.b16 %v3665, %v3664
    %v3704 = vpack.c.b16 %v3667, %v3666
    %v3705 = vpack.c.b16 %v3669, %v3668
    %v3706 = vpack.c.b16 %v3671, %v3670
    %v3707 = vpack.c.b16 %v3673, %v3672
    %v3708 = vpack.c.b16 %v3675, %v3674
    %v3709 = vpack.c.b16 %v3677, %v3676
    %v3715 = vunpack.c.l.b16 %v3545
    %v3716 = vunpack.c.l.b16 %v3546
    %v3717 = vunpack.c.l.b16 %v3547
    %v3718 = vunpack.c.l.b16 %v3548
    %v3719 = vunpack.c.l.b16 %v3549
    %v3720 = vpack.c.b16 %v3716, %v3715
    %v3721 = vpack.c.b16 %v3718, %v3717
    %v3722 = vpack.c.b16 %v3719, %v3719
    %vm3725 = vcmask 293888
    %v3727 = vsel %vm3725, %v3678, 0
    %v3730 = vsel %vm3725, %v3679, 0
    %v3733 = vsel %vm3725, %v3680, 0
    %v3736 = vsel %vm3725, %v3681, 0
    %v3739 = vsel %vm3725, %v3682, 0
    %v3742 = vsel %vm3725, %v3683, 0
    %v3745 = vsel %vm3725, %v3684, 0
    %v3748 = vsel %vm3725, %v3685, 0
    %v3751 = vsel %vm3725, %v3686, 0
    %v3754 = vsel %vm3725, %v3687, 0
    %v3757 = vsel %vm3725, %v3688, 0
    %v3760 = vsel %vm3725, %v3689, 0
    %v3763 = vsel %vm3725, %v3690, 0
    %v3766 = vsel %vm3725, %v3691, 0
    %v3769 = vsel %vm3725, %v3692, 0
    %v3772 = vsel %vm3725, %v3693, 0
    %v3775 = vsel %vm3725, %v3694, 0
    %v3778 = vsel %vm3725, %v3695, 0
    %v3781 = vsel %vm3725, %v3696, 0
    %v3784 = vsel %vm3725, %v3697, 0
    %v3787 = vsel %vm3725, %v3698, 0
    %v3790 = vsel %vm3725, %v3699, 0
    %v3793 = vsel %vm3725, %v3700, 0
    %v3796 = vsel %vm3725, %v3701, 0
    %v3799 = vsel %vm3725, %v3702, 0
    %v3802 = vsel %vm3725, %v3703, 0
    %v3805 = vsel %vm3725, %v3704, 0
    %v3808 = vsel %vm3725, %v3705, 0
    %v3811 = vsel %vm3725, %v3706, 0
    %v3814 = vsel %vm3725, %v3707, 0
    %v3817 = vsel %vm3725, %v3708, 0
    %v3820 = vsel %vm3725, %v3709, 0
    %vm3822 = vcmask 1041408
    %v3824 = vsel %vm3822, %v3722, 0
    %3826 = vmatprep.subr.bf16.mxu0 0
    %3827 = vmatpush1.bf16.msra.mxu0 0
    %3828 = vmatprep.subr.bf16.mxu0 0
    %3829 = vmatpush1.bf16.msra.mxu0 0
    %3830 = vmatprep.subr.bf16.mxu0 0
    %3831 = vmatpush1.bf16.msra.mxu0 0
    %3832 = vmatprep.subr.bf16.mxu0 0
    %3833 = vmatpush1.bf16.msra.mxu0 0
    %3834 = vmatprep.subr.bf16.mxu0 0
    %3835 = vmatpush1.bf16.msra.mxu0 0
    %3836 = vmatprep.subr.bf16.mxu0 0
    %3837 = vmatpush1.bf16.msra.mxu0 %v3824
    %3838 = vmatprep.subr.bf16.mxu0 0
    %3839 = vmatpush1.bf16.msra.mxu0 %v3721
    %3840 = vmatprep.subr.bf16.mxu0 0
    %3841 = vmatpush1.bf16.msra.mxu0 %v3720
    %3842 = vmatprep.subr.bf16.mxu0 0
    %3843 = vmatpush2.bf16.msra.mxu0 0
    %3844 = vmatprep.subr.bf16.mxu0 0
    %3845 = vmatpush2.bf16.msra.mxu0 0
    %3846 = vmatprep.subr.bf16.mxu0 0
    %3847 = vmatpush2.bf16.msra.mxu0 0
    %3848 = vmatprep.subr.bf16.mxu0 0
    %3849 = vmatpush2.bf16.msra.mxu0 0
    %3850 = vmatprep.subr.bf16.mxu0 0
    %3851 = vmatpush2.bf16.msra.mxu0 0
    %3852 = vmatprep.subr.bf16.mxu0 0
    %3853 = vmatpush2.bf16.msra.mxu0 0
    %3854 = vmatprep.subr.bf16.mxu0 0
    %3855 = vmatpush2.bf16.msra.mxu0 0
    %3856 = vmatprep.subr.bf16.mxu0 0
    %3857 = vmatpush2.bf16.msra.mxu0 0
    %3858 = vmatprep.mubr.bf16.mxu0 0
    %3859 = vmatmul.mubr.bf16.gmra.mxu0 %v3727
    %v3860 = vpop.f32.mrf.mxu0
    %v3861 = vadd.f32 0.0, %v3860
    %v3862 = vpop.f32.mrf.mxu0
    %v3863 = vpop.f32.mrf.mxu0
    %v3864 = vadd.f32 0.0, %v3863
    %v3865 = vpop.f32.mrf.mxu0
    %3866 = vmatprep.mubr.bf16.mxu0 0
    %3867 = vmatmul.mubr.bf16.gmra.mxu0 %v3730
    %v3868 = vpop.f32.mrf.mxu0
    %v3869 = vadd.f32 0.0, %v3868
    %v3870 = vpop.f32.mrf.mxu0
    %v3871 = vpop.f32.mrf.mxu0
    %v3872 = vadd.f32 0.0, %v3871
    %v3873 = vpop.f32.mrf.mxu0
    %3874 = vmatprep.mubr.bf16.mxu0 0
    %3875 = vmatmul.mubr.bf16.gmra.mxu0 %v3733
    %v3876 = vpop.f32.mrf.mxu0
    %v3877 = vadd.f32 0.0, %v3876
    %v3878 = vpop.f32.mrf.mxu0
    %v3879 = vpop.f32.mrf.mxu0
    %v3880 = vadd.f32 0.0, %v3879
    %v3881 = vpop.f32.mrf.mxu0
    %3882 = vmatprep.mubr.bf16.mxu0 0
    %3883 = vmatmul.mubr.bf16.gmra.mxu0 %v3736
    %v3884 = vpop.f32.mrf.mxu0
    %v3885 = vadd.f32 0.0, %v3884
    %v3886 = vpop.f32.mrf.mxu0
    %v3887 = vpop.f32.mrf.mxu0
    %v3888 = vadd.f32 0.0, %v3887
    %v3889 = vpop.f32.mrf.mxu0
    %3890 = vmatprep.mubr.bf16.mxu0 0
    %3891 = vmatmul.mubr.bf16.gmra.mxu0 %v3739
    %v3892 = vpop.f32.mrf.mxu0
    %v3893 = vadd.f32 0.0, %v3892
    %v3894 = vpop.f32.mrf.mxu0
    %v3895 = vpop.f32.mrf.mxu0
    %v3896 = vadd.f32 0.0, %v3895
    %v3897 = vpop.f32.mrf.mxu0
    %3898 = vmatprep.mubr.bf16.mxu0 0
    %3899 = vmatmul.mubr.bf16.gmra.mxu0 %v3742
    %v3900 = vpop.f32.mrf.mxu0
    %v3901 = vadd.f32 0.0, %v3900
    %v3902 = vpop.f32.mrf.mxu0
    %v3903 = vpop.f32.mrf.mxu0
    %v3904 = vadd.f32 0.0, %v3903
    %v3905 = vpop.f32.mrf.mxu0
    %3906 = vmatprep.mubr.bf16.mxu0 0
    %3907 = vmatmul.mubr.bf16.gmra.mxu0 %v3745
    %v3908 = vpop.f32.mrf.mxu0
    %v3909 = vadd.f32 0.0, %v3908
    %v3910 = vpop.f32.mrf.mxu0
    %v3911 = vpop.f32.mrf.mxu0
    %v3912 = vadd.f32 0.0, %v3911
    %v3913 = vpop.f32.mrf.mxu0
    %3914 = vmatprep.mubr.bf16.mxu0 0
    %3915 = vmatmul.mubr.bf16.gmra.mxu0 %v3748
    %v3916 = vpop.f32.mrf.mxu0
    %v3917 = vadd.f32 0.0, %v3916
    %v3918 = vpop.f32.mrf.mxu0
    %v3919 = vpop.f32.mrf.mxu0
    %v3920 = vadd.f32 0.0, %v3919
    %v3921 = vpop.f32.mrf.mxu0
    %3922 = vmatprep.mubr.bf16.mxu0 0
    %3923 = vmatmul.mubr.bf16.gmra.mxu0 %v3751
    %v3924 = vpop.f32.mrf.mxu0
    %v3925 = vadd.f32 0.0, %v3924
    %v3926 = vpop.f32.mrf.mxu0
    %v3927 = vpop.f32.mrf.mxu0
    %v3928 = vadd.f32 0.0, %v3927
    %v3929 = vpop.f32.mrf.mxu0
    %3930 = vmatprep.mubr.bf16.mxu0 0
    %3931 = vmatmul.mubr.bf16.gmra.mxu0 %v3754
    %v3932 = vpop.f32.mrf.mxu0
    %v3933 = vadd.f32 0.0, %v3932
    %v3934 = vpop.f32.mrf.mxu0
    %v3935 = vpop.f32.mrf.mxu0
    %v3936 = vadd.f32 0.0, %v3935
    %v3937 = vpop.f32.mrf.mxu0
    %3938 = vmatprep.mubr.bf16.mxu0 0
    %3939 = vmatmul.mubr.bf16.gmra.mxu0 %v3757
    %v3940 = vpop.f32.mrf.mxu0
    %v3941 = vadd.f32 0.0, %v3940
    %v3942 = vpop.f32.mrf.mxu0
    %v3943 = vpop.f32.mrf.mxu0
    %v3944 = vadd.f32 0.0, %v3943
    %v3945 = vpop.f32.mrf.mxu0
    %3946 = vmatprep.mubr.bf16.mxu0 0
    %3947 = vmatmul.mubr.bf16.gmra.mxu0 %v3760
    %v3948 = vpop.f32.mrf.mxu0
    %v3949 = vadd.f32 0.0, %v3948
    %v3950 = vpop.f32.mrf.mxu0
    %v3951 = vpop.f32.mrf.mxu0
    %v3952 = vadd.f32 0.0, %v3951
    %v3953 = vpop.f32.mrf.mxu0
    %3954 = vmatprep.mubr.bf16.mxu0 0
    %3955 = vmatmul.mubr.bf16.gmra.mxu0 %v3763
    %v3956 = vpop.f32.mrf.mxu0
    %v3957 = vadd.f32 0.0, %v3956
    %v3958 = vpop.f32.mrf.mxu0
    %v3959 = vpop.f32.mrf.mxu0
    %v3960 = vadd.f32 0.0, %v3959
    %v3961 = vpop.f32.mrf.mxu0
    %3962 = vmatprep.mubr.bf16.mxu0 0
    %3963 = vmatmul.mubr.bf16.gmra.mxu0 %v3766
    %v3964 = vpop.f32.mrf.mxu0
    %v3965 = vadd.f32 0.0, %v3964
    %v3966 = vpop.f32.mrf.mxu0
    %v3967 = vpop.f32.mrf.mxu0
    %v3968 = vadd.f32 0.0, %v3967
    %v3969 = vpop.f32.mrf.mxu0
    %3970 = vmatprep.mubr.bf16.mxu0 0
    %3971 = vmatmul.mubr.bf16.gmra.mxu0 %v3769
    %v3972 = vpop.f32.mrf.mxu0
    %v3973 = vadd.f32 0.0, %v3972
    %v3974 = vpop.f32.mrf.mxu0
    %v3975 = vpop.f32.mrf.mxu0
    %v3976 = vadd.f32 0.0, %v3975
    %v3977 = vpop.f32.mrf.mxu0
    %3978 = vmatprep.mubr.bf16.mxu0 0
    %3979 = vmatmul.mubr.bf16.gmra.mxu0 %v3772
    %v3980 = vpop.f32.mrf.mxu0
    %v3981 = vadd.f32 0.0, %v3980
    %v3982 = vpop.f32.mrf.mxu0
    %v3983 = vpop.f32.mrf.mxu0
    %v3984 = vadd.f32 0.0, %v3983
    %v3985 = vpop.f32.mrf.mxu0
    %3986 = vmatprep.mubr.bf16.mxu0 0
    %3987 = vmatmul.mubr.bf16.gmra.mxu0 %v3775
    %v3988 = vpop.f32.mrf.mxu0
    %v3989 = vadd.f32 0.0, %v3988
    %v3990 = vpop.f32.mrf.mxu0
    %v3991 = vpop.f32.mrf.mxu0
    %v3992 = vadd.f32 0.0, %v3991
    %v3993 = vpop.f32.mrf.mxu0
    %3994 = vmatprep.mubr.bf16.mxu0 0
    %3995 = vmatmul.mubr.bf16.gmra.mxu0 %v3778
    %v3996 = vpop.f32.mrf.mxu0
    %v3997 = vadd.f32 0.0, %v3996
    %v3998 = vpop.f32.mrf.mxu0
    %v3999 = vpop.f32.mrf.mxu0
    %v4000 = vadd.f32 0.0, %v3999
    %v4001 = vpop.f32.mrf.mxu0
    %4002 = vmatprep.mubr.bf16.mxu0 0
    %4003 = vmatmul.mubr.bf16.gmra.mxu0 %v3781
    %v4004 = vpop.f32.mrf.mxu0
    %v4005 = vadd.f32 0.0, %v4004
    %v4006 = vpop.f32.mrf.mxu0
    %v4007 = vpop.f32.mrf.mxu0
    %v4008 = vadd.f32 0.0, %v4007
    %v4009 = vpop.f32.mrf.mxu0
    %4010 = vmatprep.mubr.bf16.mxu0 0
    %4011 = vmatmul.mubr.bf16.gmra.mxu0 %v3784
    %v4012 = vpop.f32.mrf.mxu0
    %v4013 = vadd.f32 0.0, %v4012
    %v4014 = vpop.f32.mrf.mxu0
    %v4015 = vpop.f32.mrf.mxu0
    %v4016 = vadd.f32 0.0, %v4015
    %v4017 = vpop.f32.mrf.mxu0
    %4018 = vmatprep.mubr.bf16.mxu0 0
    %4019 = vmatmul.mubr.bf16.gmra.mxu0 %v3787
    %v4020 = vpop.f32.mrf.mxu0
    %v4021 = vadd.f32 0.0, %v4020
    %v4022 = vpop.f32.mrf.mxu0
    %v4023 = vpop.f32.mrf.mxu0
    %v4024 = vadd.f32 0.0, %v4023
    %v4025 = vpop.f32.mrf.mxu0
    %4026 = vmatprep.mubr.bf16.mxu0 0
    %4027 = vmatmul.mubr.bf16.gmra.mxu0 %v3790
    %v4028 = vpop.f32.mrf.mxu0
    %v4029 = vadd.f32 0.0, %v4028
    %v4030 = vpop.f32.mrf.mxu0
    %v4031 = vpop.f32.mrf.mxu0
    %v4032 = vadd.f32 0.0, %v4031
    %v4033 = vpop.f32.mrf.mxu0
    %4034 = vmatprep.mubr.bf16.mxu0 0
    %4035 = vmatmul.mubr.bf16.gmra.mxu0 %v3793
    %v4036 = vpop.f32.mrf.mxu0
    %v4037 = vadd.f32 0.0, %v4036
    %v4038 = vpop.f32.mrf.mxu0
    %v4039 = vpop.f32.mrf.mxu0
    %v4040 = vadd.f32 0.0, %v4039
    %v4041 = vpop.f32.mrf.mxu0
    %4042 = vmatprep.mubr.bf16.mxu0 0
    %4043 = vmatmul.mubr.bf16.gmra.mxu0 %v3796
    %v4044 = vpop.f32.mrf.mxu0
    %v4045 = vadd.f32 0.0, %v4044
    %v4046 = vpop.f32.mrf.mxu0
    %v4047 = vpop.f32.mrf.mxu0
    %v4048 = vadd.f32 0.0, %v4047
    %v4049 = vpop.f32.mrf.mxu0
    %4050 = vmatprep.mubr.bf16.mxu0 0
    %4051 = vmatmul.mubr.bf16.gmra.mxu0 %v3799
    %v4052 = vpop.f32.mrf.mxu0
    %v4053 = vadd.f32 0.0, %v4052
    %v4054 = vpop.f32.mrf.mxu0
    %v4055 = vpop.f32.mrf.mxu0
    %v4056 = vadd.f32 0.0, %v4055
    %v4057 = vpop.f32.mrf.mxu0
    %4058 = vmatprep.mubr.bf16.mxu0 0
    %4059 = vmatmul.mubr.bf16.gmra.mxu0 %v3802
    %v4060 = vpop.f32.mrf.mxu0
    %v4061 = vadd.f32 0.0, %v4060
    %v4062 = vpop.f32.mrf.mxu0
    %v4063 = vpop.f32.mrf.mxu0
    %v4064 = vadd.f32 0.0, %v4063
    %v4065 = vpop.f32.mrf.mxu0
    %4066 = vmatprep.mubr.bf16.mxu0 0
    %4067 = vmatmul.mubr.bf16.gmra.mxu0 %v3805
    %v4068 = vpop.f32.mrf.mxu0
    %v4069 = vadd.f32 0.0, %v4068
    %v4070 = vpop.f32.mrf.mxu0
    %v4071 = vpop.f32.mrf.mxu0
    %v4072 = vadd.f32 0.0, %v4071
    %v4073 = vpop.f32.mrf.mxu0
    %4074 = vmatprep.mubr.bf16.mxu0 0
    %4075 = vmatmul.mubr.bf16.gmra.mxu0 %v3808
    %v4076 = vpop.f32.mrf.mxu0
    %v4077 = vadd.f32 0.0, %v4076
    %v4078 = vpop.f32.mrf.mxu0
    %v4079 = vpop.f32.mrf.mxu0
    %v4080 = vadd.f32 0.0, %v4079
    %v4081 = vpop.f32.mrf.mxu0
    %4082 = vmatprep.mubr.bf16.mxu0 0
    %4083 = vmatmul.mubr.bf16.gmra.mxu0 %v3811
    %v4084 = vpop.f32.mrf.mxu0
    %v4085 = vadd.f32 0.0, %v4084
    %v4086 = vpop.f32.mrf.mxu0
    %v4087 = vpop.f32.mrf.mxu0
    %v4088 = vadd.f32 0.0, %v4087
    %v4089 = vpop.f32.mrf.mxu0
    %4090 = vmatprep.mubr.bf16.mxu0 0
    %4091 = vmatmul.mubr.bf16.gmra.mxu0 %v3814
    %v4092 = vpop.f32.mrf.mxu0
    %v4093 = vadd.f32 0.0, %v4092
    %v4094 = vpop.f32.mrf.mxu0
    %v4095 = vpop.f32.mrf.mxu0
    %v4096 = vadd.f32 0.0, %v4095
    %v4097 = vpop.f32.mrf.mxu0
    %4098 = vmatprep.mubr.bf16.mxu0 0
    %4099 = vmatmul.mubr.bf16.gmra.mxu0 %v3817
    %v4100 = vpop.f32.mrf.mxu0
    %v4101 = vadd.f32 0.0, %v4100
    %v4102 = vpop.f32.mrf.mxu0
    %v4103 = vpop.f32.mrf.mxu0
    %v4104 = vadd.f32 0.0, %v4103
    %v4105 = vpop.f32.mrf.mxu0
    %4106 = vmatprep.mubr.bf16.mxu0 0
    %4107 = vmatmul.mubr.bf16.gmra.mxu0 %v3820
    %v4108 = vpop.f32.mrf.mxu0
    %v4109 = vadd.f32 0.0, %v4108
    %v4110 = vpop.f32.mrf.mxu0
    %v4111 = vpop.f32.mrf.mxu0
    %v4112 = vadd.f32 0.0, %v4111
    %v4113 = vpop.f32.mrf.mxu0
    %4114 = vdwg.mxu0
    %v4115 = vld [vmem:[%s2] sm:$0x1]
    %v4117 = vlaneseq
    %v4118 = vshrl.u32 %v4117, 7
    %v4119 = vsub.s32 0, %v4118
    %v4120 = vrot.slane %v4115, %v4119
    %v4122 = vmul.f32 %v3861, %v4120
    %v4123 = vmul.f32 %v3864, %v4120
    %v4124 = vmul.f32 %v3869, %v4120
    %v4125 = vmul.f32 %v3872, %v4120
    %v4126 = vmul.f32 %v3877, %v4120
    %v4127 = vmul.f32 %v3880, %v4120
    %v4128 = vmul.f32 %v3885, %v4120
    %v4129 = vmul.f32 %v3888, %v4120
    %v4130 = vmul.f32 %v3893, %v4120
    %v4131 = vmul.f32 %v3896, %v4120
    %v4132 = vmul.f32 %v3901, %v4120
    %v4133 = vmul.f32 %v3904, %v4120
    %v4134 = vmul.f32 %v3909, %v4120
    %v4135 = vmul.f32 %v3912, %v4120
    %v4136 = vmul.f32 %v3917, %v4120
    %v4137 = vmul.f32 %v3920, %v4120
    %v4138 = vmul.f32 %v3925, %v4120
    %v4139 = vmul.f32 %v3928, %v4120
    %v4140 = vmul.f32 %v3933, %v4120
    %v4141 = vmul.f32 %v3936, %v4120
    %v4142 = vmul.f32 %v3941, %v4120
    %v4143 = vmul.f32 %v3944, %v4120
    %v4144 = vmul.f32 %v3949, %v4120
    %v4145 = vmul.f32 %v3952, %v4120
    %v4146 = vmul.f32 %v3957, %v4120
    %v4147 = vmul.f32 %v3960, %v4120
    %v4148 = vmul.f32 %v3965, %v4120
    %v4149 = vmul.f32 %v3968, %v4120
    %v4150 = vmul.f32 %v3973, %v4120
    %v4151 = vmul.f32 %v3976, %v4120
    %v4152 = vmul.f32 %v3981, %v4120
    %v4153 = vmul.f32 %v3984, %v4120
    %v4154 = vmul.f32 %v3989, %v4120
    %v4155 = vmul.f32 %v3992, %v4120
    %v4156 = vmul.f32 %v3997, %v4120
    %v4157 = vmul.f32 %v4000, %v4120
    %v4158 = vmul.f32 %v4005, %v4120
    %v4159 = vmul.f32 %v4008, %v4120
    %v4160 = vmul.f32 %v4013, %v4120
    %v4161 = vmul.f32 %v4016, %v4120
    %v4162 = vmul.f32 %v4021, %v4120
    %v4163 = vmul.f32 %v4024, %v4120
    %v4164 = vmul.f32 %v4029, %v4120
    %v4165 = vmul.f32 %v4032, %v4120
    %v4166 = vmul.f32 %v4037, %v4120
    %v4167 = vmul.f32 %v4040, %v4120
    %v4168 = vmul.f32 %v4045, %v4120
    %v4169 = vmul.f32 %v4048, %v4120
    %v4170 = vmul.f32 %v4053, %v4120
    %v4171 = vmul.f32 %v4056, %v4120
    %v4172 = vmul.f32 %v4061, %v4120
    %v4173 = vmul.f32 %v4064, %v4120
    %v4174 = vmul.f32 %v4069, %v4120
    %v4175 = vmul.f32 %v4072, %v4120
    %v4176 = vmul.f32 %v4077, %v4120
    %v4177 = vmul.f32 %v4080, %v4120
    %v4178 = vmul.f32 %v4085, %v4120
    %v4179 = vmul.f32 %v4088, %v4120
    %v4180 = vmul.f32 %v4093, %v4120
    %v4181 = vmul.f32 %v4096, %v4120
    %v4182 = vmul.f32 %v4101, %v4120
    %v4183 = vmul.f32 %v4104, %v4120
    %v4184 = vmul.f32 %v4109, %v4120
    %v4185 = vmul.f32 %v4112, %v4120
    %v4186 = vld [vmem:[%s3] sm:$0x1]
    %v4188 = vlaneseq
    %v4189 = vshrl.u32 %v4188, 7
    %v4190 = vsub.s32 0, %v4189
    %v4191 = vrot.slane %v4186, %v4190
    %v4193 = vadd.f32 %v4122, %v4191
    %v4194 = vadd.f32 %v4123, %v4191
    %v4195 = vadd.f32 %v4124, %v4191
    %v4196 = vadd.f32 %v4125, %v4191
    %v4197 = vadd.f32 %v4126, %v4191
    %v4198 = vadd.f32 %v4127, %v4191
    %v4199 = vadd.f32 %v4128, %v4191
    %v4200 = vadd.f32 %v4129, %v4191
    %v4201 = vadd.f32 %v4130, %v4191
    %v4202 = vadd.f32 %v4131, %v4191
    %v4203 = vadd.f32 %v4132, %v4191
    %v4204 = vadd.f32 %v4133, %v4191
    %v4205 = vadd.f32 %v4134, %v4191
    %v4206 = vadd.f32 %v4135, %v4191
    %v4207 = vadd.f32 %v4136, %v4191
    %v4208 = vadd.f32 %v4137, %v4191
    %v4209 = vadd.f32 %v4138, %v4191
    %v4210 = vadd.f32 %v4139, %v4191
    %v4211 = vadd.f32 %v4140, %v4191
    %v4212 = vadd.f32 %v4141, %v4191
    %v4213 = vadd.f32 %v4142, %v4191
    %v4214 = vadd.f32 %v4143, %v4191
    %v4215 = vadd.f32 %v4144, %v4191
    %v4216 = vadd.f32 %v4145, %v4191
    %v4217 = vadd.f32 %v4146, %v4191
    %v4218 = vadd.f32 %v4147, %v4191
    %v4219 = vadd.f32 %v4148, %v4191
    %v4220 = vadd.f32 %v4149, %v4191
    %v4221 = vadd.f32 %v4150, %v4191
    %v4222 = vadd.f32 %v4151, %v4191
    %v4223 = vadd.f32 %v4152, %v4191
    %v4224 = vadd.f32 %v4153, %v4191
    %v4225 = vadd.f32 %v4154, %v4191
    %v4226 = vadd.f32 %v4155, %v4191
    %v4227 = vadd.f32 %v4156, %v4191
    %v4228 = vadd.f32 %v4157, %v4191
    %v4229 = vadd.f32 %v4158, %v4191
    %v4230 = vadd.f32 %v4159, %v4191
    %v4231 = vadd.f32 %v4160, %v4191
    %v4232 = vadd.f32 %v4161, %v4191
    %v4233 = vadd.f32 %v4162, %v4191
    %v4234 = vadd.f32 %v4163, %v4191
    %v4235 = vadd.f32 %v4164, %v4191
    %v4236 = vadd.f32 %v4165, %v4191
    %v4237 = vadd.f32 %v4166, %v4191
    %v4238 = vadd.f32 %v4167, %v4191
    %v4239 = vadd.f32 %v4168, %v4191
    %v4240 = vadd.f32 %v4169, %v4191
    %v4241 = vadd.f32 %v4170, %v4191
    %v4242 = vadd.f32 %v4171, %v4191
    %v4243 = vadd.f32 %v4172, %v4191
    %v4244 = vadd.f32 %v4173, %v4191
    %v4245 = vadd.f32 %v4174, %v4191
    %v4246 = vadd.f32 %v4175, %v4191
    %v4247 = vadd.f32 %v4176, %v4191
    %v4248 = vadd.f32 %v4177, %v4191
    %v4249 = vadd.f32 %v4178, %v4191
    %v4250 = vadd.f32 %v4179, %v4191
    %v4251 = vadd.f32 %v4180, %v4191
    %v4252 = vadd.f32 %v4181, %v4191
    %v4253 = vadd.f32 %v4182, %v4191
    %v4254 = vadd.f32 %v4183, %v4191
    %v4255 = vadd.f32 %v4184, %v4191
    %v4256 = vadd.f32 %v4185, %v4191
    %v4257 = vmax.f32 %v4193, 0.0
    %v4258 = vmax.f32 %v4194, 0.0
    %v4259 = vmax.f32 %v4195, 0.0
    %v4260 = vmax.f32 %v4196, 0.0
    %v4261 = vmax.f32 %v4197, 0.0
    %v4262 = vmax.f32 %v4198, 0.0
    %v4263 = vmax.f32 %v4199, 0.0
    %v4264 = vmax.f32 %v4200, 0.0
    %v4265 = vmax.f32 %v4201, 0.0
    %v4266 = vmax.f32 %v4202, 0.0
    %v4267 = vmax.f32 %v4203, 0.0
    %v4268 = vmax.f32 %v4204, 0.0
    %v4269 = vmax.f32 %v4205, 0.0
    %v4270 = vmax.f32 %v4206, 0.0
    %v4271 = vmax.f32 %v4207, 0.0
    %v4272 = vmax.f32 %v4208, 0.0
    %v4273 = vmax.f32 %v4209, 0.0
    %v4274 = vmax.f32 %v4210, 0.0
    %v4275 = vmax.f32 %v4211, 0.0
    %v4276 = vmax.f32 %v4212, 0.0
    %v4277 = vmax.f32 %v4213, 0.0
    %v4278 = vmax.f32 %v4214, 0.0
    %v4279 = vmax.f32 %v4215, 0.0
    %v4280 = vmax.f32 %v4216, 0.0
    %v4281 = vmax.f32 %v4217, 0.0
    %v4282 = vmax.f32 %v4218, 0.0
    %v4283 = vmax.f32 %v4219, 0.0
    %v4284 = vmax.f32 %v4220, 0.0
    %v4285 = vmax.f32 %v4221, 0.0
    %v4286 = vmax.f32 %v4222, 0.0
    %v4287 = vmax.f32 %v4223, 0.0
    %v4288 = vmax.f32 %v4224, 0.0
    %v4289 = vmax.f32 %v4225, 0.0
    %v4290 = vmax.f32 %v4226, 0.0
    %v4291 = vmax.f32 %v4227, 0.0
    %v4292 = vmax.f32 %v4228, 0.0
    %v4293 = vmax.f32 %v4229, 0.0
    %v4294 = vmax.f32 %v4230, 0.0
    %v4295 = vmax.f32 %v4231, 0.0
    %v4296 = vmax.f32 %v4232, 0.0
    %v4297 = vmax.f32 %v4233, 0.0
    %v4298 = vmax.f32 %v4234, 0.0
    %v4299 = vmax.f32 %v4235, 0.0
    %v4300 = vmax.f32 %v4236, 0.0
    %v4301 = vmax.f32 %v4237, 0.0
    %v4302 = vmax.f32 %v4238, 0.0
    %v4303 = vmax.f32 %v4239, 0.0
    %v4304 = vmax.f32 %v4240, 0.0
    %v4305 = vmax.f32 %v4241, 0.0
    %v4306 = vmax.f32 %v4242, 0.0
    %v4307 = vmax.f32 %v4243, 0.0
    %v4308 = vmax.f32 %v4244, 0.0
    %v4309 = vmax.f32 %v4245, 0.0
    %v4310 = vmax.f32 %v4246, 0.0
    %v4311 = vmax.f32 %v4247, 0.0
    %v4312 = vmax.f32 %v4248, 0.0
    %v4313 = vmax.f32 %v4249, 0.0
    %v4314 = vmax.f32 %v4250, 0.0
    %v4315 = vmax.f32 %v4251, 0.0
    %v4316 = vmax.f32 %v4252, 0.0
    %v4317 = vmax.f32 %v4253, 0.0
    %v4318 = vmax.f32 %v4254, 0.0
    %v4319 = vmax.f32 %v4255, 0.0
    %v4320 = vmax.f32 %v4256, 0.0
    %v4321 = vpack.c.bf16 %v4258, %v4257
    %v4322 = vpack.c.bf16 %v4260, %v4259
    %v4323 = vpack.c.bf16 %v4262, %v4261
    %v4324 = vpack.c.bf16 %v4264, %v4263
    %v4325 = vpack.c.bf16 %v4266, %v4265
    %v4326 = vpack.c.bf16 %v4268, %v4267
    %v4327 = vpack.c.bf16 %v4270, %v4269
    %v4328 = vpack.c.bf16 %v4272, %v4271
    %v4329 = vpack.c.bf16 %v4274, %v4273
    %v4330 = vpack.c.bf16 %v4276, %v4275
    %v4331 = vpack.c.bf16 %v4278, %v4277
    %v4332 = vpack.c.bf16 %v4280, %v4279
    %v4333 = vpack.c.bf16 %v4282, %v4281
    %v4334 = vpack.c.bf16 %v4284, %v4283
    %v4335 = vpack.c.bf16 %v4286, %v4285
    %v4336 = vpack.c.bf16 %v4288, %v4287
    %v4337 = vpack.c.bf16 %v4290, %v4289
    %v4338 = vpack.c.bf16 %v4292, %v4291
    %v4339 = vpack.c.bf16 %v4294, %v4293
    %v4340 = vpack.c.bf16 %v4296, %v4295
    %v4341 = vpack.c.bf16 %v4298, %v4297
    %v4342 = vpack.c.bf16 %v4300, %v4299
    %v4343 = vpack.c.bf16 %v4302, %v4301
    %v4344 = vpack.c.bf16 %v4304, %v4303
    %v4345 = vpack.c.bf16 %v4306, %v4305
    %v4346 = vpack.c.bf16 %v4308, %v4307
    %v4347 = vpack.c.bf16 %v4310, %v4309
    %v4348 = vpack.c.bf16 %v4312, %v4311
    %v4349 = vpack.c.bf16 %v4314, %v4313
    %v4350 = vpack.c.bf16 %v4316, %v4315
    %v4351 = vpack.c.bf16 %v4318, %v4317
    %v4352 = vpack.c.bf16 %v4320, %v4319
    %v4353 = vld [vmem:[%s4] sm:$0xf]
    %v4354 = vld [vmem:[%s4 + $0x4] sm:$0xf]
    %v4355 = vld [vmem:[%s4 + $0x8] sm:$0xf]
    %v4356 = vld [vmem:[%s4 + $0xc] sm:$0xf]
    %v4361 = vunpack.c.l.b16 %v4353
    %v4362 = vunpack.c.l.b16 %v4354
    %v4363 = vunpack.c.l.b16 %v4355
    %v4364 = vunpack.c.l.b16 %v4356
    %v4365 = vpack.c.b16 %v4362, %v4361
    %v4366 = vpack.c.b16 %v4364, %v4363
    %vm4369 = vcmask 261120
    %v4371 = vsel %vm4369, %v4321, 0
    %v4374 = vsel %vm4369, %v4322, 0
    %v4377 = vsel %vm4369, %v4323, 0
    %v4380 = vsel %vm4369, %v4324, 0
    %v4383 = vsel %vm4369, %v4325, 0
    %v4386 = vsel %vm4369, %v4326, 0
    %v4389 = vsel %vm4369, %v4327, 0
    %v4392 = vsel %vm4369, %v4328, 0
    %v4395 = vsel %vm4369, %v4329, 0
    %v4398 = vsel %vm4369, %v4330, 0
    %v4401 = vsel %vm4369, %v4331, 0
    %v4404 = vsel %vm4369, %v4332, 0
    %v4407 = vsel %vm4369, %v4333, 0
    %v4410 = vsel %vm4369, %v4334, 0
    %v4413 = vsel %vm4369, %v4335, 0
    %v4416 = vsel %vm4369, %v4336, 0
    %v4419 = vsel %vm4369, %v4337, 0
    %v4422 = vsel %vm4369, %v4338, 0
    %v4425 = vsel %vm4369, %v4339, 0
    %v4428 = vsel %vm4369, %v4340, 0
    %v4431 = vsel %vm4369, %v4341, 0
    %v4434 = vsel %vm4369, %v4342, 0
    %v4437 = vsel %vm4369, %v4343, 0
    %v4440 = vsel %vm4369, %v4344, 0
    %v4443 = vsel %vm4369, %v4345, 0
    %v4446 = vsel %vm4369, %v4346, 0
    %v4449 = vsel %vm4369, %v4347, 0
    %v4452 = vsel %vm4369, %v4348, 0
    %v4455 = vsel %vm4369, %v4349, 0
    %v4458 = vsel %vm4369, %v4350, 0
    %v4461 = vsel %vm4369, %v4351, 0
    %v4464 = vsel %vm4369, %v4352, 0
    %4466 = vmatprep.subr.bf16.mxu0 0
    %4467 = vmatpush1.bf16.msra.mxu0 0
    %4468 = vmatprep.subr.bf16.mxu0 0
    %4469 = vmatpush1.bf16.msra.mxu0 0
    %4470 = vmatprep.subr.bf16.mxu0 0
    %4471 = vmatpush1.bf16.msra.mxu0 0
    %4472 = vmatprep.subr.bf16.mxu0 0
    %4473 = vmatpush1.bf16.msra.mxu0 0
    %4474 = vmatprep.subr.bf16.mxu0 0
    %4475 = vmatpush1.bf16.msra.mxu0 0
    %4476 = vmatprep.subr.bf16.mxu0 0
    %4477 = vmatpush1.bf16.msra.mxu0 0
    %4478 = vmatprep.subr.bf16.mxu0 0
    %4479 = vmatpush1.bf16.msra.mxu0 %v4366
    %4480 = vmatprep.subr.bf16.mxu0 0
    %4481 = vmatpush1.bf16.msra.mxu0 %v4365
    %4482 = vmatprep.subr.bf16.mxu0 0
    %4483 = vmatpush2.bf16.msra.mxu0 0
    %4484 = vmatprep.subr.bf16.mxu0 0
    %4485 = vmatpush2.bf16.msra.mxu0 0
    %4486 = vmatprep.subr.bf16.mxu0 0
    %4487 = vmatpush2.bf16.msra.mxu0 0
    %4488 = vmatprep.subr.bf16.mxu0 0
    %4489 = vmatpush2.bf16.msra.mxu0 0
    %4490 = vmatprep.subr.bf16.mxu0 0
    %4491 = vmatpush2.bf16.msra.mxu0 0
    %4492 = vmatprep.subr.bf16.mxu0 0
    %4493 = vmatpush2.bf16.msra.mxu0 0
    %4494 = vmatprep.subr.bf16.mxu0 0
    %4495 = vmatpush2.bf16.msra.mxu0 0
    %4496 = vmatprep.subr.bf16.mxu0 0
    %4497 = vmatpush2.bf16.msra.mxu0 0
    %4498 = vmatprep.mubr.bf16.mxu0 0
    %4499 = vmatmul.mubr.bf16.gmra.mxu0 %v4371
    %v4500 = vpop.f32.mrf.mxu0
    %v4501 = vadd.f32 0.0, %v4500
    %v4502 = vpop.f32.mrf.mxu0
    %v4503 = vpop.f32.mrf.mxu0
    %v4504 = vadd.f32 0.0, %v4503
    %v4505 = vpop.f32.mrf.mxu0
    %4506 = vmatprep.mubr.bf16.mxu0 0
    %4507 = vmatmul.mubr.bf16.gmra.mxu0 %v4374
    %v4508 = vpop.f32.mrf.mxu0
    %v4509 = vadd.f32 0.0, %v4508
    %v4510 = vpop.f32.mrf.mxu0
    %v4511 = vpop.f32.mrf.mxu0
    %v4512 = vadd.f32 0.0, %v4511
    %v4513 = vpop.f32.mrf.mxu0
    %4514 = vmatprep.mubr.bf16.mxu0 0
    %4515 = vmatmul.mubr.bf16.gmra.mxu0 %v4377
    %v4516 = vpop.f32.mrf.mxu0
    %v4517 = vadd.f32 0.0, %v4516
    %v4518 = vpop.f32.mrf.mxu0
    %v4519 = vpop.f32.mrf.mxu0
    %v4520 = vadd.f32 0.0, %v4519
    %v4521 = vpop.f32.mrf.mxu0
    %4522 = vmatprep.mubr.bf16.mxu0 0
    %4523 = vmatmul.mubr.bf16.gmra.mxu0 %v4380
    %v4524 = vpop.f32.mrf.mxu0
    %v4525 = vadd.f32 0.0, %v4524
    %v4526 = vpop.f32.mrf.mxu0
    %v4527 = vpop.f32.mrf.mxu0
    %v4528 = vadd.f32 0.0, %v4527
    %v4529 = vpop.f32.mrf.mxu0
    %4530 = vmatprep.mubr.bf16.mxu0 0
    %4531 = vmatmul.mubr.bf16.gmra.mxu0 %v4383
    %v4532 = vpop.f32.mrf.mxu0
    %v4533 = vadd.f32 0.0, %v4532
    %v4534 = vpop.f32.mrf.mxu0
    %v4535 = vpop.f32.mrf.mxu0
    %v4536 = vadd.f32 0.0, %v4535
    %v4537 = vpop.f32.mrf.mxu0
    %4538 = vmatprep.mubr.bf16.mxu0 0
    %4539 = vmatmul.mubr.bf16.gmra.mxu0 %v4386
    %v4540 = vpop.f32.mrf.mxu0
    %v4541 = vadd.f32 0.0, %v4540
    %v4542 = vpop.f32.mrf.mxu0
    %v4543 = vpop.f32.mrf.mxu0
    %v4544 = vadd.f32 0.0, %v4543
    %v4545 = vpop.f32.mrf.mxu0
    %4546 = vmatprep.mubr.bf16.mxu0 0
    %4547 = vmatmul.mubr.bf16.gmra.mxu0 %v4389
    %v4548 = vpop.f32.mrf.mxu0
    %v4549 = vadd.f32 0.0, %v4548
    %v4550 = vpop.f32.mrf.mxu0
    %v4551 = vpop.f32.mrf.mxu0
    %v4552 = vadd.f32 0.0, %v4551
    %v4553 = vpop.f32.mrf.mxu0
    %4554 = vmatprep.mubr.bf16.mxu0 0
    %4555 = vmatmul.mubr.bf16.gmra.mxu0 %v4392
    %v4556 = vpop.f32.mrf.mxu0
    %v4557 = vadd.f32 0.0, %v4556
    %v4558 = vpop.f32.mrf.mxu0
    %v4559 = vpop.f32.mrf.mxu0
    %v4560 = vadd.f32 0.0, %v4559
    %v4561 = vpop.f32.mrf.mxu0
    %4562 = vmatprep.mubr.bf16.mxu0 0
    %4563 = vmatmul.mubr.bf16.gmra.mxu0 %v4395
    %v4564 = vpop.f32.mrf.mxu0
    %v4565 = vadd.f32 0.0, %v4564
    %v4566 = vpop.f32.mrf.mxu0
    %v4567 = vpop.f32.mrf.mxu0
    %v4568 = vadd.f32 0.0, %v4567
    %v4569 = vpop.f32.mrf.mxu0
    %4570 = vmatprep.mubr.bf16.mxu0 0
    %4571 = vmatmul.mubr.bf16.gmra.mxu0 %v4398
    %v4572 = vpop.f32.mrf.mxu0
    %v4573 = vadd.f32 0.0, %v4572
    %v4574 = vpop.f32.mrf.mxu0
    %v4575 = vpop.f32.mrf.mxu0
    %v4576 = vadd.f32 0.0, %v4575
    %v4577 = vpop.f32.mrf.mxu0
    %4578 = vmatprep.mubr.bf16.mxu0 0
    %4579 = vmatmul.mubr.bf16.gmra.mxu0 %v4401
    %v4580 = vpop.f32.mrf.mxu0
    %v4581 = vadd.f32 0.0, %v4580
    %v4582 = vpop.f32.mrf.mxu0
    %v4583 = vpop.f32.mrf.mxu0
    %v4584 = vadd.f32 0.0, %v4583
    %v4585 = vpop.f32.mrf.mxu0
    %4586 = vmatprep.mubr.bf16.mxu0 0
    %4587 = vmatmul.mubr.bf16.gmra.mxu0 %v4404
    %v4588 = vpop.f32.mrf.mxu0
    %v4589 = vadd.f32 0.0, %v4588
    %v4590 = vpop.f32.mrf.mxu0
    %v4591 = vpop.f32.mrf.mxu0
    %v4592 = vadd.f32 0.0, %v4591
    %v4593 = vpop.f32.mrf.mxu0
    %4594 = vmatprep.mubr.bf16.mxu0 0
    %4595 = vmatmul.mubr.bf16.gmra.mxu0 %v4407
    %v4596 = vpop.f32.mrf.mxu0
    %v4597 = vadd.f32 0.0, %v4596
    %v4598 = vpop.f32.mrf.mxu0
    %v4599 = vpop.f32.mrf.mxu0
    %v4600 = vadd.f32 0.0, %v4599
    %v4601 = vpop.f32.mrf.mxu0
    %4602 = vmatprep.mubr.bf16.mxu0 0
    %4603 = vmatmul.mubr.bf16.gmra.mxu0 %v4410
    %v4604 = vpop.f32.mrf.mxu0
    %v4605 = vadd.f32 0.0, %v4604
    %v4606 = vpop.f32.mrf.mxu0
    %v4607 = vpop.f32.mrf.mxu0
    %v4608 = vadd.f32 0.0, %v4607
    %v4609 = vpop.f32.mrf.mxu0
    %4610 = vmatprep.mubr.bf16.mxu0 0
    %4611 = vmatmul.mubr.bf16.gmra.mxu0 %v4413
    %v4612 = vpop.f32.mrf.mxu0
    %v4613 = vadd.f32 0.0, %v4612
    %v4614 = vpop.f32.mrf.mxu0
    %v4615 = vpop.f32.mrf.mxu0
    %v4616 = vadd.f32 0.0, %v4615
    %v4617 = vpop.f32.mrf.mxu0
    %4618 = vmatprep.mubr.bf16.mxu0 0
    %4619 = vmatmul.mubr.bf16.gmra.mxu0 %v4416
    %v4620 = vpop.f32.mrf.mxu0
    %v4621 = vadd.f32 0.0, %v4620
    %v4622 = vpop.f32.mrf.mxu0
    %v4623 = vpop.f32.mrf.mxu0
    %v4624 = vadd.f32 0.0, %v4623
    %v4625 = vpop.f32.mrf.mxu0
    %4626 = vmatprep.mubr.bf16.mxu0 0
    %4627 = vmatmul.mubr.bf16.gmra.mxu0 %v4419
    %v4628 = vpop.f32.mrf.mxu0
    %v4629 = vadd.f32 0.0, %v4628
    %v4630 = vpop.f32.mrf.mxu0
    %v4631 = vpop.f32.mrf.mxu0
    %v4632 = vadd.f32 0.0, %v4631
    %v4633 = vpop.f32.mrf.mxu0
    %4634 = vmatprep.mubr.bf16.mxu0 0
    %4635 = vmatmul.mubr.bf16.gmra.mxu0 %v4422
    %v4636 = vpop.f32.mrf.mxu0
    %v4637 = vadd.f32 0.0, %v4636
    %v4638 = vpop.f32.mrf.mxu0
    %v4639 = vpop.f32.mrf.mxu0
    %v4640 = vadd.f32 0.0, %v4639
    %v4641 = vpop.f32.mrf.mxu0
    %4642 = vmatprep.mubr.bf16.mxu0 0
    %4643 = vmatmul.mubr.bf16.gmra.mxu0 %v4425
    %v4644 = vpop.f32.mrf.mxu0
    %v4645 = vadd.f32 0.0, %v4644
    %v4646 = vpop.f32.mrf.mxu0
    %v4647 = vpop.f32.mrf.mxu0
    %v4648 = vadd.f32 0.0, %v4647
    %v4649 = vpop.f32.mrf.mxu0
    %4650 = vmatprep.mubr.bf16.mxu0 0
    %4651 = vmatmul.mubr.bf16.gmra.mxu0 %v4428
    %v4652 = vpop.f32.mrf.mxu0
    %v4653 = vadd.f32 0.0, %v4652
    %v4654 = vpop.f32.mrf.mxu0
    %v4655 = vpop.f32.mrf.mxu0
    %v4656 = vadd.f32 0.0, %v4655
    %v4657 = vpop.f32.mrf.mxu0
    %4658 = vmatprep.mubr.bf16.mxu0 0
    %4659 = vmatmul.mubr.bf16.gmra.mxu0 %v4431
    %v4660 = vpop.f32.mrf.mxu0
    %v4661 = vadd.f32 0.0, %v4660
    %v4662 = vpop.f32.mrf.mxu0
    %v4663 = vpop.f32.mrf.mxu0
    %v4664 = vadd.f32 0.0, %v4663
    %v4665 = vpop.f32.mrf.mxu0
    %4666 = vmatprep.mubr.bf16.mxu0 0
    %4667 = vmatmul.mubr.bf16.gmra.mxu0 %v4434
    %v4668 = vpop.f32.mrf.mxu0
    %v4669 = vadd.f32 0.0, %v4668
    %v4670 = vpop.f32.mrf.mxu0
    %v4671 = vpop.f32.mrf.mxu0
    %v4672 = vadd.f32 0.0, %v4671
    %v4673 = vpop.f32.mrf.mxu0
    %4674 = vmatprep.mubr.bf16.mxu0 0
    %4675 = vmatmul.mubr.bf16.gmra.mxu0 %v4437
    %v4676 = vpop.f32.mrf.mxu0
    %v4677 = vadd.f32 0.0, %v4676
    %v4678 = vpop.f32.mrf.mxu0
    %v4679 = vpop.f32.mrf.mxu0
    %v4680 = vadd.f32 0.0, %v4679
    %v4681 = vpop.f32.mrf.mxu0
    %4682 = vmatprep.mubr.bf16.mxu0 0
    %4683 = vmatmul.mubr.bf16.gmra.mxu0 %v4440
    %v4684 = vpop.f32.mrf.mxu0
    %v4685 = vadd.f32 0.0, %v4684
    %v4686 = vpop.f32.mrf.mxu0
    %v4687 = vpop.f32.mrf.mxu0
    %v4688 = vadd.f32 0.0, %v4687
    %v4689 = vpop.f32.mrf.mxu0
    %4690 = vmatprep.mubr.bf16.mxu0 0
    %4691 = vmatmul.mubr.bf16.gmra.mxu0 %v4443
    %v4692 = vpop.f32.mrf.mxu0
    %v4693 = vadd.f32 0.0, %v4692
    %v4694 = vpop.f32.mrf.mxu0
    %v4695 = vpop.f32.mrf.mxu0
    %v4696 = vadd.f32 0.0, %v4695
    %v4697 = vpop.f32.mrf.mxu0
    %4698 = vmatprep.mubr.bf16.mxu0 0
    %4699 = vmatmul.mubr.bf16.gmra.mxu0 %v4446
    %v4700 = vpop.f32.mrf.mxu0
    %v4701 = vadd.f32 0.0, %v4700
    %v4702 = vpop.f32.mrf.mxu0
    %v4703 = vpop.f32.mrf.mxu0
    %v4704 = vadd.f32 0.0, %v4703
    %v4705 = vpop.f32.mrf.mxu0
    %4706 = vmatprep.mubr.bf16.mxu0 0
    %4707 = vmatmul.mubr.bf16.gmra.mxu0 %v4449
    %v4708 = vpop.f32.mrf.mxu0
    %v4709 = vadd.f32 0.0, %v4708
    %v4710 = vpop.f32.mrf.mxu0
    %v4711 = vpop.f32.mrf.mxu0
    %v4712 = vadd.f32 0.0, %v4711
    %v4713 = vpop.f32.mrf.mxu0
    %4714 = vmatprep.mubr.bf16.mxu0 0
    %4715 = vmatmul.mubr.bf16.gmra.mxu0 %v4452
    %v4716 = vpop.f32.mrf.mxu0
    %v4717 = vadd.f32 0.0, %v4716
    %v4718 = vpop.f32.mrf.mxu0
    %v4719 = vpop.f32.mrf.mxu0
    %v4720 = vadd.f32 0.0, %v4719
    %v4721 = vpop.f32.mrf.mxu0
    %4722 = vmatprep.mubr.bf16.mxu0 0
    %4723 = vmatmul.mubr.bf16.gmra.mxu0 %v4455
    %v4724 = vpop.f32.mrf.mxu0
    %v4725 = vadd.f32 0.0, %v4724
    %v4726 = vpop.f32.mrf.mxu0
    %v4727 = vpop.f32.mrf.mxu0
    %v4728 = vadd.f32 0.0, %v4727
    %v4729 = vpop.f32.mrf.mxu0
    %4730 = vmatprep.mubr.bf16.mxu0 0
    %4731 = vmatmul.mubr.bf16.gmra.mxu0 %v4458
    %v4732 = vpop.f32.mrf.mxu0
    %v4733 = vadd.f32 0.0, %v4732
    %v4734 = vpop.f32.mrf.mxu0
    %v4735 = vpop.f32.mrf.mxu0
    %v4736 = vadd.f32 0.0, %v4735
    %v4737 = vpop.f32.mrf.mxu0
    %4738 = vmatprep.mubr.bf16.mxu0 0
    %4739 = vmatmul.mubr.bf16.gmra.mxu0 %v4461
    %v4740 = vpop.f32.mrf.mxu0
    %v4741 = vadd.f32 0.0, %v4740
    %v4742 = vpop.f32.mrf.mxu0
    %v4743 = vpop.f32.mrf.mxu0
    %v4744 = vadd.f32 0.0, %v4743
    %v4745 = vpop.f32.mrf.mxu0
    %4746 = vmatprep.mubr.bf16.mxu0 0
    %4747 = vmatmul.mubr.bf16.gmra.mxu0 %v4464
    %v4748 = vpop.f32.mrf.mxu0
    %v4749 = vadd.f32 0.0, %v4748
    %v4750 = vpop.f32.mrf.mxu0
    %v4751 = vpop.f32.mrf.mxu0
    %v4752 = vadd.f32 0.0, %v4751
    %v4753 = vpop.f32.mrf.mxu0
    %4754 = vdwg.mxu0
    %4755 = vxpose.xlu0.b32.start [1/16] %v4501, 128
    %4756 = vxpose.xlu0.b32.cont [2/16] %v4504, 128
    %4757 = vxpose.xlu0.b32.cont [3/16] %v4509, 128
    %4758 = vxpose.xlu0.b32.cont [4/16] %v4512, 128
    %4759 = vxpose.xlu0.b32.cont [5/16] %v4517, 128
    %4760 = vxpose.xlu0.b32.cont [6/16] %v4520, 128
    %4761 = vxpose.xlu0.b32.cont [7/16] %v4525, 128
    %4762 = vxpose.xlu0.b32.cont [8/16] %v4528, 128
    %4763 = vxpose.xlu0.b32.cont [9/16] %v4533, 128
    %4764 = vxpose.xlu0.b32.cont [10/16] %v4536, 128
    %4765 = vxpose.xlu0.b32.cont [11/16] %v4541, 128
    %4766 = vxpose.xlu0.b32.cont [12/16] %v4544, 128
    %4767 = vxpose.xlu0.b32.cont [13/16] %v4549, 128
    %4768 = vxpose.xlu0.b32.cont [14/16] %v4552, 128
    %4769 = vxpose.xlu0.b32.cont [15/16] %v4557, 128
    %4770 = vxpose.xlu0.b32.end [16/16] %v4560, 128
    %v4771 = vpop.trf.xlu0
    %v4772 = vpop.trf.xlu0
    %v4773 = vpop.trf.xlu0
    %v4774 = vpop.trf.xlu0
    %v4775 = vpop.trf.xlu0
    %v4776 = vpop.trf.xlu0
    %v4777 = vpop.trf.xlu0
    %v4778 = vpop.trf.xlu0
    %v4779 = vpop.trf.xlu0
    %v4780 = vpop.trf.xlu0
    %v4781 = vpop.trf.xlu0
    %v4782 = vpop.trf.xlu0
    %v4783 = vpop.trf.xlu0
    %v4784 = vpop.trf.xlu0
    %v4785 = vpop.trf.xlu0
    %v4786 = vpop.trf.xlu0
    %4787 = vxpose.xlu0.b32.start [1/16] %v4565, 128
    %4788 = vxpose.xlu0.b32.cont [2/16] %v4568, 128
    %4789 = vxpose.xlu0.b32.cont [3/16] %v4573, 128
    %4790 = vxpose.xlu0.b32.cont [4/16] %v4576, 128
    %4791 = vxpose.xlu0.b32.cont [5/16] %v4581, 128
    %4792 = vxpose.xlu0.b32.cont [6/16] %v4584, 128
    %4793 = vxpose.xlu0.b32.cont [7/16] %v4589, 128
    %4794 = vxpose.xlu0.b32.cont [8/16] %v4592, 128
    %4795 = vxpose.xlu0.b32.cont [9/16] %v4597, 128
    %4796 = vxpose.xlu0.b32.cont [10/16] %v4600, 128
    %4797 = vxpose.xlu0.b32.cont [11/16] %v4605, 128
    %4798 = vxpose.xlu0.b32.cont [12/16] %v4608, 128
    %4799 = vxpose.xlu0.b32.cont [13/16] %v4613, 128
    %4800 = vxpose.xlu0.b32.cont [14/16] %v4616, 128
    %4801 = vxpose.xlu0.b32.cont [15/16] %v4621, 128
    %4802 = vxpose.xlu0.b32.end [16/16] %v4624, 128
    %v4803 = vpop.trf.xlu0
    %v4804 = vpop.trf.xlu0
    %v4805 = vpop.trf.xlu0
    %v4806 = vpop.trf.xlu0
    %v4807 = vpop.trf.xlu0
    %v4808 = vpop.trf.xlu0
    %v4809 = vpop.trf.xlu0
    %v4810 = vpop.trf.xlu0
    %v4811 = vpop.trf.xlu0
    %v4812 = vpop.trf.xlu0
    %v4813 = vpop.trf.xlu0
    %v4814 = vpop.trf.xlu0
    %v4815 = vpop.trf.xlu0
    %v4816 = vpop.trf.xlu0
    %v4817 = vpop.trf.xlu0
    %v4818 = vpop.trf.xlu0
    %4819 = vxpose.xlu0.b32.start [1/16] %v4629, 128
    %4820 = vxpose.xlu0.b32.cont [2/16] %v4632, 128
    %4821 = vxpose.xlu0.b32.cont [3/16] %v4637, 128
    %4822 = vxpose.xlu0.b32.cont [4/16] %v4640, 128
    %4823 = vxpose.xlu0.b32.cont [5/16] %v4645, 128
    %4824 = vxpose.xlu0.b32.cont [6/16] %v4648, 128
    %4825 = vxpose.xlu0.b32.cont [7/16] %v4653, 128
    %4826 = vxpose.xlu0.b32.cont [8/16] %v4656, 128
    %4827 = vxpose.xlu0.b32.cont [9/16] %v4661, 128
    %4828 = vxpose.xlu0.b32.cont [10/16] %v4664, 128
    %4829 = vxpose.xlu0.b32.cont [11/16] %v4669, 128
    %4830 = vxpose.xlu0.b32.cont [12/16] %v4672, 128
    %4831 = vxpose.xlu0.b32.cont [13/16] %v4677, 128
    %4832 = vxpose.xlu0.b32.cont [14/16] %v4680, 128
    %4833 = vxpose.xlu0.b32.cont [15/16] %v4685, 128
    %4834 = vxpose.xlu0.b32.end [16/16] %v4688, 128
    %v4835 = vpop.trf.xlu0
    %v4836 = vpop.trf.xlu0
    %v4837 = vpop.trf.xlu0
    %v4838 = vpop.trf.xlu0
    %v4839 = vpop.trf.xlu0
    %v4840 = vpop.trf.xlu0
    %v4841 = vpop.trf.xlu0
    %v4842 = vpop.trf.xlu0
    %v4843 = vpop.trf.xlu0
    %v4844 = vpop.trf.xlu0
    %v4845 = vpop.trf.xlu0
    %v4846 = vpop.trf.xlu0
    %v4847 = vpop.trf.xlu0
    %v4848 = vpop.trf.xlu0
    %v4849 = vpop.trf.xlu0
    %v4850 = vpop.trf.xlu0
    %4851 = vxpose.xlu0.b32.start [1/16] %v4693, 128
    %4852 = vxpose.xlu0.b32.cont [2/16] %v4696, 128
    %4853 = vxpose.xlu0.b32.cont [3/16] %v4701, 128
    %4854 = vxpose.xlu0.b32.cont [4/16] %v4704, 128
    %4855 = vxpose.xlu0.b32.cont [5/16] %v4709, 128
    %4856 = vxpose.xlu0.b32.cont [6/16] %v4712, 128
    %4857 = vxpose.xlu0.b32.cont [7/16] %v4717, 128
    %4858 = vxpose.xlu0.b32.cont [8/16] %v4720, 128
    %4859 = vxpose.xlu0.b32.cont [9/16] %v4725, 128
    %4860 = vxpose.xlu0.b32.cont [10/16] %v4728, 128
    %4861 = vxpose.xlu0.b32.cont [11/16] %v4733, 128
    %4862 = vxpose.xlu0.b32.cont [12/16] %v4736, 128
    %4863 = vxpose.xlu0.b32.cont [13/16] %v4741, 128
    %4864 = vxpose.xlu0.b32.cont [14/16] %v4744, 128
    %4865 = vxpose.xlu0.b32.cont [15/16] %v4749, 128
    %4866 = vxpose.xlu0.b32.end [16/16] %v4752, 128
    %v4867 = vpop.trf.xlu0
    %v4868 = vpop.trf.xlu0
    %v4869 = vpop.trf.xlu0
    %v4870 = vpop.trf.xlu0
    %v4871 = vpop.trf.xlu0
    %v4872 = vpop.trf.xlu0
    %v4873 = vpop.trf.xlu0
    %v4874 = vpop.trf.xlu0
    %v4875 = vpop.trf.xlu0
    %v4876 = vpop.trf.xlu0
    %v4877 = vpop.trf.xlu0
    %v4878 = vpop.trf.xlu0
    %v4879 = vpop.trf.xlu0
    %v4880 = vpop.trf.xlu0
    %v4881 = vpop.trf.xlu0
    %v4882 = vpop.trf.xlu0
    %4883 = vst [vmem:[#allocation3] sm:$0xff] %v4771
    %4884 = vst [vmem:[#allocation3 + $0x8] sm:$0xff] %v4803
    %4885 = vst [vmem:[#allocation3 + $0x10] sm:$0xff] %v4835
    %4886 = vst [vmem:[#allocation3 + $0x18] sm:$0xff] %v4867
    // Predicated region
    $region22: #{tpu_custom_call.1} parent=1 // pred_check
      _
    $region23: #{tpu_custom_call.1} parent=1 // pred_check_branch
      %4888 = sbr.rel (0) target = $region25
    $region24: #{tpu_custom_call.1} parent=1 // pred_region
      %s4890 = ssub.s32 512, 512
      %4891 = vsyncadd [#allocation4], %s4890
      %s4892 = sshll.u32 [#allocation3], 4
      %s4893 = int_to_ptr.vmem [resolvable:$true] %s4892
      %4898 = dma.vmem_to_hbm [thread:$0]  %s4893, 512, %s5, [#allocation4], 256, 256, 16
    $region25: #{tpu_custom_call.1} parent=1 // pred_fallthru
      _
    // Predicated region
    $region26: #{tpu_custom_call.1} parent=1 // pred_check
      _
    $region27: #{tpu_custom_call.1} parent=1 // pred_check_branch
      %4900 = sbr.rel (0) target = $region29
    $region28: #{tpu_custom_call.1} parent=1 // pred_region
      %4901 = dma.done [#allocation4], 512
    $region29: #{tpu_custom_call.1} parent=1 // pred_fallthru
      _
    %4902 = vsyncpa [#allocation4], 1

</llo_original>
